<compile_context>
chip_gen: v6e
topology: v6e:2x2x1
jax: 0.10.0
libtpu: 0.0.40
codegen_flags: <defaults>
</compile_context>

<pallas_src>
import functools

import jax
import jax.numpy as jnp
from jax.experimental import pallas as pl
from jax.experimental.pallas import tpu as pltpu


# ----------------------------------------------------------------------------
# Fused kernel: all layers + linear + softmax, single invocation.
# ----------------------------------------------------------------------------
def _fused_lstm_kernel(*refs, seq_len, batch, hp, num_layers):
    # refs = [x, (w_ih, w_hh, bias) * L, lin_w, lin_b, out, gx_scratch, seq_scratch]
    x_ref = refs[0]
    layer_refs = [(refs[1 + 3 * l], refs[2 + 3 * l], refs[3 + 3 * l])
                  for l in range(num_layers)]
    lin_w_ref = refs[1 + 3 * num_layers]
    lin_b_ref = refs[2 + 3 * num_layers]
    out_ref = refs[3 + 3 * num_layers]
    gx_sc = refs[4 + 3 * num_layers]      # (T*B, 4*HP) hoisted input-gate workspace
    seq_sc = refs[5 + 3 * num_layers]     # (T*B, HP)   current layer's output sequence

    HP = hp
    for l, (w_ih_ref, w_hh_ref, b_ref) in enumerate(layer_refs):
        layer_in = x_ref[...] if l == 0 else seq_sc[...]
        # Hoisted input projection: one MXU matmul over the whole sequence,
        # bias broadcast hoisted out of the time loop.
        gx_sc[...] = (jnp.dot(layer_in, w_ih_ref[...],
                              preferred_element_type=jnp.float32)
                      + b_ref[...])

        h = None
        c = None
        for t in range(seq_len):                  # static unroll (T small, fixed)
            gates = gx_sc[pl.ds(t * batch, batch), :]
            if t > 0:
                # Recurrent matmul; operands streamed from VMEM (no huge live values).
                gates = gates + jnp.dot(h, w_hh_ref[...],
                                        preferred_element_type=jnp.float32)
            # Gate slices are 128-lane-aligned (HP = 128): pure VPU/EUP work.
            i_g = jax.nn.sigmoid(gates[:, 0 * HP:1 * HP])
            g_g = jnp.tanh(gates[:, 2 * HP:3 * HP])
            o_g = jax.nn.sigmoid(gates[:, 3 * HP:4 * HP])
            if t > 0:
                f_g = jax.nn.sigmoid(gates[:, 1 * HP:2 * HP])
                c = f_g * c + i_g * g_g
            else:
                # h = c = 0 at t == 0: skip recurrent matmul and f*c term.
                c = i_g * g_g
            h = o_g * jnp.tanh(c)
            seq_sc[pl.ds(t * batch, batch), :] = h   # sublane-aligned band store

    # Final Linear + softmax on the full sequence (one MXU matmul).
    # Padded output columns carry a -1e30 bias, so exp underflows to exactly 0
    # and they do not contribute to the softmax denominator.
    logits = jnp.dot(seq_sc[...], lin_w_ref[...],
                     preferred_element_type=jnp.float32) + lin_b_ref[...]
    m = jnp.max(logits, axis=-1, keepdims=True)
    e = jnp.exp(logits - m)
    out_ref[...] = (e / jnp.sum(e, axis=-1, keepdims=True)).astype(out_ref.dtype)


# ----------------------------------------------------------------------------
# Wrapper.
# ----------------------------------------------------------------------------
def lstm_model_forward(x, kparams):
    """x: (T, B, input_dim) float32 -> (T, B, output_dim) softmax probabilities."""
    T, B, D_in = x.shape
    HP = kparams["hp"]
    OP = kparams["o_pad"]
    H = kparams["hidden_dim"]
    O = kparams["output_dim"]
    L = len(kparams["layers"])

    x_flat = x.reshape(T * B, D_in).astype(jnp.float32)

    inputs = [x_flat]
    in_specs = [pl.BlockSpec((T * B, D_in), lambda i: (0, 0))]
    for lp in kparams["layers"]:
        for name in ("w_ih", "w_hh", "bias"):
            arr = lp[name]
            inputs.append(arr)
            in_specs.append(pl.BlockSpec(arr.shape, lambda i: (0, 0)))
    for name in ("lin_w", "lin_b"):
        arr = kparams[name]
        inputs.append(arr)
        in_specs.append(pl.BlockSpec(arr.shape, lambda i: (0, 0)))

    kernel = functools.partial(_fused_lstm_kernel, seq_len=T, batch=B,
                               hp=HP, num_layers=L)

    # Advisory cost estimate (real, unpadded dims).
    flops = 2 * T * B * D_in * 4 * H            # layer-0 input projection
    flops += 2 * T * B * H * 4 * H * (L - 1)    # deeper-layer input projections
    flops += 2 * (T - 1) * B * H * 4 * H * L    # recurrent matmuls (t=0 skipped)
    flops += 2 * T * B * H * O                  # final linear
    transcendentals = L * T * B * 5 * H + T * B * O
    bytes_accessed = (sum(int(a.size) * a.dtype.itemsize for a in inputs)
                      + T * B * OP * 4)

    out = pl.pallas_call(
        kernel,
        out_shape=jax.ShapeDtypeStruct((T * B, OP), jnp.float32),
        grid_spec=pltpu.PrefetchScalarGridSpec(
            num_scalar_prefetch=0,
            grid=(1,),
            in_specs=in_specs,
            out_specs=pl.BlockSpec((T * B, OP), lambda i: (0, 0)),
            scratch_shapes=[
                pltpu.VMEM((T * B, 4 * HP), jnp.float32),  # hoisted gates-x
                pltpu.VMEM((T * B, HP), jnp.float32),      # layer output sequence
            ],
        ),
        compiler_params=pltpu.CompilerParams(
            dimension_semantics=("arbitrary",)),
        cost_estimate=pl.CostEstimate(flops=int(flops),
                                      transcendentals=int(transcendentals),
                                      bytes_accessed=int(bytes_accessed)),
    )(*inputs)
    return out[:, :O].reshape(T, B, O)


# ----------------------------------------------------------------------------
# Parameter construction (PyTorch-layout raw params -> padded kernel params).
# ----------------------------------------------------------------------------
def init_raw_params(key, input_dim, output_dim, hidden_dim, num_layers,
                    dtype=jnp.float32):
    raw = {"layers": []}
    bound = 1.0 / float(hidden_dim) ** 0.5
    for layer in range(num_layers):
        d_in = input_dim if layer == 0 else hidden_dim
        key, k1, k2, k3, k4 = jax.random.split(key, 5)
        raw["layers"].append({
            "w_ih": jax.random.uniform(k1, (4 * hidden_dim, d_in), dtype,
                                       -bound, bound),
            "w_hh": jax.random.uniform(k2, (4 * hidden_dim, hidden_dim), dtype,
                                       -bound, bound),
            "b_ih": jax.random.uniform(k3, (4 * hidden_dim,), dtype,
                                       -bound, bound),
            "b_hh": jax.random.uniform(k4, (4 * hidden_dim,), dtype,
                                       -bound, bound),
        })
    key, k5, k6 = jax.random.split(key, 3)
    raw["lin_w"] = jax.random.uniform(k5, (output_dim, hidden_dim), dtype,
                                      -bound, bound)
    raw["lin_b"] = jax.random.uniform(k6, (output_dim,), dtype, -bound, bound)
    return raw


def build_kernel_params(raw, input_dim, hidden_dim, output_dim):
    """Transpose + pad weights so gates/output are 128-lane aligned."""
    H = hidden_dim
    HP = ((H + 127) // 128) * 128
    OP = ((output_dim + 127) // 128) * 128
    layers = []
    for l, lp in enumerate(raw["layers"]):
        d_in = lp["w_ih"].shape[1]
        w_ih_t = lp["w_ih"].T.astype(jnp.float32)        # (d_in, 4H)
        w_hh_t = lp["w_hh"].T.astype(jnp.float32)        # (H, 4H)
        bias = (lp["b_ih"] + lp["b_hh"]).astype(jnp.float32)  # (4H,)
        in_pad = d_in if l == 0 else HP                  # deeper layers see HP-wide h
        w_ih_p = jnp.zeros((in_pad, 4 * HP), jnp.float32)
        w_hh_p = jnp.zeros((HP, 4 * HP), jnp.float32)
        b_p = jnp.zeros((1, 4 * HP), jnp.float32)
        for g in range(4):                               # gate order (i, f, g, o)
            w_ih_p = w_ih_p.at[:d_in, g * HP:g * HP + H].set(
                w_ih_t[:, g * H:(g + 1) * H])
            w_hh_p = w_hh_p.at[:H, g * HP:g * HP + H].set(
                w_hh_t[:, g * H:(g + 1) * H])
            b_p = b_p.at[0, g * HP:g * HP + H].set(bias[g * H:(g + 1) * H])
        layers.append({"w_ih": w_ih_p, "w_hh": w_hh_p, "bias": b_p})

    lin_w_p = jnp.zeros((HP, OP), jnp.float32).at[:H, :output_dim].set(
        raw["lin_w"].T.astype(jnp.float32))
    lin_b_p = jnp.full((1, OP), -1e30, jnp.float32).at[0, :output_dim].set(
        raw["lin_b"].astype(jnp.float32))
    return {"layers": layers, "lin_w": lin_w_p, "lin_b": lin_b_p,
            "hp": HP, "o_pad": OP,
            "input_dim": input_dim, "hidden_dim": hidden_dim,
            "output_dim": output_dim}


# ----------------------------------------------------------------------------
# Pure-JAX reference (torch.nn.LSTM + Linear + softmax semantics, unpadded).
# ----------------------------------------------------------------------------
def reference_forward(x, raw):
    hi = jax.lax.Precision.HIGHEST
    h_seq = x.astype(jnp.float32)
    for lp in raw["layers"]:
        T, B, _ = h_seq.shape
        H = lp["w_hh"].shape[1]
        w_ih_t = lp["w_ih"].T
        w_hh_t = lp["w_hh"].T
        bias = lp["b_ih"] + lp["b_hh"]
        h_t = jnp.zeros((B, H), jnp.float32)
        c_t = jnp.zeros((B, H), jnp.float32)
        outs = []
        for t in range(T):
            gates = (jnp.dot(h_seq[t], w_ih_t, precision=hi)
                     + jnp.dot(h_t, w_hh_t, precision=hi) + bias)
            i_g = jax.nn.sigmoid(gates[:, 0 * H:1 * H])
            f_g = jax.nn.sigmoid(gates[:, 1 * H:2 * H])
            g_g = jnp.tanh(gates[:, 2 * H:3 * H])
            o_g = jax.nn.sigmoid(gates[:, 3 * H:4 * H])
            c_t = f_g * c_t + i_g * g_g
            h_t = o_g * jnp.tanh(c_t)
            outs.append(h_t)
        h_seq = jnp.stack(outs, axis=0)
    logits = jnp.dot(h_seq, raw["lin_w"].T, precision=hi) + raw["lin_b"]
    return jax.nn.softmax(logits, axis=-1)


if __name__ == "__main__":
    # Small shapes consistent with the module: seq=8, batch=8, input=16,
    # hidden=32, output=8, num_layers=2.
    T, B, INPUT_DIM, HIDDEN_DIM, OUTPUT_DIM, NUM_LAYERS = 8, 8, 16, 32, 8, 2

    key = jax.random.PRNGKey(0)
    key, xkey = jax.random.split(key)
    x = jax.random.normal(xkey, (T, B, INPUT_DIM), jnp.float32)

    raw = init_raw_params(key, INPUT_DIM, OUTPUT_DIM, HIDDEN_DIM, NUM_LAYERS)
    kparams = build_kernel_params(raw, INPUT_DIM, HIDDEN_DIM, OUTPUT_DIM)

    out = lstm_model_forward(x, kparams)
    out = jax.block_until_ready(out)

    assert out.shape == (T, B, OUTPUT_DIM)
    row_sums = jnp.sum(out, axis=-1)
    assert jnp.allclose(row_sums, 1.0, atol=1e-4), "softmax rows don't sum to 1"
    ref = reference_forward(x, raw)
    assert jnp.allclose(out, ref, atol=1e-4, rtol=1e-3), "mismatch vs reference"

    print("KERNEL_OK")
</pallas_src>

<mosaic_0001>
module attributes {stable_mosaic.version = 11 : i64} {
  func.func @_fused_lstm_kernel(%arg0: i32, %arg1: memref<64x16xf32, #tpu.memory_space<vmem>>, %arg2: memref<16x512xf32, #tpu.memory_space<vmem>>, %arg3: memref<128x512xf32, #tpu.memory_space<vmem>>, %arg4: memref<1x512xf32, #tpu.memory_space<vmem>>, %arg5: memref<128x512xf32, #tpu.memory_space<vmem>>, %arg6: memref<128x512xf32, #tpu.memory_space<vmem>>, %arg7: memref<1x512xf32, #tpu.memory_space<vmem>>, %arg8: memref<128x128xf32, #tpu.memory_space<vmem>>, %arg9: memref<1x128xf32, #tpu.memory_space<vmem>>, %arg10: memref<64x128xf32, #tpu.memory_space<vmem>>, %arg11: memref<64x512xf32, #tpu.memory_space<vmem>>, %arg12: memref<64x128xf32, #tpu.memory_space<vmem>>) attributes {dimension_semantics = [#tpu.dimension_semantics<arbitrary>], iteration_bounds = array<i64: 1>, scalar_prefetch = 0 : i64, scratch_operands = 2 : i64, tpu.core_type = #tpu.core_type<tc>, window_params = [{pipeline_mode = #tpu.pipeline_mode<synchronous>, transform_indices = @transform_0, window_bounds = array<i64: 64, 16>}, {pipeline_mode = #tpu.pipeline_mode<synchronous>, transform_indices = @transform_1, window_bounds = array<i64: 16, 512>}, {pipeline_mode = #tpu.pipeline_mode<synchronous>, transform_indices = @transform_2, window_bounds = array<i64: 128, 512>}, {pipeline_mode = #tpu.pipeline_mode<synchronous>, transform_indices = @transform_3, window_bounds = array<i64: 1, 512>}, {pipeline_mode = #tpu.pipeline_mode<synchronous>, transform_indices = @transform_4, window_bounds = array<i64: 128, 512>}, {pipeline_mode = #tpu.pipeline_mode<synchronous>, transform_indices = @transform_5, window_bounds = array<i64: 128, 512>}, {pipeline_mode = #tpu.pipeline_mode<synchronous>, transform_indices = @transform_6, window_bounds = array<i64: 1, 512>}, {pipeline_mode = #tpu.pipeline_mode<synchronous>, transform_indices = @transform_7, window_bounds = array<i64: 128, 128>}, {pipeline_mode = #tpu.pipeline_mode<synchronous>, transform_indices = @transform_8, window_bounds = array<i64: 1, 128>}, {pipeline_mode = #tpu.pipeline_mode<synchronous>, transform_indices = @transform_9, window_bounds = array<i64: 64, 128>}]} {
    %c0 = arith.constant 0 : index
    %c0_0 = arith.constant 0 : index
    %0 = vector.load %arg1[%c0, %c0_0] : memref<64x16xf32, #tpu.memory_space<vmem>>, vector<64x16xf32>
    %c0_1 = arith.constant 0 : index
    %c0_2 = arith.constant 0 : index
    %1 = vector.load %arg2[%c0_1, %c0_2] : memref<16x512xf32, #tpu.memory_space<vmem>>, vector<16x512xf32>
    %cst = arith.constant dense<0.000000e+00> : vector<64x512xf32>
    %2 = tpu.matmul %0, %1, %cst {dimension_numbers = #tpu.dot_dimension_numbers<[1], [0], [0], [1], [0, 0, 1, 1], [], []>} : vector<64x16xf32>, vector<16x512xf32>, vector<64x512xf32> -> vector<64x512xf32>
    %c0_3 = arith.constant 0 : index
    %c0_4 = arith.constant 0 : index
    %3 = vector.load %arg4[%c0_3, %c0_4] : memref<1x512xf32, #tpu.memory_space<vmem>>, vector<1x512xf32>
    %4 = vector.broadcast %3 : vector<1x512xf32> to vector<64x512xf32>
    %5 = arith.addf %2, %4 : vector<64x512xf32>
    %c0_5 = arith.constant 0 : index
    %c0_6 = arith.constant 0 : index
    %6 = vector.load %arg11[%c0_5, %c0_6] : memref<64x512xf32, #tpu.memory_space<vmem>>, vector<64x512xf32>
    tpu.vector_store %arg11[%c0_5, %c0_6], %5 {strides = array<i32>} : memref<64x512xf32, #tpu.memory_space<vmem>>, vector<64x512xf32>,
    %c0_7 = arith.constant 0 : index
    %c0_8 = arith.constant 0 : index
    %7 = vector.load %arg11[%c0_7, %c0_8] : memref<64x512xf32, #tpu.memory_space<vmem>>, vector<8x512xf32>
    %8 = vector.extract_strided_slice %7 {offsets = [0, 0], sizes = [8, 128], strides = [1, 1]} : vector<8x512xf32> to vector<8x128xf32>
    %9 = arith.negf %8 : vector<8x128xf32>
    %10 = math.exp %9 : vector<8x128xf32>
    %cst_9 = arith.constant 1.000000e+00 : f32
    %11 = vector.broadcast %cst_9 : f32 to vector<8x128xf32>
    %12 = arith.addf %11, %10 : vector<8x128xf32>
    %13 = arith.divf %11, %12 : vector<8x128xf32>
    %14 = vector.extract_strided_slice %7 {offsets = [0, 256], sizes = [8, 128], strides = [1, 1]} : vector<8x512xf32> to vector<8x128xf32>
    %15 = math.tanh %14 : vector<8x128xf32>
    %16 = vector.extract_strided_slice %7 {offsets = [0, 384], sizes = [8, 128], strides = [1, 1]} : vector<8x512xf32> to vector<8x128xf32>
    %17 = arith.negf %16 : vector<8x128xf32>
    %18 = math.exp %17 : vector<8x128xf32>
    %cst_10 = arith.constant 1.000000e+00 : f32
    %19 = vector.broadcast %cst_10 : f32 to vector<8x128xf32>
    %20 = arith.addf %19, %18 : vector<8x128xf32>
    %21 = arith.divf %19, %20 : vector<8x128xf32>
    %22 = arith.mulf %13, %15 : vector<8x128xf32>
    %23 = math.tanh %22 : vector<8x128xf32>
    %24 = arith.mulf %21, %23 : vector<8x128xf32>
    %c0_11 = arith.constant 0 : index
    %c0_12 = arith.constant 0 : index
    %25 = vector.load %arg12[%c0_11, %c0_12] : memref<64x128xf32, #tpu.memory_space<vmem>>, vector<8x128xf32>
    tpu.vector_store %arg12[%c0_11, %c0_12], %24 {strides = array<i32>} : memref<64x128xf32, #tpu.memory_space<vmem>>, vector<8x128xf32>,
    %c8 = arith.constant 8 : index
    %c0_13 = arith.constant 0 : index
    %26 = vector.load %arg11[%c8, %c0_13] : memref<64x512xf32, #tpu.memory_space<vmem>>, vector<8x512xf32>
    %c0_14 = arith.constant 0 : index
    %c0_15 = arith.constant 0 : index
    %27 = vector.load %arg3[%c0_14, %c0_15] : memref<128x512xf32, #tpu.memory_space<vmem>>, vector<128x512xf32>
    %cst_16 = arith.constant dense<0.000000e+00> : vector<8x512xf32>
    %28 = tpu.matmul %24, %27, %cst_16 {dimension_numbers = #tpu.dot_dimension_numbers<[1], [0], [0], [1], [0, 0, 1, 1], [], []>} : vector<8x128xf32>, vector<128x512xf32>, vector<8x512xf32> -> vector<8x512xf32>
    %29 = arith.addf %26, %28 : vector<8x512xf32>
    %30 = vector.extract_strided_slice %29 {offsets = [0, 0], sizes = [8, 128], strides = [1, 1]} : vector<8x512xf32> to vector<8x128xf32>
    %31 = arith.negf %30 : vector<8x128xf32>
    %32 = math.exp %31 : vector<8x128xf32>
    %cst_17 = arith.constant 1.000000e+00 : f32
    %33 = vector.broadcast %cst_17 : f32 to vector<8x128xf32>
    %34 = arith.addf %33, %32 : vector<8x128xf32>
    %35 = arith.divf %33, %34 : vector<8x128xf32>
    %36 = vector.extract_strided_slice %29 {offsets = [0, 256], sizes = [8, 128], strides = [1, 1]} : vector<8x512xf32> to vector<8x128xf32>
    %37 = math.tanh %36 : vector<8x128xf32>
    %38 = vector.extract_strided_slice %29 {offsets = [0, 384], sizes = [8, 128], strides = [1, 1]} : vector<8x512xf32> to vector<8x128xf32>
    %39 = arith.negf %38 : vector<8x128xf32>
    %40 = math.exp %39 : vector<8x128xf32>
    %cst_18 = arith.constant 1.000000e+00 : f32
    %41 = vector.broadcast %cst_18 : f32 to vector<8x128xf32>
    %42 = arith.addf %41, %40 : vector<8x128xf32>
    %43 = arith.divf %41, %42 : vector<8x128xf32>
    %44 = vector.extract_strided_slice %29 {offsets = [0, 128], sizes = [8, 128], strides = [1, 1]} : vector<8x512xf32> to vector<8x128xf32>
    %45 = arith.negf %44 : vector<8x128xf32>
    %46 = math.exp %45 : vector<8x128xf32>
    %cst_19 = arith.constant 1.000000e+00 : f32
    %47 = vector.broadcast %cst_19 : f32 to vector<8x128xf32>
    %48 = arith.addf %47, %46 : vector<8x128xf32>
    %49 = arith.divf %47, %48 : vector<8x128xf32>
    %50 = arith.mulf %49, %22 : vector<8x128xf32>
    %51 = arith.mulf %35, %37 : vector<8x128xf32>
    %52 = arith.addf %50, %51 : vector<8x128xf32>
    %53 = math.tanh %52 : vector<8x128xf32>
    %54 = arith.mulf %43, %53 : vector<8x128xf32>
    %c8_20 = arith.constant 8 : index
    %c0_21 = arith.constant 0 : index
    %55 = vector.load %arg12[%c8_20, %c0_21] : memref<64x128xf32, #tpu.memory_space<vmem>>, vector<8x128xf32>
    tpu.vector_store %arg12[%c8_20, %c0_21], %54 {strides = array<i32>} : memref<64x128xf32, #tpu.memory_space<vmem>>, vector<8x128xf32>,
    %c16 = arith.constant 16 : index
    %c0_22 = arith.constant 0 : index
    %56 = vector.load %arg11[%c16, %c0_22] : memref<64x512xf32, #tpu.memory_space<vmem>>, vector<8x512xf32>
    %c0_23 = arith.constant 0 : index
    %c0_24 = arith.constant 0 : index
    %57 = vector.load %arg3[%c0_23, %c0_24] : memref<128x512xf32, #tpu.memory_space<vmem>>, vector<128x512xf32>
    %cst_25 = arith.constant dense<0.000000e+00> : vector<8x512xf32>
    %58 = tpu.matmul %54, %57, %cst_25 {dimension_numbers = #tpu.dot_dimension_numbers<[1], [0], [0], [1], [0, 0, 1, 1], [], []>} : vector<8x128xf32>, vector<128x512xf32>, vector<8x512xf32> -> vector<8x512xf32>
    %59 = arith.addf %56, %58 : vector<8x512xf32>
    %60 = vector.extract_strided_slice %59 {offsets = [0, 0], sizes = [8, 128], strides = [1, 1]} : vector<8x512xf32> to vector<8x128xf32>
    %61 = arith.negf %60 : vector<8x128xf32>
    %62 = math.exp %61 : vector<8x128xf32>
    %cst_26 = arith.constant 1.000000e+00 : f32
    %63 = vector.broadcast %cst_26 : f32 to vector<8x128xf32>
    %64 = arith.addf %63, %62 : vector<8x128xf32>
    %65 = arith.divf %63, %64 : vector<8x128xf32>
    %66 = vector.extract_strided_slice %59 {offsets = [0, 256], sizes = [8, 128], strides = [1, 1]} : vector<8x512xf32> to vector<8x128xf32>
    %67 = math.tanh %66 : vector<8x128xf32>
    %68 = vector.extract_strided_slice %59 {offsets = [0, 384], sizes = [8, 128], strides = [1, 1]} : vector<8x512xf32> to vector<8x128xf32>
    %69 = arith.negf %68 : vector<8x128xf32>
    %70 = math.exp %69 : vector<8x128xf32>
    %cst_27 = arith.constant 1.000000e+00 : f32
    %71 = vector.broadcast %cst_27 : f32 to vector<8x128xf32>
    %72 = arith.addf %71, %70 : vector<8x128xf32>
    %73 = arith.divf %71, %72 : vector<8x128xf32>
    %74 = vector.extract_strided_slice %59 {offsets = [0, 128], sizes = [8, 128], strides = [1, 1]} : vector<8x512xf32> to vector<8x128xf32>
    %75 = arith.negf %74 : vector<8x128xf32>
    %76 = math.exp %75 : vector<8x128xf32>
    %cst_28 = arith.constant 1.000000e+00 : f32
    %77 = vector.broadcast %cst_28 : f32 to vector<8x128xf32>
    %78 = arith.addf %77, %76 : vector<8x128xf32>
    %79 = arith.divf %77, %78 : vector<8x128xf32>
    %80 = arith.mulf %79, %52 : vector<8x128xf32>
    %81 = arith.mulf %65, %67 : vector<8x128xf32>
    %82 = arith.addf %80, %81 : vector<8x128xf32>
    %83 = math.tanh %82 : vector<8x128xf32>
    %84 = arith.mulf %73, %83 : vector<8x128xf32>
    %c16_29 = arith.constant 16 : index
    %c0_30 = arith.constant 0 : index
    %85 = vector.load %arg12[%c16_29, %c0_30] : memref<64x128xf32, #tpu.memory_space<vmem>>, vector<8x128xf32>
    tpu.vector_store %arg12[%c16_29, %c0_30], %84 {strides = array<i32>} : memref<64x128xf32, #tpu.memory_space<vmem>>, vector<8x128xf32>,
    %c24 = arith.constant 24 : index
    %c0_31 = arith.constant 0 : index
    %86 = vector.load %arg11[%c24, %c0_31] : memref<64x512xf32, #tpu.memory_space<vmem>>, vector<8x512xf32>
    %c0_32 = arith.constant 0 : index
    %c0_33 = arith.constant 0 : index
    %87 = vector.load %arg3[%c0_32, %c0_33] : memref<128x512xf32, #tpu.memory_space<vmem>>, vector<128x512xf32>
    %cst_34 = arith.constant dense<0.000000e+00> : vector<8x512xf32>
    %88 = tpu.matmul %84, %87, %cst_34 {dimension_numbers = #tpu.dot_dimension_numbers<[1], [0], [0], [1], [0, 0, 1, 1], [], []>} : vector<8x128xf32>, vector<128x512xf32>, vector<8x512xf32> -> vector<8x512xf32>
    %89 = arith.addf %86, %88 : vector<8x512xf32>
    %90 = vector.extract_strided_slice %89 {offsets = [0, 0], sizes = [8, 128], strides = [1, 1]} : vector<8x512xf32> to vector<8x128xf32>
    %91 = arith.negf %90 : vector<8x128xf32>
    %92 = math.exp %91 : vector<8x128xf32>
    %cst_35 = arith.constant 1.000000e+00 : f32
    %93 = vector.broadcast %cst_35 : f32 to vector<8x128xf32>
    %94 = arith.addf %93, %92 : vector<8x128xf32>
    %95 = arith.divf %93, %94 : vector<8x128xf32>
    %96 = vector.extract_strided_slice %89 {offsets = [0, 256], sizes = [8, 128], strides = [1, 1]} : vector<8x512xf32> to vector<8x128xf32>
    %97 = math.tanh %96 : vector<8x128xf32>
    %98 = vector.extract_strided_slice %89 {offsets = [0, 384], sizes = [8, 128], strides = [1, 1]} : vector<8x512xf32> to vector<8x128xf32>
    %99 = arith.negf %98 : vector<8x128xf32>
    %100 = math.exp %99 : vector<8x128xf32>
    %cst_36 = arith.constant 1.000000e+00 : f32
    %101 = vector.broadcast %cst_36 : f32 to vector<8x128xf32>
    %102 = arith.addf %101, %100 : vector<8x128xf32>
    %103 = arith.divf %101, %102 : vector<8x128xf32>
    %104 = vector.extract_strided_slice %89 {offsets = [0, 128], sizes = [8, 128], strides = [1, 1]} : vector<8x512xf32> to vector<8x128xf32>
    %105 = arith.negf %104 : vector<8x128xf32>
    %106 = math.exp %105 : vector<8x128xf32>
    %cst_37 = arith.constant 1.000000e+00 : f32
    %107 = vector.broadcast %cst_37 : f32 to vector<8x128xf32>
    %108 = arith.addf %107, %106 : vector<8x128xf32>
    %109 = arith.divf %107, %108 : vector<8x128xf32>
    %110 = arith.mulf %109, %82 : vector<8x128xf32>
    %111 = arith.mulf %95, %97 : vector<8x128xf32>
    %112 = arith.addf %110, %111 : vector<8x128xf32>
    %113 = math.tanh %112 : vector<8x128xf32>
    %114 = arith.mulf %103, %113 : vector<8x128xf32>
    %c24_38 = arith.constant 24 : index
    %c0_39 = arith.constant 0 : index
    %115 = vector.load %arg12[%c24_38, %c0_39] : memref<64x128xf32, #tpu.memory_space<vmem>>, vector<8x128xf32>
    tpu.vector_store %arg12[%c24_38, %c0_39], %114 {strides = array<i32>} : memref<64x128xf32, #tpu.memory_space<vmem>>, vector<8x128xf32>,
    %c32 = arith.constant 32 : index
    %c0_40 = arith.constant 0 : index
    %116 = vector.load %arg11[%c32, %c0_40] : memref<64x512xf32, #tpu.memory_space<vmem>>, vector<8x512xf32>
    %c0_41 = arith.constant 0 : index
    %c0_42 = arith.constant 0 : index
    %117 = vector.load %arg3[%c0_41, %c0_42] : memref<128x512xf32, #tpu.memory_space<vmem>>, vector<128x512xf32>
    %cst_43 = arith.constant dense<0.000000e+00> : vector<8x512xf32>
    %118 = tpu.matmul %114, %117, %cst_43 {dimension_numbers = #tpu.dot_dimension_numbers<[1], [0], [0], [1], [0, 0, 1, 1], [], []>} : vector<8x128xf32>, vector<128x512xf32>, vector<8x512xf32> -> vector<8x512xf32>
    %119 = arith.addf %116, %118 : vector<8x512xf32>
    %120 = vector.extract_strided_slice %119 {offsets = [0, 0], sizes = [8, 128], strides = [1, 1]} : vector<8x512xf32> to vector<8x128xf32>
    %121 = arith.negf %120 : vector<8x128xf32>
    %122 = math.exp %121 : vector<8x128xf32>
    %cst_44 = arith.constant 1.000000e+00 : f32
    %123 = vector.broadcast %cst_44 : f32 to vector<8x128xf32>
    %124 = arith.addf %123, %122 : vector<8x128xf32>
    %125 = arith.divf %123, %124 : vector<8x128xf32>
    %126 = vector.extract_strided_slice %119 {offsets = [0, 256], sizes = [8, 128], strides = [1, 1]} : vector<8x512xf32> to vector<8x128xf32>
    %127 = math.tanh %126 : vector<8x128xf32>
    %128 = vector.extract_strided_slice %119 {offsets = [0, 384], sizes = [8, 128], strides = [1, 1]} : vector<8x512xf32> to vector<8x128xf32>
    %129 = arith.negf %128 : vector<8x128xf32>
    %130 = math.exp %129 : vector<8x128xf32>
    %cst_45 = arith.constant 1.000000e+00 : f32
    %131 = vector.broadcast %cst_45 : f32 to vector<8x128xf32>
    %132 = arith.addf %131, %130 : vector<8x128xf32>
    %133 = arith.divf %131, %132 : vector<8x128xf32>
    %134 = vector.extract_strided_slice %119 {offsets = [0, 128], sizes = [8, 128], strides = [1, 1]} : vector<8x512xf32> to vector<8x128xf32>
    %135 = arith.negf %134 : vector<8x128xf32>
    %136 = math.exp %135 : vector<8x128xf32>
    %cst_46 = arith.constant 1.000000e+00 : f32
    %137 = vector.broadcast %cst_46 : f32 to vector<8x128xf32>
    %138 = arith.addf %137, %136 : vector<8x128xf32>
    %139 = arith.divf %137, %138 : vector<8x128xf32>
    %140 = arith.mulf %139, %112 : vector<8x128xf32>
    %141 = arith.mulf %125, %127 : vector<8x128xf32>
    %142 = arith.addf %140, %141 : vector<8x128xf32>
    %143 = math.tanh %142 : vector<8x128xf32>
    %144 = arith.mulf %133, %143 : vector<8x128xf32>
    %c32_47 = arith.constant 32 : index
    %c0_48 = arith.constant 0 : index
    %145 = vector.load %arg12[%c32_47, %c0_48] : memref<64x128xf32, #tpu.memory_space<vmem>>, vector<8x128xf32>
    tpu.vector_store %arg12[%c32_47, %c0_48], %144 {strides = array<i32>} : memref<64x128xf32, #tpu.memory_space<vmem>>, vector<8x128xf32>,
    %c40 = arith.constant 40 : index
    %c0_49 = arith.constant 0 : index
    %146 = vector.load %arg11[%c40, %c0_49] : memref<64x512xf32, #tpu.memory_space<vmem>>, vector<8x512xf32>
    %c0_50 = arith.constant 0 : index
    %c0_51 = arith.constant 0 : index
    %147 = vector.load %arg3[%c0_50, %c0_51] : memref<128x512xf32, #tpu.memory_space<vmem>>, vector<128x512xf32>
    %cst_52 = arith.constant dense<0.000000e+00> : vector<8x512xf32>
    %148 = tpu.matmul %144, %147, %cst_52 {dimension_numbers = #tpu.dot_dimension_numbers<[1], [0], [0], [1], [0, 0, 1, 1], [], []>} : vector<8x128xf32>, vector<128x512xf32>, vector<8x512xf32> -> vector<8x512xf32>
    %149 = arith.addf %146, %148 : vector<8x512xf32>
    %150 = vector.extract_strided_slice %149 {offsets = [0, 0], sizes = [8, 128], strides = [1, 1]} : vector<8x512xf32> to vector<8x128xf32>
    %151 = arith.negf %150 : vector<8x128xf32>
    %152 = math.exp %151 : vector<8x128xf32>
    %cst_53 = arith.constant 1.000000e+00 : f32
    %153 = vector.broadcast %cst_53 : f32 to vector<8x128xf32>
    %154 = arith.addf %153, %152 : vector<8x128xf32>
    %155 = arith.divf %153, %154 : vector<8x128xf32>
    %156 = vector.extract_strided_slice %149 {offsets = [0, 256], sizes = [8, 128], strides = [1, 1]} : vector<8x512xf32> to vector<8x128xf32>
    %157 = math.tanh %156 : vector<8x128xf32>
    %158 = vector.extract_strided_slice %149 {offsets = [0, 384], sizes = [8, 128], strides = [1, 1]} : vector<8x512xf32> to vector<8x128xf32>
    %159 = arith.negf %158 : vector<8x128xf32>
    %160 = math.exp %159 : vector<8x128xf32>
    %cst_54 = arith.constant 1.000000e+00 : f32
    %161 = vector.broadcast %cst_54 : f32 to vector<8x128xf32>
    %162 = arith.addf %161, %160 : vector<8x128xf32>
    %163 = arith.divf %161, %162 : vector<8x128xf32>
    %164 = vector.extract_strided_slice %149 {offsets = [0, 128], sizes = [8, 128], strides = [1, 1]} : vector<8x512xf32> to vector<8x128xf32>
    %165 = arith.negf %164 : vector<8x128xf32>
    %166 = math.exp %165 : vector<8x128xf32>
    %cst_55 = arith.constant 1.000000e+00 : f32
    %167 = vector.broadcast %cst_55 : f32 to vector<8x128xf32>
    %168 = arith.addf %167, %166 : vector<8x128xf32>
    %169 = arith.divf %167, %168 : vector<8x128xf32>
    %170 = arith.mulf %169, %142 : vector<8x128xf32>
    %171 = arith.mulf %155, %157 : vector<8x128xf32>
    %172 = arith.addf %170, %171 : vector<8x128xf32>
    %173 = math.tanh %172 : vector<8x128xf32>
    %174 = arith.mulf %163, %173 : vector<8x128xf32>
    %c40_56 = arith.constant 40 : index
    %c0_57 = arith.constant 0 : index
    %175 = vector.load %arg12[%c40_56, %c0_57] : memref<64x128xf32, #tpu.memory_space<vmem>>, vector<8x128xf32>
    tpu.vector_store %arg12[%c40_56, %c0_57], %174 {strides = array<i32>} : memref<64x128xf32, #tpu.memory_space<vmem>>, vector<8x128xf32>,
    %c48 = arith.constant 48 : index
    %c0_58 = arith.constant 0 : index
    %176 = vector.load %arg11[%c48, %c0_58] : memref<64x512xf32, #tpu.memory_space<vmem>>, vector<8x512xf32>
    %c0_59 = arith.constant 0 : index
    %c0_60 = arith.constant 0 : index
    %177 = vector.load %arg3[%c0_59, %c0_60] : memref<128x512xf32, #tpu.memory_space<vmem>>, vector<128x512xf32>
    %cst_61 = arith.constant dense<0.000000e+00> : vector<8x512xf32>
    %178 = tpu.matmul %174, %177, %cst_61 {dimension_numbers = #tpu.dot_dimension_numbers<[1], [0], [0], [1], [0, 0, 1, 1], [], []>} : vector<8x128xf32>, vector<128x512xf32>, vector<8x512xf32> -> vector<8x512xf32>
    %179 = arith.addf %176, %178 : vector<8x512xf32>
    %180 = vector.extract_strided_slice %179 {offsets = [0, 0], sizes = [8, 128], strides = [1, 1]} : vector<8x512xf32> to vector<8x128xf32>
    %181 = arith.negf %180 : vector<8x128xf32>
    %182 = math.exp %181 : vector<8x128xf32>
    %cst_62 = arith.constant 1.000000e+00 : f32
    %183 = vector.broadcast %cst_62 : f32 to vector<8x128xf32>
    %184 = arith.addf %183, %182 : vector<8x128xf32>
    %185 = arith.divf %183, %184 : vector<8x128xf32>
    %186 = vector.extract_strided_slice %179 {offsets = [0, 256], sizes = [8, 128], strides = [1, 1]} : vector<8x512xf32> to vector<8x128xf32>
    %187 = math.tanh %186 : vector<8x128xf32>
    %188 = vector.extract_strided_slice %179 {offsets = [0, 384], sizes = [8, 128], strides = [1, 1]} : vector<8x512xf32> to vector<8x128xf32>
    %189 = arith.negf %188 : vector<8x128xf32>
    %190 = math.exp %189 : vector<8x128xf32>
    %cst_63 = arith.constant 1.000000e+00 : f32
    %191 = vector.broadcast %cst_63 : f32 to vector<8x128xf32>
    %192 = arith.addf %191, %190 : vector<8x128xf32>
    %193 = arith.divf %191, %192 : vector<8x128xf32>
    %194 = vector.extract_strided_slice %179 {offsets = [0, 128], sizes = [8, 128], strides = [1, 1]} : vector<8x512xf32> to vector<8x128xf32>
    %195 = arith.negf %194 : vector<8x128xf32>
    %196 = math.exp %195 : vector<8x128xf32>
    %cst_64 = arith.constant 1.000000e+00 : f32
    %197 = vector.broadcast %cst_64 : f32 to vector<8x128xf32>
    %198 = arith.addf %197, %196 : vector<8x128xf32>
    %199 = arith.divf %197, %198 : vector<8x128xf32>
    %200 = arith.mulf %199, %172 : vector<8x128xf32>
    %201 = arith.mulf %185, %187 : vector<8x128xf32>
    %202 = arith.addf %200, %201 : vector<8x128xf32>
    %203 = math.tanh %202 : vector<8x128xf32>
    %204 = arith.mulf %193, %203 : vector<8x128xf32>
    %c48_65 = arith.constant 48 : index
    %c0_66 = arith.constant 0 : index
    %205 = vector.load %arg12[%c48_65, %c0_66] : memref<64x128xf32, #tpu.memory_space<vmem>>, vector<8x128xf32>
    tpu.vector_store %arg12[%c48_65, %c0_66], %204 {strides = array<i32>} : memref<64x128xf32, #tpu.memory_space<vmem>>, vector<8x128xf32>,
    %c56 = arith.constant 56 : index
    %c0_67 = arith.constant 0 : index
    %206 = vector.load %arg11[%c56, %c0_67] : memref<64x512xf32, #tpu.memory_space<vmem>>, vector<8x512xf32>
    %c0_68 = arith.constant 0 : index
    %c0_69 = arith.constant 0 : index
    %207 = vector.load %arg3[%c0_68, %c0_69] : memref<128x512xf32, #tpu.memory_space<vmem>>, vector<128x512xf32>
    %cst_70 = arith.constant dense<0.000000e+00> : vector<8x512xf32>
    %208 = tpu.matmul %204, %207, %cst_70 {dimension_numbers = #tpu.dot_dimension_numbers<[1], [0], [0], [1], [0, 0, 1, 1], [], []>} : vector<8x128xf32>, vector<128x512xf32>, vector<8x512xf32> -> vector<8x512xf32>
    %209 = arith.addf %206, %208 : vector<8x512xf32>
    %210 = vector.extract_strided_slice %209 {offsets = [0, 0], sizes = [8, 128], strides = [1, 1]} : vector<8x512xf32> to vector<8x128xf32>
    %211 = arith.negf %210 : vector<8x128xf32>
    %212 = math.exp %211 : vector<8x128xf32>
    %cst_71 = arith.constant 1.000000e+00 : f32
    %213 = vector.broadcast %cst_71 : f32 to vector<8x128xf32>
    %214 = arith.addf %213, %212 : vector<8x128xf32>
    %215 = arith.divf %213, %214 : vector<8x128xf32>
    %216 = vector.extract_strided_slice %209 {offsets = [0, 256], sizes = [8, 128], strides = [1, 1]} : vector<8x512xf32> to vector<8x128xf32>
    %217 = math.tanh %216 : vector<8x128xf32>
    %218 = vector.extract_strided_slice %209 {offsets = [0, 384], sizes = [8, 128], strides = [1, 1]} : vector<8x512xf32> to vector<8x128xf32>
    %219 = arith.negf %218 : vector<8x128xf32>
    %220 = math.exp %219 : vector<8x128xf32>
    %cst_72 = arith.constant 1.000000e+00 : f32
    %221 = vector.broadcast %cst_72 : f32 to vector<8x128xf32>
    %222 = arith.addf %221, %220 : vector<8x128xf32>
    %223 = arith.divf %221, %222 : vector<8x128xf32>
    %224 = vector.extract_strided_slice %209 {offsets = [0, 128], sizes = [8, 128], strides = [1, 1]} : vector<8x512xf32> to vector<8x128xf32>
    %225 = arith.negf %224 : vector<8x128xf32>
    %226 = math.exp %225 : vector<8x128xf32>
    %cst_73 = arith.constant 1.000000e+00 : f32
    %227 = vector.broadcast %cst_73 : f32 to vector<8x128xf32>
    %228 = arith.addf %227, %226 : vector<8x128xf32>
    %229 = arith.divf %227, %228 : vector<8x128xf32>
    %230 = arith.mulf %229, %202 : vector<8x128xf32>
    %231 = arith.mulf %215, %217 : vector<8x128xf32>
    %232 = arith.addf %230, %231 : vector<8x128xf32>
    %233 = math.tanh %232 : vector<8x128xf32>
    %234 = arith.mulf %223, %233 : vector<8x128xf32>
    %c56_74 = arith.constant 56 : index
    %c0_75 = arith.constant 0 : index
    %235 = vector.load %arg12[%c56_74, %c0_75] : memref<64x128xf32, #tpu.memory_space<vmem>>, vector<8x128xf32>
    tpu.vector_store %arg12[%c56_74, %c0_75], %234 {strides = array<i32>} : memref<64x128xf32, #tpu.memory_space<vmem>>, vector<8x128xf32>,
    %c0_76 = arith.constant 0 : index
    %c0_77 = arith.constant 0 : index
    %236 = vector.load %arg12[%c0_76, %c0_77] : memref<64x128xf32, #tpu.memory_space<vmem>>, vector<64x128xf32>
    %c0_78 = arith.constant 0 : index
    %c0_79 = arith.constant 0 : index
    %237 = vector.load %arg5[%c0_78, %c0_79] : memref<128x512xf32, #tpu.memory_space<vmem>>, vector<128x512xf32>
    %cst_80 = arith.constant dense<0.000000e+00> : vector<64x512xf32>
    %238 = tpu.matmul %236, %237, %cst_80 {dimension_numbers = #tpu.dot_dimension_numbers<[1], [0], [0], [1], [0, 0, 1, 1], [], []>} : vector<64x128xf32>, vector<128x512xf32>, vector<64x512xf32> -> vector<64x512xf32>
    %c0_81 = arith.constant 0 : index
    %c0_82 = arith.constant 0 : index
    %239 = vector.load %arg7[%c0_81, %c0_82] : memref<1x512xf32, #tpu.memory_space<vmem>>, vector<1x512xf32>
    %240 = vector.broadcast %239 : vector<1x512xf32> to vector<64x512xf32>
    %241 = arith.addf %238, %240 : vector<64x512xf32>
    %c0_83 = arith.constant 0 : index
    %c0_84 = arith.constant 0 : index
    %242 = vector.load %arg11[%c0_83, %c0_84] : memref<64x512xf32, #tpu.memory_space<vmem>>, vector<64x512xf32>
    tpu.vector_store %arg11[%c0_83, %c0_84], %241 {strides = array<i32>} : memref<64x512xf32, #tpu.memory_space<vmem>>, vector<64x512xf32>,
    %c0_85 = arith.constant 0 : index
    %c0_86 = arith.constant 0 : index
    %243 = vector.load %arg11[%c0_85, %c0_86] : memref<64x512xf32, #tpu.memory_space<vmem>>, vector<8x512xf32>
    %244 = vector.extract_strided_slice %243 {offsets = [0, 0], sizes = [8, 128], strides = [1, 1]} : vector<8x512xf32> to vector<8x128xf32>
    %245 = arith.negf %244 : vector<8x128xf32>
    %246 = math.exp %245 : vector<8x128xf32>
    %cst_87 = arith.constant 1.000000e+00 : f32
    %247 = vector.broadcast %cst_87 : f32 to vector<8x128xf32>
    %248 = arith.addf %247, %246 : vector<8x128xf32>
    %249 = arith.divf %247, %248 : vector<8x128xf32>
    %250 = vector.extract_strided_slice %243 {offsets = [0, 256], sizes = [8, 128], strides = [1, 1]} : vector<8x512xf32> to vector<8x128xf32>
    %251 = math.tanh %250 : vector<8x128xf32>
    %252 = vector.extract_strided_slice %243 {offsets = [0, 384], sizes = [8, 128], strides = [1, 1]} : vector<8x512xf32> to vector<8x128xf32>
    %253 = arith.negf %252 : vector<8x128xf32>
    %254 = math.exp %253 : vector<8x128xf32>
    %cst_88 = arith.constant 1.000000e+00 : f32
    %255 = vector.broadcast %cst_88 : f32 to vector<8x128xf32>
    %256 = arith.addf %255, %254 : vector<8x128xf32>
    %257 = arith.divf %255, %256 : vector<8x128xf32>
    %258 = arith.mulf %249, %251 : vector<8x128xf32>
    %259 = math.tanh %258 : vector<8x128xf32>
    %260 = arith.mulf %257, %259 : vector<8x128xf32>
    %c0_89 = arith.constant 0 : index
    %c0_90 = arith.constant 0 : index
    %261 = vector.load %arg12[%c0_89, %c0_90] : memref<64x128xf32, #tpu.memory_space<vmem>>, vector<8x128xf32>
    tpu.vector_store %arg12[%c0_89, %c0_90], %260 {strides = array<i32>} : memref<64x128xf32, #tpu.memory_space<vmem>>, vector<8x128xf32>,
    %c8_91 = arith.constant 8 : index
    %c0_92 = arith.constant 0 : index
    %262 = vector.load %arg11[%c8_91, %c0_92] : memref<64x512xf32, #tpu.memory_space<vmem>>, vector<8x512xf32>
    %c0_93 = arith.constant 0 : index
    %c0_94 = arith.constant 0 : index
    %263 = vector.load %arg6[%c0_93, %c0_94] : memref<128x512xf32, #tpu.memory_space<vmem>>, vector<128x512xf32>
    %cst_95 = arith.constant dense<0.000000e+00> : vector<8x512xf32>
    %264 = tpu.matmul %260, %263, %cst_95 {dimension_numbers = #tpu.dot_dimension_numbers<[1], [0], [0], [1], [0, 0, 1, 1], [], []>} : vector<8x128xf32>, vector<128x512xf32>, vector<8x512xf32> -> vector<8x512xf32>
    %265 = arith.addf %262, %264 : vector<8x512xf32>
    %266 = vector.extract_strided_slice %265 {offsets = [0, 0], sizes = [8, 128], strides = [1, 1]} : vector<8x512xf32> to vector<8x128xf32>
    %267 = arith.negf %266 : vector<8x128xf32>
    %268 = math.exp %267 : vector<8x128xf32>
    %cst_96 = arith.constant 1.000000e+00 : f32
    %269 = vector.broadcast %cst_96 : f32 to vector<8x128xf32>
    %270 = arith.addf %269, %268 : vector<8x128xf32>
    %271 = arith.divf %269, %270 : vector<8x128xf32>
    %272 = vector.extract_strided_slice %265 {offsets = [0, 256], sizes = [8, 128], strides = [1, 1]} : vector<8x512xf32> to vector<8x128xf32>
    %273 = math.tanh %272 : vector<8x128xf32>
    %274 = vector.extract_strided_slice %265 {offsets = [0, 384], sizes = [8, 128], strides = [1, 1]} : vector<8x512xf32> to vector<8x128xf32>
    %275 = arith.negf %274 : vector<8x128xf32>
    %276 = math.exp %275 : vector<8x128xf32>
    %cst_97 = arith.constant 1.000000e+00 : f32
    %277 = vector.broadcast %cst_97 : f32 to vector<8x128xf32>
    %278 = arith.addf %277, %276 : vector<8x128xf32>
    %279 = arith.divf %277, %278 : vector<8x128xf32>
    %280 = vector.extract_strided_slice %265 {offsets = [0, 128], sizes = [8, 128], strides = [1, 1]} : vector<8x512xf32> to vector<8x128xf32>
    %281 = arith.negf %280 : vector<8x128xf32>
    %282 = math.exp %281 : vector<8x128xf32>
    %cst_98 = arith.constant 1.000000e+00 : f32
    %283 = vector.broadcast %cst_98 : f32 to vector<8x128xf32>
    %284 = arith.addf %283, %282 : vector<8x128xf32>
    %285 = arith.divf %283, %284 : vector<8x128xf32>
    %286 = arith.mulf %285, %258 : vector<8x128xf32>
    %287 = arith.mulf %271, %273 : vector<8x128xf32>
    %288 = arith.addf %286, %287 : vector<8x128xf32>
    %289 = math.tanh %288 : vector<8x128xf32>
    %290 = arith.mulf %279, %289 : vector<8x128xf32>
    %c8_99 = arith.constant 8 : index
    %c0_100 = arith.constant 0 : index
    %291 = vector.load %arg12[%c8_99, %c0_100] : memref<64x128xf32, #tpu.memory_space<vmem>>, vector<8x128xf32>
    tpu.vector_store %arg12[%c8_99, %c0_100], %290 {strides = array<i32>} : memref<64x128xf32, #tpu.memory_space<vmem>>, vector<8x128xf32>,
    %c16_101 = arith.constant 16 : index
    %c0_102 = arith.constant 0 : index
    %292 = vector.load %arg11[%c16_101, %c0_102] : memref<64x512xf32, #tpu.memory_space<vmem>>, vector<8x512xf32>
    %c0_103 = arith.constant 0 : index
    %c0_104 = arith.constant 0 : index
    %293 = vector.load %arg6[%c0_103, %c0_104] : memref<128x512xf32, #tpu.memory_space<vmem>>, vector<128x512xf32>
    %cst_105 = arith.constant dense<0.000000e+00> : vector<8x512xf32>
    %294 = tpu.matmul %290, %293, %cst_105 {dimension_numbers = #tpu.dot_dimension_numbers<[1], [0], [0], [1], [0, 0, 1, 1], [], []>} : vector<8x128xf32>, vector<128x512xf32>, vector<8x512xf32> -> vector<8x512xf32>
    %295 = arith.addf %292, %294 : vector<8x512xf32>
    %296 = vector.extract_strided_slice %295 {offsets = [0, 0], sizes = [8, 128], strides = [1, 1]} : vector<8x512xf32> to vector<8x128xf32>
    %297 = arith.negf %296 : vector<8x128xf32>
    %298 = math.exp %297 : vector<8x128xf32>
    %cst_106 = arith.constant 1.000000e+00 : f32
    %299 = vector.broadcast %cst_106 : f32 to vector<8x128xf32>
    %300 = arith.addf %299, %298 : vector<8x128xf32>
    %301 = arith.divf %299, %300 : vector<8x128xf32>
    %302 = vector.extract_strided_slice %295 {offsets = [0, 256], sizes = [8, 128], strides = [1, 1]} : vector<8x512xf32> to vector<8x128xf32>
    %303 = math.tanh %302 : vector<8x128xf32>
    %304 = vector.extract_strided_slice %295 {offsets = [0, 384], sizes = [8, 128], strides = [1, 1]} : vector<8x512xf32> to vector<8x128xf32>
    %305 = arith.negf %304 : vector<8x128xf32>
    %306 = math.exp %305 : vector<8x128xf32>
    %cst_107 = arith.constant 1.000000e+00 : f32
    %307 = vector.broadcast %cst_107 : f32 to vector<8x128xf32>
    %308 = arith.addf %307, %306 : vector<8x128xf32>
    %309 = arith.divf %307, %308 : vector<8x128xf32>
    %310 = vector.extract_strided_slice %295 {offsets = [0, 128], sizes = [8, 128], strides = [1, 1]} : vector<8x512xf32> to vector<8x128xf32>
    %311 = arith.negf %310 : vector<8x128xf32>
    %312 = math.exp %311 : vector<8x128xf32>
    %cst_108 = arith.constant 1.000000e+00 : f32
    %313 = vector.broadcast %cst_108 : f32 to vector<8x128xf32>
    %314 = arith.addf %313, %312 : vector<8x128xf32>
    %315 = arith.divf %313, %314 : vector<8x128xf32>
    %316 = arith.mulf %315, %288 : vector<8x128xf32>
    %317 = arith.mulf %301, %303 : vector<8x128xf32>
    %318 = arith.addf %316, %317 : vector<8x128xf32>
    %319 = math.tanh %318 : vector<8x128xf32>
    %320 = arith.mulf %309, %319 : vector<8x128xf32>
    %c16_109 = arith.constant 16 : index
    %c0_110 = arith.constant 0 : index
    %321 = vector.load %arg12[%c16_109, %c0_110] : memref<64x128xf32, #tpu.memory_space<vmem>>, vector<8x128xf32>
    tpu.vector_store %arg12[%c16_109, %c0_110], %320 {strides = array<i32>} : memref<64x128xf32, #tpu.memory_space<vmem>>, vector<8x128xf32>,
    %c24_111 = arith.constant 24 : index
    %c0_112 = arith.constant 0 : index
    %322 = vector.load %arg11[%c24_111, %c0_112] : memref<64x512xf32, #tpu.memory_space<vmem>>, vector<8x512xf32>
    %c0_113 = arith.constant 0 : index
    %c0_114 = arith.constant 0 : index
    %323 = vector.load %arg6[%c0_113, %c0_114] : memref<128x512xf32, #tpu.memory_space<vmem>>, vector<128x512xf32>
    %cst_115 = arith.constant dense<0.000000e+00> : vector<8x512xf32>
    %324 = tpu.matmul %320, %323, %cst_115 {dimension_numbers = #tpu.dot_dimension_numbers<[1], [0], [0], [1], [0, 0, 1, 1], [], []>} : vector<8x128xf32>, vector<128x512xf32>, vector<8x512xf32> -> vector<8x512xf32>
    %325 = arith.addf %322, %324 : vector<8x512xf32>
    %326 = vector.extract_strided_slice %325 {offsets = [0, 0], sizes = [8, 128], strides = [1, 1]} : vector<8x512xf32> to vector<8x128xf32>
    %327 = arith.negf %326 : vector<8x128xf32>
    %328 = math.exp %327 : vector<8x128xf32>
    %cst_116 = arith.constant 1.000000e+00 : f32
    %329 = vector.broadcast %cst_116 : f32 to vector<8x128xf32>
    %330 = arith.addf %329, %328 : vector<8x128xf32>
    %331 = arith.divf %329, %330 : vector<8x128xf32>
    %332 = vector.extract_strided_slice %325 {offsets = [0, 256], sizes = [8, 128], strides = [1, 1]} : vector<8x512xf32> to vector<8x128xf32>
    %333 = math.tanh %332 : vector<8x128xf32>
    %334 = vector.extract_strided_slice %325 {offsets = [0, 384], sizes = [8, 128], strides = [1, 1]} : vector<8x512xf32> to vector<8x128xf32>
    %335 = arith.negf %334 : vector<8x128xf32>
    %336 = math.exp %335 : vector<8x128xf32>
    %cst_117 = arith.constant 1.000000e+00 : f32
    %337 = vector.broadcast %cst_117 : f32 to vector<8x128xf32>
    %338 = arith.addf %337, %336 : vector<8x128xf32>
    %339 = arith.divf %337, %338 : vector<8x128xf32>
    %340 = vector.extract_strided_slice %325 {offsets = [0, 128], sizes = [8, 128], strides = [1, 1]} : vector<8x512xf32> to vector<8x128xf32>
    %341 = arith.negf %340 : vector<8x128xf32>
    %342 = math.exp %341 : vector<8x128xf32>
    %cst_118 = arith.constant 1.000000e+00 : f32
    %343 = vector.broadcast %cst_118 : f32 to vector<8x128xf32>
    %344 = arith.addf %343, %342 : vector<8x128xf32>
    %345 = arith.divf %343, %344 : vector<8x128xf32>
    %346 = arith.mulf %345, %318 : vector<8x128xf32>
    %347 = arith.mulf %331, %333 : vector<8x128xf32>
    %348 = arith.addf %346, %347 : vector<8x128xf32>
    %349 = math.tanh %348 : vector<8x128xf32>
    %350 = arith.mulf %339, %349 : vector<8x128xf32>
    %c24_119 = arith.constant 24 : index
    %c0_120 = arith.constant 0 : index
    %351 = vector.load %arg12[%c24_119, %c0_120] : memref<64x128xf32, #tpu.memory_space<vmem>>, vector<8x128xf32>
    tpu.vector_store %arg12[%c24_119, %c0_120], %350 {strides = array<i32>} : memref<64x128xf32, #tpu.memory_space<vmem>>, vector<8x128xf32>,
    %c32_121 = arith.constant 32 : index
    %c0_122 = arith.constant 0 : index
    %352 = vector.load %arg11[%c32_121, %c0_122] : memref<64x512xf32, #tpu.memory_space<vmem>>, vector<8x512xf32>
    %c0_123 = arith.constant 0 : index
    %c0_124 = arith.constant 0 : index
    %353 = vector.load %arg6[%c0_123, %c0_124] : memref<128x512xf32, #tpu.memory_space<vmem>>, vector<128x512xf32>
    %cst_125 = arith.constant dense<0.000000e+00> : vector<8x512xf32>
    %354 = tpu.matmul %350, %353, %cst_125 {dimension_numbers = #tpu.dot_dimension_numbers<[1], [0], [0], [1], [0, 0, 1, 1], [], []>} : vector<8x128xf32>, vector<128x512xf32>, vector<8x512xf32> -> vector<8x512xf32>
    %355 = arith.addf %352, %354 : vector<8x512xf32>
    %356 = vector.extract_strided_slice %355 {offsets = [0, 0], sizes = [8, 128], strides = [1, 1]} : vector<8x512xf32> to vector<8x128xf32>
    %357 = arith.negf %356 : vector<8x128xf32>
    %358 = math.exp %357 : vector<8x128xf32>
    %cst_126 = arith.constant 1.000000e+00 : f32
    %359 = vector.broadcast %cst_126 : f32 to vector<8x128xf32>
    %360 = arith.addf %359, %358 : vector<8x128xf32>
    %361 = arith.divf %359, %360 : vector<8x128xf32>
    %362 = vector.extract_strided_slice %355 {offsets = [0, 256], sizes = [8, 128], strides = [1, 1]} : vector<8x512xf32> to vector<8x128xf32>
    %363 = math.tanh %362 : vector<8x128xf32>
    %364 = vector.extract_strided_slice %355 {offsets = [0, 384], sizes = [8, 128], strides = [1, 1]} : vector<8x512xf32> to vector<8x128xf32>
    %365 = arith.negf %364 : vector<8x128xf32>
    %366 = math.exp %365 : vector<8x128xf32>
    %cst_127 = arith.constant 1.000000e+00 : f32
    %367 = vector.broadcast %cst_127 : f32 to vector<8x128xf32>
    %368 = arith.addf %367, %366 : vector<8x128xf32>
    %369 = arith.divf %367, %368 : vector<8x128xf32>
    %370 = vector.extract_strided_slice %355 {offsets = [0, 128], sizes = [8, 128], strides = [1, 1]} : vector<8x512xf32> to vector<8x128xf32>
    %371 = arith.negf %370 : vector<8x128xf32>
    %372 = math.exp %371 : vector<8x128xf32>
    %cst_128 = arith.constant 1.000000e+00 : f32
    %373 = vector.broadcast %cst_128 : f32 to vector<8x128xf32>
    %374 = arith.addf %373, %372 : vector<8x128xf32>
    %375 = arith.divf %373, %374 : vector<8x128xf32>
    %376 = arith.mulf %375, %348 : vector<8x128xf32>
    %377 = arith.mulf %361, %363 : vector<8x128xf32>
    %378 = arith.addf %376, %377 : vector<8x128xf32>
    %379 = math.tanh %378 : vector<8x128xf32>
    %380 = arith.mulf %369, %379 : vector<8x128xf32>
    %c32_129 = arith.constant 32 : index
    %c0_130 = arith.constant 0 : index
    %381 = vector.load %arg12[%c32_129, %c0_130] : memref<64x128xf32, #tpu.memory_space<vmem>>, vector<8x128xf32>
    tpu.vector_store %arg12[%c32_129, %c0_130], %380 {strides = array<i32>} : memref<64x128xf32, #tpu.memory_space<vmem>>, vector<8x128xf32>,
    %c40_131 = arith.constant 40 : index
    %c0_132 = arith.constant 0 : index
    %382 = vector.load %arg11[%c40_131, %c0_132] : memref<64x512xf32, #tpu.memory_space<vmem>>, vector<8x512xf32>
    %c0_133 = arith.constant 0 : index
    %c0_134 = arith.constant 0 : index
    %383 = vector.load %arg6[%c0_133, %c0_134] : memref<128x512xf32, #tpu.memory_space<vmem>>, vector<128x512xf32>
    %cst_135 = arith.constant dense<0.000000e+00> : vector<8x512xf32>
    %384 = tpu.matmul %380, %383, %cst_135 {dimension_numbers = #tpu.dot_dimension_numbers<[1], [0], [0], [1], [0, 0, 1, 1], [], []>} : vector<8x128xf32>, vector<128x512xf32>, vector<8x512xf32> -> vector<8x512xf32>
    %385 = arith.addf %382, %384 : vector<8x512xf32>
    %386 = vector.extract_strided_slice %385 {offsets = [0, 0], sizes = [8, 128], strides = [1, 1]} : vector<8x512xf32> to vector<8x128xf32>
    %387 = arith.negf %386 : vector<8x128xf32>
    %388 = math.exp %387 : vector<8x128xf32>
    %cst_136 = arith.constant 1.000000e+00 : f32
    %389 = vector.broadcast %cst_136 : f32 to vector<8x128xf32>
    %390 = arith.addf %389, %388 : vector<8x128xf32>
    %391 = arith.divf %389, %390 : vector<8x128xf32>
    %392 = vector.extract_strided_slice %385 {offsets = [0, 256], sizes = [8, 128], strides = [1, 1]} : vector<8x512xf32> to vector<8x128xf32>
    %393 = math.tanh %392 : vector<8x128xf32>
    %394 = vector.extract_strided_slice %385 {offsets = [0, 384], sizes = [8, 128], strides = [1, 1]} : vector<8x512xf32> to vector<8x128xf32>
    %395 = arith.negf %394 : vector<8x128xf32>
    %396 = math.exp %395 : vector<8x128xf32>
    %cst_137 = arith.constant 1.000000e+00 : f32
    %397 = vector.broadcast %cst_137 : f32 to vector<8x128xf32>
    %398 = arith.addf %397, %396 : vector<8x128xf32>
    %399 = arith.divf %397, %398 : vector<8x128xf32>
    %400 = vector.extract_strided_slice %385 {offsets = [0, 128], sizes = [8, 128], strides = [1, 1]} : vector<8x512xf32> to vector<8x128xf32>
    %401 = arith.negf %400 : vector<8x128xf32>
    %402 = math.exp %401 : vector<8x128xf32>
    %cst_138 = arith.constant 1.000000e+00 : f32
    %403 = vector.broadcast %cst_138 : f32 to vector<8x128xf32>
    %404 = arith.addf %403, %402 : vector<8x128xf32>
    %405 = arith.divf %403, %404 : vector<8x128xf32>
    %406 = arith.mulf %405, %378 : vector<8x128xf32>
    %407 = arith.mulf %391, %393 : vector<8x128xf32>
    %408 = arith.addf %406, %407 : vector<8x128xf32>
    %409 = math.tanh %408 : vector<8x128xf32>
    %410 = arith.mulf %399, %409 : vector<8x128xf32>
    %c40_139 = arith.constant 40 : index
    %c0_140 = arith.constant 0 : index
    %411 = vector.load %arg12[%c40_139, %c0_140] : memref<64x128xf32, #tpu.memory_space<vmem>>, vector<8x128xf32>
    tpu.vector_store %arg12[%c40_139, %c0_140], %410 {strides = array<i32>} : memref<64x128xf32, #tpu.memory_space<vmem>>, vector<8x128xf32>,
    %c48_141 = arith.constant 48 : index
    %c0_142 = arith.constant 0 : index
    %412 = vector.load %arg11[%c48_141, %c0_142] : memref<64x512xf32, #tpu.memory_space<vmem>>, vector<8x512xf32>
    %c0_143 = arith.constant 0 : index
    %c0_144 = arith.constant 0 : index
    %413 = vector.load %arg6[%c0_143, %c0_144] : memref<128x512xf32, #tpu.memory_space<vmem>>, vector<128x512xf32>
    %cst_145 = arith.constant dense<0.000000e+00> : vector<8x512xf32>
    %414 = tpu.matmul %410, %413, %cst_145 {dimension_numbers = #tpu.dot_dimension_numbers<[1], [0], [0], [1], [0, 0, 1, 1], [], []>} : vector<8x128xf32>, vector<128x512xf32>, vector<8x512xf32> -> vector<8x512xf32>
    %415 = arith.addf %412, %414 : vector<8x512xf32>
    %416 = vector.extract_strided_slice %415 {offsets = [0, 0], sizes = [8, 128], strides = [1, 1]} : vector<8x512xf32> to vector<8x128xf32>
    %417 = arith.negf %416 : vector<8x128xf32>
    %418 = math.exp %417 : vector<8x128xf32>
    %cst_146 = arith.constant 1.000000e+00 : f32
    %419 = vector.broadcast %cst_146 : f32 to vector<8x128xf32>
    %420 = arith.addf %419, %418 : vector<8x128xf32>
    %421 = arith.divf %419, %420 : vector<8x128xf32>
    %422 = vector.extract_strided_slice %415 {offsets = [0, 256], sizes = [8, 128], strides = [1, 1]} : vector<8x512xf32> to vector<8x128xf32>
    %423 = math.tanh %422 : vector<8x128xf32>
    %424 = vector.extract_strided_slice %415 {offsets = [0, 384], sizes = [8, 128], strides = [1, 1]} : vector<8x512xf32> to vector<8x128xf32>
    %425 = arith.negf %424 : vector<8x128xf32>
    %426 = math.exp %425 : vector<8x128xf32>
    %cst_147 = arith.constant 1.000000e+00 : f32
    %427 = vector.broadcast %cst_147 : f32 to vector<8x128xf32>
    %428 = arith.addf %427, %426 : vector<8x128xf32>
    %429 = arith.divf %427, %428 : vector<8x128xf32>
    %430 = vector.extract_strided_slice %415 {offsets = [0, 128], sizes = [8, 128], strides = [1, 1]} : vector<8x512xf32> to vector<8x128xf32>
    %431 = arith.negf %430 : vector<8x128xf32>
    %432 = math.exp %431 : vector<8x128xf32>
    %cst_148 = arith.constant 1.000000e+00 : f32
    %433 = vector.broadcast %cst_148 : f32 to vector<8x128xf32>
    %434 = arith.addf %433, %432 : vector<8x128xf32>
    %435 = arith.divf %433, %434 : vector<8x128xf32>
    %436 = arith.mulf %435, %408 : vector<8x128xf32>
    %437 = arith.mulf %421, %423 : vector<8x128xf32>
    %438 = arith.addf %436, %437 : vector<8x128xf32>
    %439 = math.tanh %438 : vector<8x128xf32>
    %440 = arith.mulf %429, %439 : vector<8x128xf32>
    %c48_149 = arith.constant 48 : index
    %c0_150 = arith.constant 0 : index
    %441 = vector.load %arg12[%c48_149, %c0_150] : memref<64x128xf32, #tpu.memory_space<vmem>>, vector<8x128xf32>
    tpu.vector_store %arg12[%c48_149, %c0_150], %440 {strides = array<i32>} : memref<64x128xf32, #tpu.memory_space<vmem>>, vector<8x128xf32>,
    %c56_151 = arith.constant 56 : index
    %c0_152 = arith.constant 0 : index
    %442 = vector.load %arg11[%c56_151, %c0_152] : memref<64x512xf32, #tpu.memory_space<vmem>>, vector<8x512xf32>
    %c0_153 = arith.constant 0 : index
    %c0_154 = arith.constant 0 : index
    %443 = vector.load %arg6[%c0_153, %c0_154] : memref<128x512xf32, #tpu.memory_space<vmem>>, vector<128x512xf32>
    %cst_155 = arith.constant dense<0.000000e+00> : vector<8x512xf32>
    %444 = tpu.matmul %440, %443, %cst_155 {dimension_numbers = #tpu.dot_dimension_numbers<[1], [0], [0], [1], [0, 0, 1, 1], [], []>} : vector<8x128xf32>, vector<128x512xf32>, vector<8x512xf32> -> vector<8x512xf32>
    %445 = arith.addf %442, %444 : vector<8x512xf32>
    %446 = vector.extract_strided_slice %445 {offsets = [0, 0], sizes = [8, 128], strides = [1, 1]} : vector<8x512xf32> to vector<8x128xf32>
    %447 = arith.negf %446 : vector<8x128xf32>
    %448 = math.exp %447 : vector<8x128xf32>
    %cst_156 = arith.constant 1.000000e+00 : f32
    %449 = vector.broadcast %cst_156 : f32 to vector<8x128xf32>
    %450 = arith.addf %449, %448 : vector<8x128xf32>
    %451 = arith.divf %449, %450 : vector<8x128xf32>
    %452 = vector.extract_strided_slice %445 {offsets = [0, 256], sizes = [8, 128], strides = [1, 1]} : vector<8x512xf32> to vector<8x128xf32>
    %453 = math.tanh %452 : vector<8x128xf32>
    %454 = vector.extract_strided_slice %445 {offsets = [0, 384], sizes = [8, 128], strides = [1, 1]} : vector<8x512xf32> to vector<8x128xf32>
    %455 = arith.negf %454 : vector<8x128xf32>
    %456 = math.exp %455 : vector<8x128xf32>
    %cst_157 = arith.constant 1.000000e+00 : f32
    %457 = vector.broadcast %cst_157 : f32 to vector<8x128xf32>
    %458 = arith.addf %457, %456 : vector<8x128xf32>
    %459 = arith.divf %457, %458 : vector<8x128xf32>
    %460 = vector.extract_strided_slice %445 {offsets = [0, 128], sizes = [8, 128], strides = [1, 1]} : vector<8x512xf32> to vector<8x128xf32>
    %461 = arith.negf %460 : vector<8x128xf32>
    %462 = math.exp %461 : vector<8x128xf32>
    %cst_158 = arith.constant 1.000000e+00 : f32
    %463 = vector.broadcast %cst_158 : f32 to vector<8x128xf32>
    %464 = arith.addf %463, %462 : vector<8x128xf32>
    %465 = arith.divf %463, %464 : vector<8x128xf32>
    %466 = arith.mulf %465, %438 : vector<8x128xf32>
    %467 = arith.mulf %451, %453 : vector<8x128xf32>
    %468 = arith.addf %466, %467 : vector<8x128xf32>
    %469 = math.tanh %468 : vector<8x128xf32>
    %470 = arith.mulf %459, %469 : vector<8x128xf32>
    %c56_159 = arith.constant 56 : index
    %c0_160 = arith.constant 0 : index
    %471 = vector.load %arg12[%c56_159, %c0_160] : memref<64x128xf32, #tpu.memory_space<vmem>>, vector<8x128xf32>
    tpu.vector_store %arg12[%c56_159, %c0_160], %470 {strides = array<i32>} : memref<64x128xf32, #tpu.memory_space<vmem>>, vector<8x128xf32>,
    %c0_161 = arith.constant 0 : index
    %c0_162 = arith.constant 0 : index
    %472 = vector.load %arg12[%c0_161, %c0_162] : memref<64x128xf32, #tpu.memory_space<vmem>>, vector<64x128xf32>
    %c0_163 = arith.constant 0 : index
    %c0_164 = arith.constant 0 : index
    %473 = vector.load %arg8[%c0_163, %c0_164] : memref<128x128xf32, #tpu.memory_space<vmem>>, vector<128x128xf32>
    %cst_165 = arith.constant dense<0.000000e+00> : vector<64x128xf32>
    %474 = tpu.matmul %472, %473, %cst_165 {dimension_numbers = #tpu.dot_dimension_numbers<[1], [0], [0], [1], [0, 0, 1, 1], [], []>} : vector<64x128xf32>, vector<128x128xf32>, vector<64x128xf32> -> vector<64x128xf32>
    %c0_166 = arith.constant 0 : index
    %c0_167 = arith.constant 0 : index
    %475 = vector.load %arg9[%c0_166, %c0_167] : memref<1x128xf32, #tpu.memory_space<vmem>>, vector<1x128xf32>
    %476 = vector.broadcast %475 : vector<1x128xf32> to vector<64x128xf32>
    %477 = arith.addf %474, %476 : vector<64x128xf32>
    %cst_168 = arith.constant dense<0xFF800000> : vector<64xf32>
    %478 = vector.multi_reduction <maximumf>, %477, %cst_168 [1] : vector<64x128xf32> to vector<64xf32>
    %479 = vector.shape_cast %478 : vector<64xf32> to vector<64x1xf32>
    %480 = vector.broadcast %479 : vector<64x1xf32> to vector<64x128xf32>
    %481 = arith.subf %477, %480 : vector<64x128xf32>
    %482 = math.exp %481 : vector<64x128xf32>
    %cst_169 = arith.constant dense<0.000000e+00> : vector<64xf32>
    %483 = vector.multi_reduction <add>, %482, %cst_169 [1] : vector<64x128xf32> to vector<64xf32>
    %484 = vector.shape_cast %483 : vector<64xf32> to vector<64x1xf32>
    %485 = vector.broadcast %484 : vector<64x1xf32> to vector<64x128xf32>
    %486 = arith.divf %482, %485 : vector<64x128xf32>
    %c0_170 = arith.constant 0 : index
    %c0_171 = arith.constant 0 : index
    %487 = vector.load %arg10[%c0_170, %c0_171] : memref<64x128xf32, #tpu.memory_space<vmem>>, vector<64x128xf32>
    tpu.vector_store %arg10[%c0_170, %c0_171], %486 {strides = array<i32>} : memref<64x128xf32, #tpu.memory_space<vmem>>, vector<64x128xf32>,
    return
  }
  func.func @transform_0(%arg0: i32) -> (i32, i32) {
    %c0_i32 = arith.constant 0 : i32
    %c0_i32_0 = arith.constant 0 : i32
    %c0_i32_1 = arith.constant 0 : i32
    return %c0_i32, %c0_i32_0 : i32, i32
  }
  func.func @transform_1(%arg0: i32) -> (i32, i32) {
    %c0_i32 = arith.constant 0 : i32
    %c0_i32_0 = arith.constant 0 : i32
    %c0_i32_1 = arith.constant 0 : i32
    return %c0_i32, %c0_i32_0 : i32, i32
  }
  func.func @transform_2(%arg0: i32) -> (i32, i32) {
    %c0_i32 = arith.constant 0 : i32
    %c0_i32_0 = arith.constant 0 : i32
    %c0_i32_1 = arith.constant 0 : i32
    return %c0_i32, %c0_i32_0 : i32, i32
  }
  func.func @transform_3(%arg0: i32) -> (i32, i32) {
    %c0_i32 = arith.constant 0 : i32
    %c0_i32_0 = arith.constant 0 : i32
    %c0_i32_1 = arith.constant 0 : i32
    return %c0_i32, %c0_i32_0 : i32, i32
  }
  func.func @transform_4(%arg0: i32) -> (i32, i32) {
    %c0_i32 = arith.constant 0 : i32
    %c0_i32_0 = arith.constant 0 : i32
    %c0_i32_1 = arith.constant 0 : i32
    return %c0_i32, %c0_i32_0 : i32, i32
  }
  func.func @transform_5(%arg0: i32) -> (i32, i32) {
    %c0_i32 = arith.constant 0 : i32
    %c0_i32_0 = arith.constant 0 : i32
    %c0_i32_1 = arith.constant 0 : i32
    return %c0_i32, %c0_i32_0 : i32, i32
  }
  func.func @transform_6(%arg0: i32) -> (i32, i32) {
    %c0_i32 = arith.constant 0 : i32
    %c0_i32_0 = arith.constant 0 : i32
    %c0_i32_1 = arith.constant 0 : i32
    return %c0_i32, %c0_i32_0 : i32, i32
  }
  func.func @transform_7(%arg0: i32) -> (i32, i32) {
    %c0_i32 = arith.constant 0 : i32
    %c0_i32_0 = arith.constant 0 : i32
    %c0_i32_1 = arith.constant 0 : i32
    return %c0_i32, %c0_i32_0 : i32, i32
  }
  func.func @transform_8(%arg0: i32) -> (i32, i32) {
    %c0_i32 = arith.constant 0 : i32
    %c0_i32_0 = arith.constant 0 : i32
    %c0_i32_1 = arith.constant 0 : i32
    return %c0_i32, %c0_i32_0 : i32, i32
  }
  func.func @transform_9(%arg0: i32) -> (i32, i32) {
    %c0_i32 = arith.constant 0 : i32
    %c0_i32_0 = arith.constant 0 : i32
    %c0_i32_1 = arith.constant 0 : i32
    return %c0_i32, %c0_i32_0 : i32, i32
  }
}

</mosaic_0001>

<llo_original>
// kernel: tpu_custom_call.1
$region0: #{tpu_custom_call.1}
  #allocation0 [shape = 'u32[]', space=smem, size = 0x4, offset = 0x4, fixed_abs, tag = 'smem constant byte address 0x4 - core index']
  #allocation1 [shape = 'u32[144,128]{1,0:T(1,128)}', space=vmem, size = 0x12000, scoped, tag = 'internal scratch']
  #allocation2 [shape = 'f32[64,512]{1,0:T(8,128)}', space=vmem, size = 0x20000, scoped, tag = 'scratch operand']
  #allocation3 [shape = 'f32[64,128]{1,0:T(8,128)}', space=vmem, size = 0x8000, scoped, tag = 'scratch operand']
  %s0 = inlined_call_operand.vmem [shape: f32[64,16], index: 0, kind: input, shape index: {}]
  %s1 = inlined_call_operand.vmem [shape: f32[16,512], index: 1, kind: input, shape index: {}]
  %s2 = inlined_call_operand.hbm [shape: f32[128,512], index: 2, kind: input, shape index: {}]
  %s3 = inlined_call_operand.vmem [shape: f32[1,512], index: 3, kind: input, shape index: {}]
  %s4 = inlined_call_operand.hbm [shape: f32[128,512], index: 4, kind: input, shape index: {}]
  %s5 = inlined_call_operand.hbm [shape: f32[128,512], index: 5, kind: input, shape index: {}]
  %s6 = inlined_call_operand.vmem [shape: f32[1,512], index: 6, kind: input, shape index: {}]
  %s7 = inlined_call_operand.hbm [shape: f32[128,128], index: 7, kind: input, shape index: {}]
  %s8 = inlined_call_operand.vmem [shape: f32[1,128], index: 8, kind: input, shape index: {}]
  %s9 = inlined_call_operand.hbm [shape: f32[64,128], index: 9, kind: output, shape index: {}]
  %s10 = sld [smem:[#allocation0]]
  $region62: #{tpu_custom_call.1} parent=0
    _
  %s12 = ssub.s32 1, %s10
  %s13 = scalar_select 0, %s12, %s10
  $region1: #{tpu_custom_call.1} parent=0
    #allocation4 [shape = 'u8[262144]{0}', space=vmem, size = 0x40000, scoped, tag = 'input window, operand 2, single buffered']
    #allocation5 [shape = 's32[1]{0}', space=sflag, size = 0x4, scoped, tag = 'scoped memory for tpu_custom_call.1']
    #allocation6 [shape = 's32[1]{0}', space=sflag, size = 0x4, scoped, tag = 'scoped memory for tpu_custom_call.1']
    #allocation7 [shape = 'u8[262144]{0}', space=vmem, size = 0x40000, scoped, tag = 'input window, operand 4, single buffered']
    #allocation8 [shape = 's32[1]{0}', space=sflag, size = 0x4, scoped, tag = 'scoped memory for tpu_custom_call.1']
    #allocation9 [shape = 'u8[262144]{0}', space=vmem, size = 0x40000, scoped, tag = 'input window, operand 5, single buffered']
    #allocation10 [shape = 'u8[65536]{0}', space=vmem, size = 0x10000, scoped, tag = 'input window, operand 7, single buffered']
    #allocation11 [shape = 's32[1]{0}', space=sflag, size = 0x4, scoped, tag = 'scoped memory for tpu_custom_call.1']
    #allocation12 [shape = 'u8[32768]{0}', space=vmem, size = 0x8000, scoped, tag = 'output window, operand 0, single buffered']
    %14 = vsyncpa [#allocation5], 0
    %15 = vsyncpa [#allocation8], 0
    %16 = vsyncpa [#allocation11], 0
    %17 = vsyncpa [#allocation6], 0
    // Predicated region
    $region2: #{tpu_custom_call.1} parent=1 // pred_check
      _
    $region3: #{tpu_custom_call.1} parent=1 // pred_check_branch
      %19 = sbr.rel (0) target = $region5
    $region4: #{tpu_custom_call.1} parent=1 // pred_region
      _
    $region5: #{tpu_custom_call.1} parent=1 // pred_fallthru
      _
    // Predicated region
    $region6: #{tpu_custom_call.1} parent=1 // pred_check
      _
    $region7: #{tpu_custom_call.1} parent=1 // pred_check_branch
      %21 = sbr.rel (0) target = $region9
    $region8: #{tpu_custom_call.1} parent=1 // pred_region
      _
    $region9: #{tpu_custom_call.1} parent=1 // pred_fallthru
      _
    // Predicated region
    $region10: #{tpu_custom_call.1} parent=1 // pred_check
      _
    $region11: #{tpu_custom_call.1} parent=1 // pred_check_branch
      %23 = sbr.rel (0) target = $region13
    $region12: #{tpu_custom_call.1} parent=1 // pred_region
      %s25 = ssub.s32 8192, 8192
      %26 = vsyncadd [#allocation5], %s25
      %s27 = sshll.u32 [#allocation4], 4
      %s28 = int_to_ptr.vmem [resolvable:$true] %s27
      %33 = dma.hbm_to_vmem [thread:$0]  %s2, 8192, %s28, [#allocation5], 512, 512, 32
    $region13: #{tpu_custom_call.1} parent=1 // pred_fallthru
      _
    // Predicated region
    $region14: #{tpu_custom_call.1} parent=1 // pred_check
      _
    $region15: #{tpu_custom_call.1} parent=1 // pred_check_branch
      %35 = sbr.rel (0) target = $region17
    $region16: #{tpu_custom_call.1} parent=1 // pred_region
      _
    $region17: #{tpu_custom_call.1} parent=1 // pred_fallthru
      _
    // Predicated region
    $region18: #{tpu_custom_call.1} parent=1 // pred_check
      _
    $region19: #{tpu_custom_call.1} parent=1 // pred_check_branch
      %37 = sbr.rel (0) target = $region21
    $region20: #{tpu_custom_call.1} parent=1 // pred_region
      %s39 = ssub.s32 8192, 8192
      %40 = vsyncadd [#allocation8], %s39
      %s41 = sshll.u32 [#allocation7], 4
      %s42 = int_to_ptr.vmem [resolvable:$true] %s41
      %47 = dma.hbm_to_vmem [thread:$0]  %s4, 8192, %s42, [#allocation8], 512, 512, 32
    $region21: #{tpu_custom_call.1} parent=1 // pred_fallthru
      _
    // Predicated region
    $region22: #{tpu_custom_call.1} parent=1 // pred_check
      _
    $region23: #{tpu_custom_call.1} parent=1 // pred_check_branch
      %49 = sbr.rel (0) target = $region25
    $region24: #{tpu_custom_call.1} parent=1 // pred_region
      %s51 = ssub.s32 8192, 8192
      %52 = vsyncadd [#allocation8], %s51
      %s53 = sshll.u32 [#allocation9], 4
      %s54 = int_to_ptr.vmem [resolvable:$true] %s53
      %59 = dma.hbm_to_vmem [thread:$0]  %s5, 8192, %s54, [#allocation8], 512, 512, 32
    $region25: #{tpu_custom_call.1} parent=1 // pred_fallthru
      _
    // Predicated region
    $region26: #{tpu_custom_call.1} parent=1 // pred_check
      _
    $region27: #{tpu_custom_call.1} parent=1 // pred_check_branch
      %61 = sbr.rel (0) target = $region29
    $region28: #{tpu_custom_call.1} parent=1 // pred_region
      _
    $region29: #{tpu_custom_call.1} parent=1 // pred_fallthru
      _
    // Predicated region
    $region30: #{tpu_custom_call.1} parent=1 // pred_check
      _
    $region31: #{tpu_custom_call.1} parent=1 // pred_check_branch
      %63 = sbr.rel (0) target = $region33
    $region32: #{tpu_custom_call.1} parent=1 // pred_region
      %s65 = ssub.s32 2048, 2048
      %66 = vsyncadd [#allocation11], %s65
      %s67 = sshll.u32 [#allocation10], 4
      %s68 = int_to_ptr.vmem [resolvable:$true] %s67
      %73 = dma.hbm_to_vmem [thread:$0]  %s7, 2048, %s68, [#allocation11], 128, 128, 8
    $region33: #{tpu_custom_call.1} parent=1 // pred_fallthru
      _
    // Predicated region
    $region34: #{tpu_custom_call.1} parent=1 // pred_check
      _
    $region35: #{tpu_custom_call.1} parent=1 // pred_check_branch
      %75 = sbr.rel (0) target = $region37
    $region36: #{tpu_custom_call.1} parent=1 // pred_region
      _
    $region37: #{tpu_custom_call.1} parent=1 // pred_fallthru
      _
    // Predicated region
    $region38: #{tpu_custom_call.1} parent=1 // pred_check
      _
    $region39: #{tpu_custom_call.1} parent=1 // pred_check_branch
      %77 = sbr.rel (0) target = $region41
    $region40: #{tpu_custom_call.1} parent=1 // pred_region
      %78 = dma.done [#allocation5], 8192
    $region41: #{tpu_custom_call.1} parent=1 // pred_fallthru
      _
    // Predicated region
    $region42: #{tpu_custom_call.1} parent=1 // pred_check
      _
    $region43: #{tpu_custom_call.1} parent=1 // pred_check_branch
      %80 = sbr.rel (0) target = $region45
    $region44: #{tpu_custom_call.1} parent=1 // pred_region
      %81 = dma.done [#allocation8], 8192
    $region45: #{tpu_custom_call.1} parent=1 // pred_fallthru
      _
    // Predicated region
    $region46: #{tpu_custom_call.1} parent=1 // pred_check
      _
    $region47: #{tpu_custom_call.1} parent=1 // pred_check_branch
      %83 = sbr.rel (0) target = $region49
    $region48: #{tpu_custom_call.1} parent=1 // pred_region
      %84 = dma.done [#allocation8], 8192
    $region49: #{tpu_custom_call.1} parent=1 // pred_fallthru
      _
    // Predicated region
    $region50: #{tpu_custom_call.1} parent=1 // pred_check
      _
    $region51: #{tpu_custom_call.1} parent=1 // pred_check_branch
      %86 = sbr.rel (0) target = $region53
    $region52: #{tpu_custom_call.1} parent=1 // pred_region
      %87 = dma.done [#allocation11], 2048
    $region53: #{tpu_custom_call.1} parent=1 // pred_fallthru
      _
    %v88 = vld [vmem:[%s0] sm:$0xff]
    %v89 = vld [vmem:[%s0 + $0x8] sm:$0xff]
    %v90 = vld [vmem:[%s0 + $0x10] sm:$0xff]
    %v91 = vld [vmem:[%s0 + $0x18] sm:$0xff]
    %v92 = vld [vmem:[%s0 + $0x20] sm:$0xff]
    %v93 = vld [vmem:[%s0 + $0x28] sm:$0xff]
    %v94 = vld [vmem:[%s0 + $0x30] sm:$0xff]
    %v95 = vld [vmem:[%s0 + $0x38] sm:$0xff]
    %v96 = vld [vmem:[%s1] sm:$0xff]
    %v97 = vld [vmem:[%s1 + $0x8] sm:$0xff]
    %v98 = vld [vmem:[%s1 + $0x10] sm:$0xff]
    %v99 = vld [vmem:[%s1 + $0x18] sm:$0xff]
    %v100 = vld [vmem:[%s1 + $0x20] sm:$0xff]
    %v101 = vld [vmem:[%s1 + $0x28] sm:$0xff]
    %v102 = vld [vmem:[%s1 + $0x30] sm:$0xff]
    %v103 = vld [vmem:[%s1 + $0x38] sm:$0xff]
    %v104 = vld [vmem:[%s3] sm:$0xf]
    %v106 = vlaneseq
    %v107 = vshrl.u32 %v106, 7
    %v108 = vsub.s32 0, %v107
    %v109 = vrot.slane %v104, %v108
    %v110 = vlaneseq
    %v111 = vshrl.u32 %v110, 7
    %v112 = vsub.s32 1, %v111
    %v113 = vrot.slane %v104, %v112
    %v114 = vlaneseq
    %v115 = vshrl.u32 %v114, 7
    %v116 = vsub.s32 2, %v115
    %v117 = vrot.slane %v104, %v116
    %v118 = vlaneseq
    %v119 = vshrl.u32 %v118, 7
    %v120 = vsub.s32 3, %v119
    %v121 = vrot.slane %v104, %v120
    %vm126 = vcmask 130048
    %v128 = vsel %vm126, %v88, 0
    %v131 = vsel %vm126, %v89, 0
    %v134 = vsel %vm126, %v90, 0
    %v137 = vsel %vm126, %v91, 0
    %v140 = vsel %vm126, %v92, 0
    %v143 = vsel %vm126, %v93, 0
    %v146 = vsel %vm126, %v94, 0
    %v149 = vsel %vm126, %v95, 0
    %151 = vmatprep.subr.mxu0 0.0
    %152 = vmatpush1.msra.mxu0 0.0
    %153 = vmatprep.subr.mxu0 0.0
    %154 = vmatpush1.msra.mxu0 0.0
    %155 = vmatprep.subr.mxu0 0.0
    %156 = vmatpush1.msra.mxu0 0.0
    %157 = vmatprep.subr.mxu0 0.0
    %158 = vmatpush1.msra.mxu0 0.0
    %159 = vmatprep.subr.mxu0 0.0
    %160 = vmatpush1.msra.mxu0 0.0
    %161 = vmatprep.subr.mxu0 0.0
    %162 = vmatpush1.msra.mxu0 0.0
    %163 = vmatprep.subr.mxu0 0.0
    %164 = vmatpush1.msra.mxu0 0.0
    %165 = vmatprep.subr.mxu0 0.0
    %166 = vmatpush1.msra.mxu0 0.0
    %167 = vmatprep.subr.mxu0 0.0
    %168 = vmatpush1.msra.mxu0 0.0
    %169 = vmatprep.subr.mxu0 0.0
    %170 = vmatpush1.msra.mxu0 0.0
    %171 = vmatprep.subr.mxu0 0.0
    %172 = vmatpush1.msra.mxu0 0.0
    %173 = vmatprep.subr.mxu0 0.0
    %174 = vmatpush1.msra.mxu0 0.0
    %175 = vmatprep.subr.mxu0 0.0
    %176 = vmatpush1.msra.mxu0 0.0
    %177 = vmatprep.subr.mxu0 0.0
    %178 = vmatpush1.msra.mxu0 0.0
    %179 = vmatprep.subr.mxu0 %v101
    %180 = vmatpush1.msra.mxu0 %v100
    %181 = vmatprep.subr.mxu0 %v97
    %182 = vmatpush1.msra.mxu0 %v96
    %183 = vmatprep.subr.mxu0 0.0
    %184 = vmatpush2.msra.mxu0 0.0
    %185 = vmatprep.subr.mxu0 0.0
    %186 = vmatpush2.msra.mxu0 0.0
    %187 = vmatprep.subr.mxu0 0.0
    %188 = vmatpush2.msra.mxu0 0.0
    %189 = vmatprep.subr.mxu0 0.0
    %190 = vmatpush2.msra.mxu0 0.0
    %191 = vmatprep.subr.mxu0 0.0
    %192 = vmatpush2.msra.mxu0 0.0
    %193 = vmatprep.subr.mxu0 0.0
    %194 = vmatpush2.msra.mxu0 0.0
    %195 = vmatprep.subr.mxu0 0.0
    %196 = vmatpush2.msra.mxu0 0.0
    %197 = vmatprep.subr.mxu0 0.0
    %198 = vmatpush2.msra.mxu0 0.0
    %199 = vmatprep.subr.mxu0 0.0
    %200 = vmatpush2.msra.mxu0 0.0
    %201 = vmatprep.subr.mxu0 0.0
    %202 = vmatpush2.msra.mxu0 0.0
    %203 = vmatprep.subr.mxu0 0.0
    %204 = vmatpush2.msra.mxu0 0.0
    %205 = vmatprep.subr.mxu0 0.0
    %206 = vmatpush2.msra.mxu0 0.0
    %207 = vmatprep.subr.mxu0 0.0
    %208 = vmatpush2.msra.mxu0 0.0
    %209 = vmatprep.subr.mxu0 0.0
    %210 = vmatpush2.msra.mxu0 0.0
    %211 = vmatprep.subr.mxu0 0.0
    %212 = vmatpush2.msra.mxu0 0.0
    %213 = vmatprep.subr.mxu0 0.0
    %214 = vmatpush2.msra.mxu0 0.0
    %215 = vmatprep.mubr.f32.mxu0 0.0
    %216 = vmatmul.mubr.f32.gmra.mxu0 %v128
    %v217 = vpop.f32.mrf.mxu0
    %v218 = vadd.f32 %v109, %v217
    %v219 = vpop.f32.mrf.mxu0
    %v220 = vadd.f32 %v113, %v219
    %221 = vmatprep.mubr.f32.mxu0 0.0
    %222 = vmatmul.mubr.f32.gmra.mxu0 %v131
    %v223 = vpop.f32.mrf.mxu0
    %v224 = vadd.f32 %v109, %v223
    %v225 = vpop.f32.mrf.mxu0
    %v226 = vadd.f32 %v113, %v225
    %227 = vmatprep.mubr.f32.mxu0 0.0
    %228 = vmatmul.mubr.f32.gmra.mxu0 %v134
    %v229 = vpop.f32.mrf.mxu0
    %v230 = vadd.f32 %v109, %v229
    %v231 = vpop.f32.mrf.mxu0
    %v232 = vadd.f32 %v113, %v231
    %233 = vmatprep.mubr.f32.mxu0 0.0
    %234 = vmatmul.mubr.f32.gmra.mxu0 %v137
    %v235 = vpop.f32.mrf.mxu0
    %v236 = vadd.f32 %v109, %v235
    %v237 = vpop.f32.mrf.mxu0
    %v238 = vadd.f32 %v113, %v237
    %239 = vmatprep.mubr.f32.mxu0 0.0
    %240 = vmatmul.mubr.f32.gmra.mxu0 %v140
    %v241 = vpop.f32.mrf.mxu0
    %v242 = vadd.f32 %v109, %v241
    %v243 = vpop.f32.mrf.mxu0
    %v244 = vadd.f32 %v113, %v243
    %245 = vmatprep.mubr.f32.mxu0 0.0
    %246 = vmatmul.mubr.f32.gmra.mxu0 %v143
    %v247 = vpop.f32.mrf.mxu0
    %v248 = vadd.f32 %v109, %v247
    %v249 = vpop.f32.mrf.mxu0
    %v250 = vadd.f32 %v113, %v249
    %251 = vmatprep.mubr.f32.mxu0 0.0
    %252 = vmatmul.mubr.f32.gmra.mxu0 %v146
    %v253 = vpop.f32.mrf.mxu0
    %v254 = vadd.f32 %v109, %v253
    %v255 = vpop.f32.mrf.mxu0
    %v256 = vadd.f32 %v113, %v255
    %257 = vmatprep.mubr.f32.mxu0 0.0
    %258 = vmatmul.mubr.f32.gmra.mxu0 %v149
    %v259 = vpop.f32.mrf.mxu0
    %v260 = vadd.f32 %v109, %v259
    %v261 = vpop.f32.mrf.mxu0
    %v262 = vadd.f32 %v113, %v261
    %263 = vdwg.mxu0
    %264 = vmatprep.subr.mxu0 0.0
    %265 = vmatpush1.msra.mxu0 0.0
    %266 = vmatprep.subr.mxu0 0.0
    %267 = vmatpush1.msra.mxu0 0.0
    %268 = vmatprep.subr.mxu0 0.0
    %269 = vmatpush1.msra.mxu0 0.0
    %270 = vmatprep.subr.mxu0 0.0
    %271 = vmatpush1.msra.mxu0 0.0
    %272 = vmatprep.subr.mxu0 0.0
    %273 = vmatpush1.msra.mxu0 0.0
    %274 = vmatprep.subr.mxu0 0.0
    %275 = vmatpush1.msra.mxu0 0.0
    %276 = vmatprep.subr.mxu0 0.0
    %277 = vmatpush1.msra.mxu0 0.0
    %278 = vmatprep.subr.mxu0 0.0
    %279 = vmatpush1.msra.mxu0 0.0
    %280 = vmatprep.subr.mxu0 0.0
    %281 = vmatpush1.msra.mxu0 0.0
    %282 = vmatprep.subr.mxu0 0.0
    %283 = vmatpush1.msra.mxu0 0.0
    %284 = vmatprep.subr.mxu0 0.0
    %285 = vmatpush1.msra.mxu0 0.0
    %286 = vmatprep.subr.mxu0 0.0
    %287 = vmatpush1.msra.mxu0 0.0
    %288 = vmatprep.subr.mxu0 0.0
    %289 = vmatpush1.msra.mxu0 0.0
    %290 = vmatprep.subr.mxu0 0.0
    %291 = vmatpush1.msra.mxu0 0.0
    %292 = vmatprep.subr.mxu0 %v103
    %293 = vmatpush1.msra.mxu0 %v102
    %294 = vmatprep.subr.mxu0 %v99
    %295 = vmatpush1.msra.mxu0 %v98
    %296 = vmatprep.subr.mxu0 0.0
    %297 = vmatpush2.msra.mxu0 0.0
    %298 = vmatprep.subr.mxu0 0.0
    %299 = vmatpush2.msra.mxu0 0.0
    %300 = vmatprep.subr.mxu0 0.0
    %301 = vmatpush2.msra.mxu0 0.0
    %302 = vmatprep.subr.mxu0 0.0
    %303 = vmatpush2.msra.mxu0 0.0
    %304 = vmatprep.subr.mxu0 0.0
    %305 = vmatpush2.msra.mxu0 0.0
    %306 = vmatprep.subr.mxu0 0.0
    %307 = vmatpush2.msra.mxu0 0.0
    %308 = vmatprep.subr.mxu0 0.0
    %309 = vmatpush2.msra.mxu0 0.0
    %310 = vmatprep.subr.mxu0 0.0
    %311 = vmatpush2.msra.mxu0 0.0
    %312 = vmatprep.subr.mxu0 0.0
    %313 = vmatpush2.msra.mxu0 0.0
    %314 = vmatprep.subr.mxu0 0.0
    %315 = vmatpush2.msra.mxu0 0.0
    %316 = vmatprep.subr.mxu0 0.0
    %317 = vmatpush2.msra.mxu0 0.0
    %318 = vmatprep.subr.mxu0 0.0
    %319 = vmatpush2.msra.mxu0 0.0
    %320 = vmatprep.subr.mxu0 0.0
    %321 = vmatpush2.msra.mxu0 0.0
    %322 = vmatprep.subr.mxu0 0.0
    %323 = vmatpush2.msra.mxu0 0.0
    %324 = vmatprep.subr.mxu0 0.0
    %325 = vmatpush2.msra.mxu0 0.0
    %326 = vmatprep.subr.mxu0 0.0
    %327 = vmatpush2.msra.mxu0 0.0
    %328 = vmatprep.mubr.f32.mxu0 0.0
    %329 = vmatmul.mubr.f32.gmra.mxu0 %v128
    %v330 = vpop.f32.mrf.mxu0
    %v331 = vadd.f32 %v117, %v330
    %v332 = vpop.f32.mrf.mxu0
    %v333 = vadd.f32 %v121, %v332
    %334 = vmatprep.mubr.f32.mxu0 0.0
    %335 = vmatmul.mubr.f32.gmra.mxu0 %v131
    %v336 = vpop.f32.mrf.mxu0
    %v337 = vadd.f32 %v117, %v336
    %v338 = vpop.f32.mrf.mxu0
    %v339 = vadd.f32 %v121, %v338
    %340 = vmatprep.mubr.f32.mxu0 0.0
    %341 = vmatmul.mubr.f32.gmra.mxu0 %v134
    %v342 = vpop.f32.mrf.mxu0
    %v343 = vadd.f32 %v117, %v342
    %v344 = vpop.f32.mrf.mxu0
    %v345 = vadd.f32 %v121, %v344
    %346 = vmatprep.mubr.f32.mxu0 0.0
    %347 = vmatmul.mubr.f32.gmra.mxu0 %v137
    %v348 = vpop.f32.mrf.mxu0
    %v349 = vadd.f32 %v117, %v348
    %v350 = vpop.f32.mrf.mxu0
    %v351 = vadd.f32 %v121, %v350
    %352 = vmatprep.mubr.f32.mxu0 0.0
    %353 = vmatmul.mubr.f32.gmra.mxu0 %v140
    %v354 = vpop.f32.mrf.mxu0
    %v355 = vadd.f32 %v117, %v354
    %v356 = vpop.f32.mrf.mxu0
    %v357 = vadd.f32 %v121, %v356
    %358 = vmatprep.mubr.f32.mxu0 0.0
    %359 = vmatmul.mubr.f32.gmra.mxu0 %v143
    %v360 = vpop.f32.mrf.mxu0
    %v361 = vadd.f32 %v117, %v360
    %v362 = vpop.f32.mrf.mxu0
    %v363 = vadd.f32 %v121, %v362
    %364 = vmatprep.mubr.f32.mxu0 0.0
    %365 = vmatmul.mubr.f32.gmra.mxu0 %v146
    %v366 = vpop.f32.mrf.mxu0
    %v367 = vadd.f32 %v117, %v366
    %v368 = vpop.f32.mrf.mxu0
    %v369 = vadd.f32 %v121, %v368
    %370 = vmatprep.mubr.f32.mxu0 0.0
    %371 = vmatmul.mubr.f32.gmra.mxu0 %v149
    %v372 = vpop.f32.mrf.mxu0
    %v373 = vadd.f32 %v117, %v372
    %v374 = vpop.f32.mrf.mxu0
    %v375 = vadd.f32 %v121, %v374
    %376 = vdwg.mxu0
    %377 = vst [vmem:[#allocation2] sm:$0xff] %v218
    %378 = vst [vmem:[#allocation2 + $0x8] sm:$0xff] %v220
    %379 = vst [vmem:[#allocation2 + $0x10] sm:$0xff] %v331
    %380 = vst [vmem:[#allocation2 + $0x18] sm:$0xff] %v333
    %381 = vst [vmem:[#allocation2 + $0x20] sm:$0xff] %v224
    %382 = vst [vmem:[#allocation2 + $0x28] sm:$0xff] %v226
    %383 = vst [vmem:[#allocation2 + $0x30] sm:$0xff] %v337
    %384 = vst [vmem:[#allocation2 + $0x38] sm:$0xff] %v339
    %385 = vst [vmem:[#allocation2 + $0x40] sm:$0xff] %v230
    %386 = vst [vmem:[#allocation2 + $0x48] sm:$0xff] %v232
    %387 = vst [vmem:[#allocation2 + $0x50] sm:$0xff] %v343
    %388 = vst [vmem:[#allocation2 + $0x58] sm:$0xff] %v345
    %389 = vst [vmem:[#allocation2 + $0x60] sm:$0xff] %v236
    %390 = vst [vmem:[#allocation2 + $0x68] sm:$0xff] %v238
    %391 = vst [vmem:[#allocation2 + $0x70] sm:$0xff] %v349
    %392 = vst [vmem:[#allocation2 + $0x78] sm:$0xff] %v351
    %393 = vst [vmem:[#allocation2 + $0x80] sm:$0xff] %v242
    %394 = vst [vmem:[#allocation2 + $0x88] sm:$0xff] %v244
    %395 = vst [vmem:[#allocation2 + $0x90] sm:$0xff] %v355
    %396 = vst [vmem:[#allocation2 + $0x98] sm:$0xff] %v357
    %397 = vst [vmem:[#allocation2 + $0xa0] sm:$0xff] %v248
    %398 = vst [vmem:[#allocation2 + $0xa8] sm:$0xff] %v250
    %399 = vst [vmem:[#allocation2 + $0xb0] sm:$0xff] %v361
    %400 = vst [vmem:[#allocation2 + $0xb8] sm:$0xff] %v363
    %401 = vst [vmem:[#allocation2 + $0xc0] sm:$0xff] %v254
    %402 = vst [vmem:[#allocation2 + $0xc8] sm:$0xff] %v256
    %403 = vst [vmem:[#allocation2 + $0xd0] sm:$0xff] %v367
    %404 = vst [vmem:[#allocation2 + $0xd8] sm:$0xff] %v369
    %405 = vst [vmem:[#allocation2 + $0xe0] sm:$0xff] %v260
    %406 = vst [vmem:[#allocation2 + $0xe8] sm:$0xff] %v262
    %407 = vst [vmem:[#allocation2 + $0xf0] sm:$0xff] %v373
    %408 = vst [vmem:[#allocation2 + $0xf8] sm:$0xff] %v375
    %v409 = vld [vmem:[#allocation2] sm:$0xff]
    %v410 = vld [vmem:[#allocation2 + $0x10] sm:$0xff]
    %v411 = vld [vmem:[#allocation2 + $0x18] sm:$0xff]
    %v412 = vxor.u32 %v409, 2147483648
    %v413 = vmul.f32 %v412, 1.442695
    %v414 = vpow.pop %v413
    %v415 = vadd.f32 %v414, 1.0
    %v416 = vrcp.pop %v415
    %v417 = vmul.f32 1.0, %v416
    %v418 = vtanh.pop %v410
    %v419 = vxor.u32 %v411, 2147483648
    %v420 = vmul.f32 %v419, 1.442695
    %v421 = vpow.pop %v420
    %v422 = vadd.f32 %v421, 1.0
    %v423 = vrcp.pop %v422
    %v424 = vmul.f32 1.0, %v423
    %v425 = vmul.f32 %v417, %v418
    %v426 = vtanh.pop %v425
    %v427 = vmul.f32 %v424, %v426
    %428 = vst [vmem:[#allocation3] sm:$0xff] %v427
    %v429 = vld [vmem:[#allocation2 + $0x20] sm:$0xff]
    %v430 = vld [vmem:[#allocation2 + $0x28] sm:$0xff]
    %v431 = vld [vmem:[#allocation2 + $0x30] sm:$0xff]
    %v432 = vld [vmem:[#allocation2 + $0x38] sm:$0xff]
    %v433 = vld [vmem:[#allocation4] sm:$0xff]
    %v434 = vld [vmem:[#allocation4 + $0x8] sm:$0xff]
    %v435 = vld [vmem:[#allocation4 + $0x10] sm:$0xff]
    %v436 = vld [vmem:[#allocation4 + $0x18] sm:$0xff]
    %v437 = vld [vmem:[#allocation4 + $0x20] sm:$0xff]
    %v438 = vld [vmem:[#allocation4 + $0x28] sm:$0xff]
    %v439 = vld [vmem:[#allocation4 + $0x30] sm:$0xff]
    %v440 = vld [vmem:[#allocation4 + $0x38] sm:$0xff]
    %v441 = vld [vmem:[#allocation4 + $0x40] sm:$0xff]
    %v442 = vld [vmem:[#allocation4 + $0x48] sm:$0xff]
    %v443 = vld [vmem:[#allocation4 + $0x50] sm:$0xff]
    %v444 = vld [vmem:[#allocation4 + $0x58] sm:$0xff]
    %v445 = vld [vmem:[#allocation4 + $0x60] sm:$0xff]
    %v446 = vld [vmem:[#allocation4 + $0x68] sm:$0xff]
    %v447 = vld [vmem:[#allocation4 + $0x70] sm:$0xff]
    %v448 = vld [vmem:[#allocation4 + $0x78] sm:$0xff]
    %v449 = vld [vmem:[#allocation4 + $0x80] sm:$0xff]
    %v450 = vld [vmem:[#allocation4 + $0x88] sm:$0xff]
    %v451 = vld [vmem:[#allocation4 + $0x90] sm:$0xff]
    %v452 = vld [vmem:[#allocation4 + $0x98] sm:$0xff]
    %v453 = vld [vmem:[#allocation4 + $0xa0] sm:$0xff]
    %v454 = vld [vmem:[#allocation4 + $0xa8] sm:$0xff]
    %v455 = vld [vmem:[#allocation4 + $0xb0] sm:$0xff]
    %v456 = vld [vmem:[#allocation4 + $0xb8] sm:$0xff]
    %v457 = vld [vmem:[#allocation4 + $0xc0] sm:$0xff]
    %v458 = vld [vmem:[#allocation4 + $0xc8] sm:$0xff]
    %v459 = vld [vmem:[#allocation4 + $0xd0] sm:$0xff]
    %v460 = vld [vmem:[#allocation4 + $0xd8] sm:$0xff]
    %v461 = vld [vmem:[#allocation4 + $0xe0] sm:$0xff]
    %v462 = vld [vmem:[#allocation4 + $0xe8] sm:$0xff]
    %v463 = vld [vmem:[#allocation4 + $0xf0] sm:$0xff]
    %v464 = vld [vmem:[#allocation4 + $0xf8] sm:$0xff]
    %v465 = vld [vmem:[#allocation4 + $0x100] sm:$0xff]
    %v466 = vld [vmem:[#allocation4 + $0x108] sm:$0xff]
    %v467 = vld [vmem:[#allocation4 + $0x110] sm:$0xff]
    %v468 = vld [vmem:[#allocation4 + $0x118] sm:$0xff]
    %v469 = vld [vmem:[#allocation4 + $0x120] sm:$0xff]
    %v470 = vld [vmem:[#allocation4 + $0x128] sm:$0xff]
    %v471 = vld [vmem:[#allocation4 + $0x130] sm:$0xff]
    %v472 = vld [vmem:[#allocation4 + $0x138] sm:$0xff]
    %v473 = vld [vmem:[#allocation4 + $0x140] sm:$0xff]
    %v474 = vld [vmem:[#allocation4 + $0x148] sm:$0xff]
    %v475 = vld [vmem:[#allocation4 + $0x150] sm:$0xff]
    %v476 = vld [vmem:[#allocation4 + $0x158] sm:$0xff]
    %v477 = vld [vmem:[#allocation4 + $0x160] sm:$0xff]
    %v478 = vld [vmem:[#allocation4 + $0x168] sm:$0xff]
    %v479 = vld [vmem:[#allocation4 + $0x170] sm:$0xff]
    %v480 = vld [vmem:[#allocation4 + $0x178] sm:$0xff]
    %v481 = vld [vmem:[#allocation4 + $0x180] sm:$0xff]
    %v482 = vld [vmem:[#allocation4 + $0x188] sm:$0xff]
    %v483 = vld [vmem:[#allocation4 + $0x190] sm:$0xff]
    %v484 = vld [vmem:[#allocation4 + $0x198] sm:$0xff]
    %v485 = vld [vmem:[#allocation4 + $0x1a0] sm:$0xff]
    %v486 = vld [vmem:[#allocation4 + $0x1a8] sm:$0xff]
    %v487 = vld [vmem:[#allocation4 + $0x1b0] sm:$0xff]
    %v488 = vld [vmem:[#allocation4 + $0x1b8] sm:$0xff]
    %v489 = vld [vmem:[#allocation4 + $0x1c0] sm:$0xff]
    %v490 = vld [vmem:[#allocation4 + $0x1c8] sm:$0xff]
    %v491 = vld [vmem:[#allocation4 + $0x1d0] sm:$0xff]
    %v492 = vld [vmem:[#allocation4 + $0x1d8] sm:$0xff]
    %v493 = vld [vmem:[#allocation4 + $0x1e0] sm:$0xff]
    %v494 = vld [vmem:[#allocation4 + $0x1e8] sm:$0xff]
    %v495 = vld [vmem:[#allocation4 + $0x1f0] sm:$0xff]
    %v496 = vld [vmem:[#allocation4 + $0x1f8] sm:$0xff]
    %497 = vmatprep.subr.mxu0 %v494
    %498 = vmatpush1.msra.mxu0 %v493
    %499 = vmatprep.subr.mxu0 %v490
    %500 = vmatpush1.msra.mxu0 %v489
    %501 = vmatprep.subr.mxu0 %v486
    %502 = vmatpush1.msra.mxu0 %v485
    %503 = vmatprep.subr.mxu0 %v482
    %504 = vmatpush1.msra.mxu0 %v481
    %505 = vmatprep.subr.mxu0 %v478
    %506 = vmatpush1.msra.mxu0 %v477
    %507 = vmatprep.subr.mxu0 %v474
    %508 = vmatpush1.msra.mxu0 %v473
    %509 = vmatprep.subr.mxu0 %v470
    %510 = vmatpush1.msra.mxu0 %v469
    %511 = vmatprep.subr.mxu0 %v466
    %512 = vmatpush1.msra.mxu0 %v465
    %513 = vmatprep.subr.mxu0 %v462
    %514 = vmatpush1.msra.mxu0 %v461
    %515 = vmatprep.subr.mxu0 %v458
    %516 = vmatpush1.msra.mxu0 %v457
    %517 = vmatprep.subr.mxu0 %v454
    %518 = vmatpush1.msra.mxu0 %v453
    %519 = vmatprep.subr.mxu0 %v450
    %520 = vmatpush1.msra.mxu0 %v449
    %521 = vmatprep.subr.mxu0 %v446
    %522 = vmatpush1.msra.mxu0 %v445
    %523 = vmatprep.subr.mxu0 %v442
    %524 = vmatpush1.msra.mxu0 %v441
    %525 = vmatprep.subr.mxu0 %v438
    %526 = vmatpush1.msra.mxu0 %v437
    %527 = vmatprep.subr.mxu0 %v434
    %528 = vmatpush1.msra.mxu0 %v433
    %529 = vmatprep.subr.mxu0 0.0
    %530 = vmatpush2.msra.mxu0 0.0
    %531 = vmatprep.subr.mxu0 0.0
    %532 = vmatpush2.msra.mxu0 0.0
    %533 = vmatprep.subr.mxu0 0.0
    %534 = vmatpush2.msra.mxu0 0.0
    %535 = vmatprep.subr.mxu0 0.0
    %536 = vmatpush2.msra.mxu0 0.0
    %537 = vmatprep.subr.mxu0 0.0
    %538 = vmatpush2.msra.mxu0 0.0
    %539 = vmatprep.subr.mxu0 0.0
    %540 = vmatpush2.msra.mxu0 0.0
    %541 = vmatprep.subr.mxu0 0.0
    %542 = vmatpush2.msra.mxu0 0.0
    %543 = vmatprep.subr.mxu0 0.0
    %544 = vmatpush2.msra.mxu0 0.0
    %545 = vmatprep.subr.mxu0 0.0
    %546 = vmatpush2.msra.mxu0 0.0
    %547 = vmatprep.subr.mxu0 0.0
    %548 = vmatpush2.msra.mxu0 0.0
    %549 = vmatprep.subr.mxu0 0.0
    %550 = vmatpush2.msra.mxu0 0.0
    %551 = vmatprep.subr.mxu0 0.0
    %552 = vmatpush2.msra.mxu0 0.0
    %553 = vmatprep.subr.mxu0 0.0
    %554 = vmatpush2.msra.mxu0 0.0
    %555 = vmatprep.subr.mxu0 0.0
    %556 = vmatpush2.msra.mxu0 0.0
    %557 = vmatprep.subr.mxu0 0.0
    %558 = vmatpush2.msra.mxu0 0.0
    %559 = vmatprep.subr.mxu0 0.0
    %560 = vmatpush2.msra.mxu0 0.0
    %561 = vmatprep.mubr.f32.mxu0 0.0
    %562 = vmatmul.mubr.f32.gmra.mxu0 %v427
    %v563 = vpop.f32.mrf.mxu0
    %v564 = vadd.f32 0.0, %v563
    %v565 = vpop.f32.mrf.mxu0
    %v566 = vadd.f32 0.0, %v565
    %567 = vdwg.mxu0
    %568 = vmatprep.subr.mxu0 %v496
    %569 = vmatpush1.msra.mxu0 %v495
    %570 = vmatprep.subr.mxu0 %v492
    %571 = vmatpush1.msra.mxu0 %v491
    %572 = vmatprep.subr.mxu0 %v488
    %573 = vmatpush1.msra.mxu0 %v487
    %574 = vmatprep.subr.mxu0 %v484
    %575 = vmatpush1.msra.mxu0 %v483
    %576 = vmatprep.subr.mxu0 %v480
    %577 = vmatpush1.msra.mxu0 %v479
    %578 = vmatprep.subr.mxu0 %v476
    %579 = vmatpush1.msra.mxu0 %v475
    %580 = vmatprep.subr.mxu0 %v472
    %581 = vmatpush1.msra.mxu0 %v471
    %582 = vmatprep.subr.mxu0 %v468
    %583 = vmatpush1.msra.mxu0 %v467
    %584 = vmatprep.subr.mxu0 %v464
    %585 = vmatpush1.msra.mxu0 %v463
    %586 = vmatprep.subr.mxu0 %v460
    %587 = vmatpush1.msra.mxu0 %v459
    %588 = vmatprep.subr.mxu0 %v456
    %589 = vmatpush1.msra.mxu0 %v455
    %590 = vmatprep.subr.mxu0 %v452
    %591 = vmatpush1.msra.mxu0 %v451
    %592 = vmatprep.subr.mxu0 %v448
    %593 = vmatpush1.msra.mxu0 %v447
    %594 = vmatprep.subr.mxu0 %v444
    %595 = vmatpush1.msra.mxu0 %v443
    %596 = vmatprep.subr.mxu0 %v440
    %597 = vmatpush1.msra.mxu0 %v439
    %598 = vmatprep.subr.mxu0 %v436
    %599 = vmatpush1.msra.mxu0 %v435
    %600 = vmatprep.subr.mxu0 0.0
    %601 = vmatpush2.msra.mxu0 0.0
    %602 = vmatprep.subr.mxu0 0.0
    %603 = vmatpush2.msra.mxu0 0.0
    %604 = vmatprep.subr.mxu0 0.0
    %605 = vmatpush2.msra.mxu0 0.0
    %606 = vmatprep.subr.mxu0 0.0
    %607 = vmatpush2.msra.mxu0 0.0
    %608 = vmatprep.subr.mxu0 0.0
    %609 = vmatpush2.msra.mxu0 0.0
    %610 = vmatprep.subr.mxu0 0.0
    %611 = vmatpush2.msra.mxu0 0.0
    %612 = vmatprep.subr.mxu0 0.0
    %613 = vmatpush2.msra.mxu0 0.0
    %614 = vmatprep.subr.mxu0 0.0
    %615 = vmatpush2.msra.mxu0 0.0
    %616 = vmatprep.subr.mxu0 0.0
    %617 = vmatpush2.msra.mxu0 0.0
    %618 = vmatprep.subr.mxu0 0.0
    %619 = vmatpush2.msra.mxu0 0.0
    %620 = vmatprep.subr.mxu0 0.0
    %621 = vmatpush2.msra.mxu0 0.0
    %622 = vmatprep.subr.mxu0 0.0
    %623 = vmatpush2.msra.mxu0 0.0
    %624 = vmatprep.subr.mxu0 0.0
    %625 = vmatpush2.msra.mxu0 0.0
    %626 = vmatprep.subr.mxu0 0.0
    %627 = vmatpush2.msra.mxu0 0.0
    %628 = vmatprep.subr.mxu0 0.0
    %629 = vmatpush2.msra.mxu0 0.0
    %630 = vmatprep.subr.mxu0 0.0
    %631 = vmatpush2.msra.mxu0 0.0
    %632 = vmatprep.mubr.f32.mxu0 0.0
    %633 = vmatmul.mubr.f32.gmra.mxu0 %v427
    %v634 = vpop.f32.mrf.mxu0
    %v635 = vadd.f32 0.0, %v634
    %v636 = vpop.f32.mrf.mxu0
    %v637 = vadd.f32 0.0, %v636
    %638 = vdwg.mxu0
    %v639 = vadd.f32 %v429, %v564
    %v640 = vadd.f32 %v430, %v566
    %v641 = vadd.f32 %v431, %v635
    %v642 = vadd.f32 %v432, %v637
    %v643 = vxor.u32 %v639, 2147483648
    %v644 = vmul.f32 %v643, 1.442695
    %v645 = vpow.pop %v644
    %v646 = vadd.f32 %v645, 1.0
    %v647 = vrcp.pop %v646
    %v648 = vmul.f32 1.0, %v647
    %v649 = vtanh.pop %v641
    %v650 = vxor.u32 %v642, 2147483648
    %v651 = vmul.f32 %v650, 1.442695
    %v652 = vpow.pop %v651
    %v653 = vadd.f32 %v652, 1.0
    %v654 = vrcp.pop %v653
    %v655 = vmul.f32 1.0, %v654
    %v656 = vxor.u32 %v640, 2147483648
    %v657 = vmul.f32 %v656, 1.442695
    %v658 = vpow.pop %v657
    %v659 = vadd.f32 %v658, 1.0
    %v660 = vrcp.pop %v659
    %v661 = vmul.f32 1.0, %v660
    %v662 = vmul.f32 %v661, %v425
    %v663 = vmul.f32 %v648, %v649
    %v664 = vadd.f32 %v662, %v663
    %v665 = vtanh.pop %v664
    %v666 = vmul.f32 %v655, %v665
    %667 = vst [vmem:[#allocation3 + $0x8] sm:$0xff] %v666
    %v668 = vld [vmem:[#allocation2 + $0x40] sm:$0xff]
    %v669 = vld [vmem:[#allocation2 + $0x48] sm:$0xff]
    %v670 = vld [vmem:[#allocation2 + $0x50] sm:$0xff]
    %v671 = vld [vmem:[#allocation2 + $0x58] sm:$0xff]
    %v672 = vld [vmem:[#allocation4] sm:$0xff]
    %v673 = vld [vmem:[#allocation4 + $0x8] sm:$0xff]
    %v674 = vld [vmem:[#allocation4 + $0x10] sm:$0xff]
    %v675 = vld [vmem:[#allocation4 + $0x18] sm:$0xff]
    %v676 = vld [vmem:[#allocation4 + $0x20] sm:$0xff]
    %v677 = vld [vmem:[#allocation4 + $0x28] sm:$0xff]
    %v678 = vld [vmem:[#allocation4 + $0x30] sm:$0xff]
    %v679 = vld [vmem:[#allocation4 + $0x38] sm:$0xff]
    %v680 = vld [vmem:[#allocation4 + $0x40] sm:$0xff]
    %v681 = vld [vmem:[#allocation4 + $0x48] sm:$0xff]
    %v682 = vld [vmem:[#allocation4 + $0x50] sm:$0xff]
    %v683 = vld [vmem:[#allocation4 + $0x58] sm:$0xff]
    %v684 = vld [vmem:[#allocation4 + $0x60] sm:$0xff]
    %v685 = vld [vmem:[#allocation4 + $0x68] sm:$0xff]
    %v686 = vld [vmem:[#allocation4 + $0x70] sm:$0xff]
    %v687 = vld [vmem:[#allocation4 + $0x78] sm:$0xff]
    %v688 = vld [vmem:[#allocation4 + $0x80] sm:$0xff]
    %v689 = vld [vmem:[#allocation4 + $0x88] sm:$0xff]
    %v690 = vld [vmem:[#allocation4 + $0x90] sm:$0xff]
    %v691 = vld [vmem:[#allocation4 + $0x98] sm:$0xff]
    %v692 = vld [vmem:[#allocation4 + $0xa0] sm:$0xff]
    %v693 = vld [vmem:[#allocation4 + $0xa8] sm:$0xff]
    %v694 = vld [vmem:[#allocation4 + $0xb0] sm:$0xff]
    %v695 = vld [vmem:[#allocation4 + $0xb8] sm:$0xff]
    %v696 = vld [vmem:[#allocation4 + $0xc0] sm:$0xff]
    %v697 = vld [vmem:[#allocation4 + $0xc8] sm:$0xff]
    %v698 = vld [vmem:[#allocation4 + $0xd0] sm:$0xff]
    %v699 = vld [vmem:[#allocation4 + $0xd8] sm:$0xff]
    %v700 = vld [vmem:[#allocation4 + $0xe0] sm:$0xff]
    %v701 = vld [vmem:[#allocation4 + $0xe8] sm:$0xff]
    %v702 = vld [vmem:[#allocation4 + $0xf0] sm:$0xff]
    %v703 = vld [vmem:[#allocation4 + $0xf8] sm:$0xff]
    %v704 = vld [vmem:[#allocation4 + $0x100] sm:$0xff]
    %v705 = vld [vmem:[#allocation4 + $0x108] sm:$0xff]
    %v706 = vld [vmem:[#allocation4 + $0x110] sm:$0xff]
    %v707 = vld [vmem:[#allocation4 + $0x118] sm:$0xff]
    %v708 = vld [vmem:[#allocation4 + $0x120] sm:$0xff]
    %v709 = vld [vmem:[#allocation4 + $0x128] sm:$0xff]
    %v710 = vld [vmem:[#allocation4 + $0x130] sm:$0xff]
    %v711 = vld [vmem:[#allocation4 + $0x138] sm:$0xff]
    %v712 = vld [vmem:[#allocation4 + $0x140] sm:$0xff]
    %v713 = vld [vmem:[#allocation4 + $0x148] sm:$0xff]
    %v714 = vld [vmem:[#allocation4 + $0x150] sm:$0xff]
    %v715 = vld [vmem:[#allocation4 + $0x158] sm:$0xff]
    %v716 = vld [vmem:[#allocation4 + $0x160] sm:$0xff]
    %v717 = vld [vmem:[#allocation4 + $0x168] sm:$0xff]
    %v718 = vld [vmem:[#allocation4 + $0x170] sm:$0xff]
    %v719 = vld [vmem:[#allocation4 + $0x178] sm:$0xff]
    %v720 = vld [vmem:[#allocation4 + $0x180] sm:$0xff]
    %v721 = vld [vmem:[#allocation4 + $0x188] sm:$0xff]
    %v722 = vld [vmem:[#allocation4 + $0x190] sm:$0xff]
    %v723 = vld [vmem:[#allocation4 + $0x198] sm:$0xff]
    %v724 = vld [vmem:[#allocation4 + $0x1a0] sm:$0xff]
    %v725 = vld [vmem:[#allocation4 + $0x1a8] sm:$0xff]
    %v726 = vld [vmem:[#allocation4 + $0x1b0] sm:$0xff]
    %v727 = vld [vmem:[#allocation4 + $0x1b8] sm:$0xff]
    %v728 = vld [vmem:[#allocation4 + $0x1c0] sm:$0xff]
    %v729 = vld [vmem:[#allocation4 + $0x1c8] sm:$0xff]
    %v730 = vld [vmem:[#allocation4 + $0x1d0] sm:$0xff]
    %v731 = vld [vmem:[#allocation4 + $0x1d8] sm:$0xff]
    %v732 = vld [vmem:[#allocation4 + $0x1e0] sm:$0xff]
    %v733 = vld [vmem:[#allocation4 + $0x1e8] sm:$0xff]
    %v734 = vld [vmem:[#allocation4 + $0x1f0] sm:$0xff]
    %v735 = vld [vmem:[#allocation4 + $0x1f8] sm:$0xff]
    %736 = vmatprep.subr.mxu0 %v733
    %737 = vmatpush1.msra.mxu0 %v732
    %738 = vmatprep.subr.mxu0 %v729
    %739 = vmatpush1.msra.mxu0 %v728
    %740 = vmatprep.subr.mxu0 %v725
    %741 = vmatpush1.msra.mxu0 %v724
    %742 = vmatprep.subr.mxu0 %v721
    %743 = vmatpush1.msra.mxu0 %v720
    %744 = vmatprep.subr.mxu0 %v717
    %745 = vmatpush1.msra.mxu0 %v716
    %746 = vmatprep.subr.mxu0 %v713
    %747 = vmatpush1.msra.mxu0 %v712
    %748 = vmatprep.subr.mxu0 %v709
    %749 = vmatpush1.msra.mxu0 %v708
    %750 = vmatprep.subr.mxu0 %v705
    %751 = vmatpush1.msra.mxu0 %v704
    %752 = vmatprep.subr.mxu0 %v701
    %753 = vmatpush1.msra.mxu0 %v700
    %754 = vmatprep.subr.mxu0 %v697
    %755 = vmatpush1.msra.mxu0 %v696
    %756 = vmatprep.subr.mxu0 %v693
    %757 = vmatpush1.msra.mxu0 %v692
    %758 = vmatprep.subr.mxu0 %v689
    %759 = vmatpush1.msra.mxu0 %v688
    %760 = vmatprep.subr.mxu0 %v685
    %761 = vmatpush1.msra.mxu0 %v684
    %762 = vmatprep.subr.mxu0 %v681
    %763 = vmatpush1.msra.mxu0 %v680
    %764 = vmatprep.subr.mxu0 %v677
    %765 = vmatpush1.msra.mxu0 %v676
    %766 = vmatprep.subr.mxu0 %v673
    %767 = vmatpush1.msra.mxu0 %v672
    %768 = vmatprep.subr.mxu0 0.0
    %769 = vmatpush2.msra.mxu0 0.0
    %770 = vmatprep.subr.mxu0 0.0
    %771 = vmatpush2.msra.mxu0 0.0
    %772 = vmatprep.subr.mxu0 0.0
    %773 = vmatpush2.msra.mxu0 0.0
    %774 = vmatprep.subr.mxu0 0.0
    %775 = vmatpush2.msra.mxu0 0.0
    %776 = vmatprep.subr.mxu0 0.0
    %777 = vmatpush2.msra.mxu0 0.0
    %778 = vmatprep.subr.mxu0 0.0
    %779 = vmatpush2.msra.mxu0 0.0
    %780 = vmatprep.subr.mxu0 0.0
    %781 = vmatpush2.msra.mxu0 0.0
    %782 = vmatprep.subr.mxu0 0.0
    %783 = vmatpush2.msra.mxu0 0.0
    %784 = vmatprep.subr.mxu0 0.0
    %785 = vmatpush2.msra.mxu0 0.0
    %786 = vmatprep.subr.mxu0 0.0
    %787 = vmatpush2.msra.mxu0 0.0
    %788 = vmatprep.subr.mxu0 0.0
    %789 = vmatpush2.msra.mxu0 0.0
    %790 = vmatprep.subr.mxu0 0.0
    %791 = vmatpush2.msra.mxu0 0.0
    %792 = vmatprep.subr.mxu0 0.0
    %793 = vmatpush2.msra.mxu0 0.0
    %794 = vmatprep.subr.mxu0 0.0
    %795 = vmatpush2.msra.mxu0 0.0
    %796 = vmatprep.subr.mxu0 0.0
    %797 = vmatpush2.msra.mxu0 0.0
    %798 = vmatprep.subr.mxu0 0.0
    %799 = vmatpush2.msra.mxu0 0.0
    %800 = vmatprep.mubr.f32.mxu0 0.0
    %801 = vmatmul.mubr.f32.gmra.mxu0 %v666
    %v802 = vpop.f32.mrf.mxu0
    %v803 = vadd.f32 0.0, %v802
    %v804 = vpop.f32.mrf.mxu0
    %v805 = vadd.f32 0.0, %v804
    %806 = vdwg.mxu0
    %807 = vmatprep.subr.mxu0 %v735
    %808 = vmatpush1.msra.mxu0 %v734
    %809 = vmatprep.subr.mxu0 %v731
    %810 = vmatpush1.msra.mxu0 %v730
    %811 = vmatprep.subr.mxu0 %v727
    %812 = vmatpush1.msra.mxu0 %v726
    %813 = vmatprep.subr.mxu0 %v723
    %814 = vmatpush1.msra.mxu0 %v722
    %815 = vmatprep.subr.mxu0 %v719
    %816 = vmatpush1.msra.mxu0 %v718
    %817 = vmatprep.subr.mxu0 %v715
    %818 = vmatpush1.msra.mxu0 %v714
    %819 = vmatprep.subr.mxu0 %v711
    %820 = vmatpush1.msra.mxu0 %v710
    %821 = vmatprep.subr.mxu0 %v707
    %822 = vmatpush1.msra.mxu0 %v706
    %823 = vmatprep.subr.mxu0 %v703
    %824 = vmatpush1.msra.mxu0 %v702
    %825 = vmatprep.subr.mxu0 %v699
    %826 = vmatpush1.msra.mxu0 %v698
    %827 = vmatprep.subr.mxu0 %v695
    %828 = vmatpush1.msra.mxu0 %v694
    %829 = vmatprep.subr.mxu0 %v691
    %830 = vmatpush1.msra.mxu0 %v690
    %831 = vmatprep.subr.mxu0 %v687
    %832 = vmatpush1.msra.mxu0 %v686
    %833 = vmatprep.subr.mxu0 %v683
    %834 = vmatpush1.msra.mxu0 %v682
    %835 = vmatprep.subr.mxu0 %v679
    %836 = vmatpush1.msra.mxu0 %v678
    %837 = vmatprep.subr.mxu0 %v675
    %838 = vmatpush1.msra.mxu0 %v674
    %839 = vmatprep.subr.mxu0 0.0
    %840 = vmatpush2.msra.mxu0 0.0
    %841 = vmatprep.subr.mxu0 0.0
    %842 = vmatpush2.msra.mxu0 0.0
    %843 = vmatprep.subr.mxu0 0.0
    %844 = vmatpush2.msra.mxu0 0.0
    %845 = vmatprep.subr.mxu0 0.0
    %846 = vmatpush2.msra.mxu0 0.0
    %847 = vmatprep.subr.mxu0 0.0
    %848 = vmatpush2.msra.mxu0 0.0
    %849 = vmatprep.subr.mxu0 0.0
    %850 = vmatpush2.msra.mxu0 0.0
    %851 = vmatprep.subr.mxu0 0.0
    %852 = vmatpush2.msra.mxu0 0.0
    %853 = vmatprep.subr.mxu0 0.0
    %854 = vmatpush2.msra.mxu0 0.0
    %855 = vmatprep.subr.mxu0 0.0
    %856 = vmatpush2.msra.mxu0 0.0
    %857 = vmatprep.subr.mxu0 0.0
    %858 = vmatpush2.msra.mxu0 0.0
    %859 = vmatprep.subr.mxu0 0.0
    %860 = vmatpush2.msra.mxu0 0.0
    %861 = vmatprep.subr.mxu0 0.0
    %862 = vmatpush2.msra.mxu0 0.0
    %863 = vmatprep.subr.mxu0 0.0
    %864 = vmatpush2.msra.mxu0 0.0
    %865 = vmatprep.subr.mxu0 0.0
    %866 = vmatpush2.msra.mxu0 0.0
    %867 = vmatprep.subr.mxu0 0.0
    %868 = vmatpush2.msra.mxu0 0.0
    %869 = vmatprep.subr.mxu0 0.0
    %870 = vmatpush2.msra.mxu0 0.0
    %871 = vmatprep.mubr.f32.mxu0 0.0
    %872 = vmatmul.mubr.f32.gmra.mxu0 %v666
    %v873 = vpop.f32.mrf.mxu0
    %v874 = vadd.f32 0.0, %v873
    %v875 = vpop.f32.mrf.mxu0
    %v876 = vadd.f32 0.0, %v875
    %877 = vdwg.mxu0
    %v878 = vadd.f32 %v668, %v803
    %v879 = vadd.f32 %v669, %v805
    %v880 = vadd.f32 %v670, %v874
    %v881 = vadd.f32 %v671, %v876
    %v882 = vxor.u32 %v878, 2147483648
    %v883 = vmul.f32 %v882, 1.442695
    %v884 = vpow.pop %v883
    %v885 = vadd.f32 %v884, 1.0
    %v886 = vrcp.pop %v885
    %v887 = vmul.f32 1.0, %v886
    %v888 = vtanh.pop %v880
    %v889 = vxor.u32 %v881, 2147483648
    %v890 = vmul.f32 %v889, 1.442695
    %v891 = vpow.pop %v890
    %v892 = vadd.f32 %v891, 1.0
    %v893 = vrcp.pop %v892
    %v894 = vmul.f32 1.0, %v893
    %v895 = vxor.u32 %v879, 2147483648
    %v896 = vmul.f32 %v895, 1.442695
    %v897 = vpow.pop %v896
    %v898 = vadd.f32 %v897, 1.0
    %v899 = vrcp.pop %v898
    %v900 = vmul.f32 1.0, %v899
    %v901 = vmul.f32 %v900, %v664
    %v902 = vmul.f32 %v887, %v888
    %v903 = vadd.f32 %v901, %v902
    %v904 = vtanh.pop %v903
    %v905 = vmul.f32 %v894, %v904
    %906 = vst [vmem:[#allocation3 + $0x10] sm:$0xff] %v905
    %v907 = vld [vmem:[#allocation2 + $0x60] sm:$0xff]
    %v908 = vld [vmem:[#allocation2 + $0x68] sm:$0xff]
    %v909 = vld [vmem:[#allocation2 + $0x70] sm:$0xff]
    %v910 = vld [vmem:[#allocation2 + $0x78] sm:$0xff]
    %v911 = vld [vmem:[#allocation4] sm:$0xff]
    %v912 = vld [vmem:[#allocation4 + $0x8] sm:$0xff]
    %v913 = vld [vmem:[#allocation4 + $0x10] sm:$0xff]
    %v914 = vld [vmem:[#allocation4 + $0x18] sm:$0xff]
    %v915 = vld [vmem:[#allocation4 + $0x20] sm:$0xff]
    %v916 = vld [vmem:[#allocation4 + $0x28] sm:$0xff]
    %v917 = vld [vmem:[#allocation4 + $0x30] sm:$0xff]
    %v918 = vld [vmem:[#allocation4 + $0x38] sm:$0xff]
    %v919 = vld [vmem:[#allocation4 + $0x40] sm:$0xff]
    %v920 = vld [vmem:[#allocation4 + $0x48] sm:$0xff]
    %v921 = vld [vmem:[#allocation4 + $0x50] sm:$0xff]
    %v922 = vld [vmem:[#allocation4 + $0x58] sm:$0xff]
    %v923 = vld [vmem:[#allocation4 + $0x60] sm:$0xff]
    %v924 = vld [vmem:[#allocation4 + $0x68] sm:$0xff]
    %v925 = vld [vmem:[#allocation4 + $0x70] sm:$0xff]
    %v926 = vld [vmem:[#allocation4 + $0x78] sm:$0xff]
    %v927 = vld [vmem:[#allocation4 + $0x80] sm:$0xff]
    %v928 = vld [vmem:[#allocation4 + $0x88] sm:$0xff]
    %v929 = vld [vmem:[#allocation4 + $0x90] sm:$0xff]
    %v930 = vld [vmem:[#allocation4 + $0x98] sm:$0xff]
    %v931 = vld [vmem:[#allocation4 + $0xa0] sm:$0xff]
    %v932 = vld [vmem:[#allocation4 + $0xa8] sm:$0xff]
    %v933 = vld [vmem:[#allocation4 + $0xb0] sm:$0xff]
    %v934 = vld [vmem:[#allocation4 + $0xb8] sm:$0xff]
    %v935 = vld [vmem:[#allocation4 + $0xc0] sm:$0xff]
    %v936 = vld [vmem:[#allocation4 + $0xc8] sm:$0xff]
    %v937 = vld [vmem:[#allocation4 + $0xd0] sm:$0xff]
    %v938 = vld [vmem:[#allocation4 + $0xd8] sm:$0xff]
    %v939 = vld [vmem:[#allocation4 + $0xe0] sm:$0xff]
    %v940 = vld [vmem:[#allocation4 + $0xe8] sm:$0xff]
    %v941 = vld [vmem:[#allocation4 + $0xf0] sm:$0xff]
    %v942 = vld [vmem:[#allocation4 + $0xf8] sm:$0xff]
    %v943 = vld [vmem:[#allocation4 + $0x100] sm:$0xff]
    %v944 = vld [vmem:[#allocation4 + $0x108] sm:$0xff]
    %v945 = vld [vmem:[#allocation4 + $0x110] sm:$0xff]
    %v946 = vld [vmem:[#allocation4 + $0x118] sm:$0xff]
    %v947 = vld [vmem:[#allocation4 + $0x120] sm:$0xff]
    %v948 = vld [vmem:[#allocation4 + $0x128] sm:$0xff]
    %v949 = vld [vmem:[#allocation4 + $0x130] sm:$0xff]
    %v950 = vld [vmem:[#allocation4 + $0x138] sm:$0xff]
    %v951 = vld [vmem:[#allocation4 + $0x140] sm:$0xff]
    %v952 = vld [vmem:[#allocation4 + $0x148] sm:$0xff]
    %v953 = vld [vmem:[#allocation4 + $0x150] sm:$0xff]
    %v954 = vld [vmem:[#allocation4 + $0x158] sm:$0xff]
    %v955 = vld [vmem:[#allocation4 + $0x160] sm:$0xff]
    %v956 = vld [vmem:[#allocation4 + $0x168] sm:$0xff]
    %v957 = vld [vmem:[#allocation4 + $0x170] sm:$0xff]
    %v958 = vld [vmem:[#allocation4 + $0x178] sm:$0xff]
    %v959 = vld [vmem:[#allocation4 + $0x180] sm:$0xff]
    %v960 = vld [vmem:[#allocation4 + $0x188] sm:$0xff]
    %v961 = vld [vmem:[#allocation4 + $0x190] sm:$0xff]
    %v962 = vld [vmem:[#allocation4 + $0x198] sm:$0xff]
    %v963 = vld [vmem:[#allocation4 + $0x1a0] sm:$0xff]
    %v964 = vld [vmem:[#allocation4 + $0x1a8] sm:$0xff]
    %v965 = vld [vmem:[#allocation4 + $0x1b0] sm:$0xff]
    %v966 = vld [vmem:[#allocation4 + $0x1b8] sm:$0xff]
    %v967 = vld [vmem:[#allocation4 + $0x1c0] sm:$0xff]
    %v968 = vld [vmem:[#allocation4 + $0x1c8] sm:$0xff]
    %v969 = vld [vmem:[#allocation4 + $0x1d0] sm:$0xff]
    %v970 = vld [vmem:[#allocation4 + $0x1d8] sm:$0xff]
    %v971 = vld [vmem:[#allocation4 + $0x1e0] sm:$0xff]
    %v972 = vld [vmem:[#allocation4 + $0x1e8] sm:$0xff]
    %v973 = vld [vmem:[#allocation4 + $0x1f0] sm:$0xff]
    %v974 = vld [vmem:[#allocation4 + $0x1f8] sm:$0xff]
    %975 = vmatprep.subr.mxu0 %v972
    %976 = vmatpush1.msra.mxu0 %v971
    %977 = vmatprep.subr.mxu0 %v968
    %978 = vmatpush1.msra.mxu0 %v967
    %979 = vmatprep.subr.mxu0 %v964
    %980 = vmatpush1.msra.mxu0 %v963
    %981 = vmatprep.subr.mxu0 %v960
    %982 = vmatpush1.msra.mxu0 %v959
    %983 = vmatprep.subr.mxu0 %v956
    %984 = vmatpush1.msra.mxu0 %v955
    %985 = vmatprep.subr.mxu0 %v952
    %986 = vmatpush1.msra.mxu0 %v951
    %987 = vmatprep.subr.mxu0 %v948
    %988 = vmatpush1.msra.mxu0 %v947
    %989 = vmatprep.subr.mxu0 %v944
    %990 = vmatpush1.msra.mxu0 %v943
    %991 = vmatprep.subr.mxu0 %v940
    %992 = vmatpush1.msra.mxu0 %v939
    %993 = vmatprep.subr.mxu0 %v936
    %994 = vmatpush1.msra.mxu0 %v935
    %995 = vmatprep.subr.mxu0 %v932
    %996 = vmatpush1.msra.mxu0 %v931
    %997 = vmatprep.subr.mxu0 %v928
    %998 = vmatpush1.msra.mxu0 %v927
    %999 = vmatprep.subr.mxu0 %v924
    %1000 = vmatpush1.msra.mxu0 %v923
    %1001 = vmatprep.subr.mxu0 %v920
    %1002 = vmatpush1.msra.mxu0 %v919
    %1003 = vmatprep.subr.mxu0 %v916
    %1004 = vmatpush1.msra.mxu0 %v915
    %1005 = vmatprep.subr.mxu0 %v912
    %1006 = vmatpush1.msra.mxu0 %v911
    %1007 = vmatprep.subr.mxu0 0.0
    %1008 = vmatpush2.msra.mxu0 0.0
    %1009 = vmatprep.subr.mxu0 0.0
    %1010 = vmatpush2.msra.mxu0 0.0
    %1011 = vmatprep.subr.mxu0 0.0
    %1012 = vmatpush2.msra.mxu0 0.0
    %1013 = vmatprep.subr.mxu0 0.0
    %1014 = vmatpush2.msra.mxu0 0.0
    %1015 = vmatprep.subr.mxu0 0.0
    %1016 = vmatpush2.msra.mxu0 0.0
    %1017 = vmatprep.subr.mxu0 0.0
    %1018 = vmatpush2.msra.mxu0 0.0
    %1019 = vmatprep.subr.mxu0 0.0
    %1020 = vmatpush2.msra.mxu0 0.0
    %1021 = vmatprep.subr.mxu0 0.0
    %1022 = vmatpush2.msra.mxu0 0.0
    %1023 = vmatprep.subr.mxu0 0.0
    %1024 = vmatpush2.msra.mxu0 0.0
    %1025 = vmatprep.subr.mxu0 0.0
    %1026 = vmatpush2.msra.mxu0 0.0
    %1027 = vmatprep.subr.mxu0 0.0
    %1028 = vmatpush2.msra.mxu0 0.0
    %1029 = vmatprep.subr.mxu0 0.0
    %1030 = vmatpush2.msra.mxu0 0.0
    %1031 = vmatprep.subr.mxu0 0.0
    %1032 = vmatpush2.msra.mxu0 0.0
    %1033 = vmatprep.subr.mxu0 0.0
    %1034 = vmatpush2.msra.mxu0 0.0
    %1035 = vmatprep.subr.mxu0 0.0
    %1036 = vmatpush2.msra.mxu0 0.0
    %1037 = vmatprep.subr.mxu0 0.0
    %1038 = vmatpush2.msra.mxu0 0.0
    %1039 = vmatprep.mubr.f32.mxu0 0.0
    %1040 = vmatmul.mubr.f32.gmra.mxu0 %v905
    %v1041 = vpop.f32.mrf.mxu0
    %v1042 = vadd.f32 0.0, %v1041
    %v1043 = vpop.f32.mrf.mxu0
    %v1044 = vadd.f32 0.0, %v1043
    %1045 = vdwg.mxu0
    %1046 = vmatprep.subr.mxu0 %v974
    %1047 = vmatpush1.msra.mxu0 %v973
    %1048 = vmatprep.subr.mxu0 %v970
    %1049 = vmatpush1.msra.mxu0 %v969
    %1050 = vmatprep.subr.mxu0 %v966
    %1051 = vmatpush1.msra.mxu0 %v965
    %1052 = vmatprep.subr.mxu0 %v962
    %1053 = vmatpush1.msra.mxu0 %v961
    %1054 = vmatprep.subr.mxu0 %v958
    %1055 = vmatpush1.msra.mxu0 %v957
    %1056 = vmatprep.subr.mxu0 %v954
    %1057 = vmatpush1.msra.mxu0 %v953
    %1058 = vmatprep.subr.mxu0 %v950
    %1059 = vmatpush1.msra.mxu0 %v949
    %1060 = vmatprep.subr.mxu0 %v946
    %1061 = vmatpush1.msra.mxu0 %v945
    %1062 = vmatprep.subr.mxu0 %v942
    %1063 = vmatpush1.msra.mxu0 %v941
    %1064 = vmatprep.subr.mxu0 %v938
    %1065 = vmatpush1.msra.mxu0 %v937
    %1066 = vmatprep.subr.mxu0 %v934
    %1067 = vmatpush1.msra.mxu0 %v933
    %1068 = vmatprep.subr.mxu0 %v930
    %1069 = vmatpush1.msra.mxu0 %v929
    %1070 = vmatprep.subr.mxu0 %v926
    %1071 = vmatpush1.msra.mxu0 %v925
    %1072 = vmatprep.subr.mxu0 %v922
    %1073 = vmatpush1.msra.mxu0 %v921
    %1074 = vmatprep.subr.mxu0 %v918
    %1075 = vmatpush1.msra.mxu0 %v917
    %1076 = vmatprep.subr.mxu0 %v914
    %1077 = vmatpush1.msra.mxu0 %v913
    %1078 = vmatprep.subr.mxu0 0.0
    %1079 = vmatpush2.msra.mxu0 0.0
    %1080 = vmatprep.subr.mxu0 0.0
    %1081 = vmatpush2.msra.mxu0 0.0
    %1082 = vmatprep.subr.mxu0 0.0
    %1083 = vmatpush2.msra.mxu0 0.0
    %1084 = vmatprep.subr.mxu0 0.0
    %1085 = vmatpush2.msra.mxu0 0.0
    %1086 = vmatprep.subr.mxu0 0.0
    %1087 = vmatpush2.msra.mxu0 0.0
    %1088 = vmatprep.subr.mxu0 0.0
    %1089 = vmatpush2.msra.mxu0 0.0
    %1090 = vmatprep.subr.mxu0 0.0
    %1091 = vmatpush2.msra.mxu0 0.0
    %1092 = vmatprep.subr.mxu0 0.0
    %1093 = vmatpush2.msra.mxu0 0.0
    %1094 = vmatprep.subr.mxu0 0.0
    %1095 = vmatpush2.msra.mxu0 0.0
    %1096 = vmatprep.subr.mxu0 0.0
    %1097 = vmatpush2.msra.mxu0 0.0
    %1098 = vmatprep.subr.mxu0 0.0
    %1099 = vmatpush2.msra.mxu0 0.0
    %1100 = vmatprep.subr.mxu0 0.0
    %1101 = vmatpush2.msra.mxu0 0.0
    %1102 = vmatprep.subr.mxu0 0.0
    %1103 = vmatpush2.msra.mxu0 0.0
    %1104 = vmatprep.subr.mxu0 0.0
    %1105 = vmatpush2.msra.mxu0 0.0
    %1106 = vmatprep.subr.mxu0 0.0
    %1107 = vmatpush2.msra.mxu0 0.0
    %1108 = vmatprep.subr.mxu0 0.0
    %1109 = vmatpush2.msra.mxu0 0.0
    %1110 = vmatprep.mubr.f32.mxu0 0.0
    %1111 = vmatmul.mubr.f32.gmra.mxu0 %v905
    %v1112 = vpop.f32.mrf.mxu0
    %v1113 = vadd.f32 0.0, %v1112
    %v1114 = vpop.f32.mrf.mxu0
    %v1115 = vadd.f32 0.0, %v1114
    %1116 = vdwg.mxu0
    %v1117 = vadd.f32 %v907, %v1042
    %v1118 = vadd.f32 %v908, %v1044
    %v1119 = vadd.f32 %v909, %v1113
    %v1120 = vadd.f32 %v910, %v1115
    %v1121 = vxor.u32 %v1117, 2147483648
    %v1122 = vmul.f32 %v1121, 1.442695
    %v1123 = vpow.pop %v1122
    %v1124 = vadd.f32 %v1123, 1.0
    %v1125 = vrcp.pop %v1124
    %v1126 = vmul.f32 1.0, %v1125
    %v1127 = vtanh.pop %v1119
    %v1128 = vxor.u32 %v1120, 2147483648
    %v1129 = vmul.f32 %v1128, 1.442695
    %v1130 = vpow.pop %v1129
    %v1131 = vadd.f32 %v1130, 1.0
    %v1132 = vrcp.pop %v1131
    %v1133 = vmul.f32 1.0, %v1132
    %v1134 = vxor.u32 %v1118, 2147483648
    %v1135 = vmul.f32 %v1134, 1.442695
    %v1136 = vpow.pop %v1135
    %v1137 = vadd.f32 %v1136, 1.0
    %v1138 = vrcp.pop %v1137
    %v1139 = vmul.f32 1.0, %v1138
    %v1140 = vmul.f32 %v1139, %v903
    %v1141 = vmul.f32 %v1126, %v1127
    %v1142 = vadd.f32 %v1140, %v1141
    %v1143 = vtanh.pop %v1142
    %v1144 = vmul.f32 %v1133, %v1143
    %1145 = vst [vmem:[#allocation3 + $0x18] sm:$0xff] %v1144
    %v1146 = vld [vmem:[#allocation2 + $0x80] sm:$0xff]
    %v1147 = vld [vmem:[#allocation2 + $0x88] sm:$0xff]
    %v1148 = vld [vmem:[#allocation2 + $0x90] sm:$0xff]
    %v1149 = vld [vmem:[#allocation2 + $0x98] sm:$0xff]
    %v1150 = vld [vmem:[#allocation4] sm:$0xff]
    %v1151 = vld [vmem:[#allocation4 + $0x8] sm:$0xff]
    %v1152 = vld [vmem:[#allocation4 + $0x10] sm:$0xff]
    %v1153 = vld [vmem:[#allocation4 + $0x18] sm:$0xff]
    %v1154 = vld [vmem:[#allocation4 + $0x20] sm:$0xff]
    %v1155 = vld [vmem:[#allocation4 + $0x28] sm:$0xff]
    %v1156 = vld [vmem:[#allocation4 + $0x30] sm:$0xff]
    %v1157 = vld [vmem:[#allocation4 + $0x38] sm:$0xff]
    %v1158 = vld [vmem:[#allocation4 + $0x40] sm:$0xff]
    %v1159 = vld [vmem:[#allocation4 + $0x48] sm:$0xff]
    %v1160 = vld [vmem:[#allocation4 + $0x50] sm:$0xff]
    %v1161 = vld [vmem:[#allocation4 + $0x58] sm:$0xff]
    %v1162 = vld [vmem:[#allocation4 + $0x60] sm:$0xff]
    %v1163 = vld [vmem:[#allocation4 + $0x68] sm:$0xff]
    %v1164 = vld [vmem:[#allocation4 + $0x70] sm:$0xff]
    %v1165 = vld [vmem:[#allocation4 + $0x78] sm:$0xff]
    %v1166 = vld [vmem:[#allocation4 + $0x80] sm:$0xff]
    %v1167 = vld [vmem:[#allocation4 + $0x88] sm:$0xff]
    %v1168 = vld [vmem:[#allocation4 + $0x90] sm:$0xff]
    %v1169 = vld [vmem:[#allocation4 + $0x98] sm:$0xff]
    %v1170 = vld [vmem:[#allocation4 + $0xa0] sm:$0xff]
    %v1171 = vld [vmem:[#allocation4 + $0xa8] sm:$0xff]
    %v1172 = vld [vmem:[#allocation4 + $0xb0] sm:$0xff]
    %v1173 = vld [vmem:[#allocation4 + $0xb8] sm:$0xff]
    %v1174 = vld [vmem:[#allocation4 + $0xc0] sm:$0xff]
    %v1175 = vld [vmem:[#allocation4 + $0xc8] sm:$0xff]
    %v1176 = vld [vmem:[#allocation4 + $0xd0] sm:$0xff]
    %v1177 = vld [vmem:[#allocation4 + $0xd8] sm:$0xff]
    %v1178 = vld [vmem:[#allocation4 + $0xe0] sm:$0xff]
    %v1179 = vld [vmem:[#allocation4 + $0xe8] sm:$0xff]
    %v1180 = vld [vmem:[#allocation4 + $0xf0] sm:$0xff]
    %v1181 = vld [vmem:[#allocation4 + $0xf8] sm:$0xff]
    %v1182 = vld [vmem:[#allocation4 + $0x100] sm:$0xff]
    %v1183 = vld [vmem:[#allocation4 + $0x108] sm:$0xff]
    %v1184 = vld [vmem:[#allocation4 + $0x110] sm:$0xff]
    %v1185 = vld [vmem:[#allocation4 + $0x118] sm:$0xff]
    %v1186 = vld [vmem:[#allocation4 + $0x120] sm:$0xff]
    %v1187 = vld [vmem:[#allocation4 + $0x128] sm:$0xff]
    %v1188 = vld [vmem:[#allocation4 + $0x130] sm:$0xff]
    %v1189 = vld [vmem:[#allocation4 + $0x138] sm:$0xff]
    %v1190 = vld [vmem:[#allocation4 + $0x140] sm:$0xff]
    %v1191 = vld [vmem:[#allocation4 + $0x148] sm:$0xff]
    %v1192 = vld [vmem:[#allocation4 + $0x150] sm:$0xff]
    %v1193 = vld [vmem:[#allocation4 + $0x158] sm:$0xff]
    %v1194 = vld [vmem:[#allocation4 + $0x160] sm:$0xff]
    %v1195 = vld [vmem:[#allocation4 + $0x168] sm:$0xff]
    %v1196 = vld [vmem:[#allocation4 + $0x170] sm:$0xff]
    %v1197 = vld [vmem:[#allocation4 + $0x178] sm:$0xff]
    %v1198 = vld [vmem:[#allocation4 + $0x180] sm:$0xff]
    %v1199 = vld [vmem:[#allocation4 + $0x188] sm:$0xff]
    %v1200 = vld [vmem:[#allocation4 + $0x190] sm:$0xff]
    %v1201 = vld [vmem:[#allocation4 + $0x198] sm:$0xff]
    %v1202 = vld [vmem:[#allocation4 + $0x1a0] sm:$0xff]
    %v1203 = vld [vmem:[#allocation4 + $0x1a8] sm:$0xff]
    %v1204 = vld [vmem:[#allocation4 + $0x1b0] sm:$0xff]
    %v1205 = vld [vmem:[#allocation4 + $0x1b8] sm:$0xff]
    %v1206 = vld [vmem:[#allocation4 + $0x1c0] sm:$0xff]
    %v1207 = vld [vmem:[#allocation4 + $0x1c8] sm:$0xff]
    %v1208 = vld [vmem:[#allocation4 + $0x1d0] sm:$0xff]
    %v1209 = vld [vmem:[#allocation4 + $0x1d8] sm:$0xff]
    %v1210 = vld [vmem:[#allocation4 + $0x1e0] sm:$0xff]
    %v1211 = vld [vmem:[#allocation4 + $0x1e8] sm:$0xff]
    %v1212 = vld [vmem:[#allocation4 + $0x1f0] sm:$0xff]
    %v1213 = vld [vmem:[#allocation4 + $0x1f8] sm:$0xff]
    %1214 = vmatprep.subr.mxu0 %v1211
    %1215 = vmatpush1.msra.mxu0 %v1210
    %1216 = vmatprep.subr.mxu0 %v1207
    %1217 = vmatpush1.msra.mxu0 %v1206
    %1218 = vmatprep.subr.mxu0 %v1203
    %1219 = vmatpush1.msra.mxu0 %v1202
    %1220 = vmatprep.subr.mxu0 %v1199
    %1221 = vmatpush1.msra.mxu0 %v1198
    %1222 = vmatprep.subr.mxu0 %v1195
    %1223 = vmatpush1.msra.mxu0 %v1194
    %1224 = vmatprep.subr.mxu0 %v1191
    %1225 = vmatpush1.msra.mxu0 %v1190
    %1226 = vmatprep.subr.mxu0 %v1187
    %1227 = vmatpush1.msra.mxu0 %v1186
    %1228 = vmatprep.subr.mxu0 %v1183
    %1229 = vmatpush1.msra.mxu0 %v1182
    %1230 = vmatprep.subr.mxu0 %v1179
    %1231 = vmatpush1.msra.mxu0 %v1178
    %1232 = vmatprep.subr.mxu0 %v1175
    %1233 = vmatpush1.msra.mxu0 %v1174
    %1234 = vmatprep.subr.mxu0 %v1171
    %1235 = vmatpush1.msra.mxu0 %v1170
    %1236 = vmatprep.subr.mxu0 %v1167
    %1237 = vmatpush1.msra.mxu0 %v1166
    %1238 = vmatprep.subr.mxu0 %v1163
    %1239 = vmatpush1.msra.mxu0 %v1162
    %1240 = vmatprep.subr.mxu0 %v1159
    %1241 = vmatpush1.msra.mxu0 %v1158
    %1242 = vmatprep.subr.mxu0 %v1155
    %1243 = vmatpush1.msra.mxu0 %v1154
    %1244 = vmatprep.subr.mxu0 %v1151
    %1245 = vmatpush1.msra.mxu0 %v1150
    %1246 = vmatprep.subr.mxu0 0.0
    %1247 = vmatpush2.msra.mxu0 0.0
    %1248 = vmatprep.subr.mxu0 0.0
    %1249 = vmatpush2.msra.mxu0 0.0
    %1250 = vmatprep.subr.mxu0 0.0
    %1251 = vmatpush2.msra.mxu0 0.0
    %1252 = vmatprep.subr.mxu0 0.0
    %1253 = vmatpush2.msra.mxu0 0.0
    %1254 = vmatprep.subr.mxu0 0.0
    %1255 = vmatpush2.msra.mxu0 0.0
    %1256 = vmatprep.subr.mxu0 0.0
    %1257 = vmatpush2.msra.mxu0 0.0
    %1258 = vmatprep.subr.mxu0 0.0
    %1259 = vmatpush2.msra.mxu0 0.0
    %1260 = vmatprep.subr.mxu0 0.0
    %1261 = vmatpush2.msra.mxu0 0.0
    %1262 = vmatprep.subr.mxu0 0.0
    %1263 = vmatpush2.msra.mxu0 0.0
    %1264 = vmatprep.subr.mxu0 0.0
    %1265 = vmatpush2.msra.mxu0 0.0
    %1266 = vmatprep.subr.mxu0 0.0
    %1267 = vmatpush2.msra.mxu0 0.0
    %1268 = vmatprep.subr.mxu0 0.0
    %1269 = vmatpush2.msra.mxu0 0.0
    %1270 = vmatprep.subr.mxu0 0.0
    %1271 = vmatpush2.msra.mxu0 0.0
    %1272 = vmatprep.subr.mxu0 0.0
    %1273 = vmatpush2.msra.mxu0 0.0
    %1274 = vmatprep.subr.mxu0 0.0
    %1275 = vmatpush2.msra.mxu0 0.0
    %1276 = vmatprep.subr.mxu0 0.0
    %1277 = vmatpush2.msra.mxu0 0.0
    %1278 = vmatprep.mubr.f32.mxu0 0.0
    %1279 = vmatmul.mubr.f32.gmra.mxu0 %v1144
    %v1280 = vpop.f32.mrf.mxu0
    %v1281 = vadd.f32 0.0, %v1280
    %v1282 = vpop.f32.mrf.mxu0
    %v1283 = vadd.f32 0.0, %v1282
    %1284 = vdwg.mxu0
    %1285 = vmatprep.subr.mxu0 %v1213
    %1286 = vmatpush1.msra.mxu0 %v1212
    %1287 = vmatprep.subr.mxu0 %v1209
    %1288 = vmatpush1.msra.mxu0 %v1208
    %1289 = vmatprep.subr.mxu0 %v1205
    %1290 = vmatpush1.msra.mxu0 %v1204
    %1291 = vmatprep.subr.mxu0 %v1201
    %1292 = vmatpush1.msra.mxu0 %v1200
    %1293 = vmatprep.subr.mxu0 %v1197
    %1294 = vmatpush1.msra.mxu0 %v1196
    %1295 = vmatprep.subr.mxu0 %v1193
    %1296 = vmatpush1.msra.mxu0 %v1192
    %1297 = vmatprep.subr.mxu0 %v1189
    %1298 = vmatpush1.msra.mxu0 %v1188
    %1299 = vmatprep.subr.mxu0 %v1185
    %1300 = vmatpush1.msra.mxu0 %v1184
    %1301 = vmatprep.subr.mxu0 %v1181
    %1302 = vmatpush1.msra.mxu0 %v1180
    %1303 = vmatprep.subr.mxu0 %v1177
    %1304 = vmatpush1.msra.mxu0 %v1176
    %1305 = vmatprep.subr.mxu0 %v1173
    %1306 = vmatpush1.msra.mxu0 %v1172
    %1307 = vmatprep.subr.mxu0 %v1169
    %1308 = vmatpush1.msra.mxu0 %v1168
    %1309 = vmatprep.subr.mxu0 %v1165
    %1310 = vmatpush1.msra.mxu0 %v1164
    %1311 = vmatprep.subr.mxu0 %v1161
    %1312 = vmatpush1.msra.mxu0 %v1160
    %1313 = vmatprep.subr.mxu0 %v1157
    %1314 = vmatpush1.msra.mxu0 %v1156
    %1315 = vmatprep.subr.mxu0 %v1153
    %1316 = vmatpush1.msra.mxu0 %v1152
    %1317 = vmatprep.subr.mxu0 0.0
    %1318 = vmatpush2.msra.mxu0 0.0
    %1319 = vmatprep.subr.mxu0 0.0
    %1320 = vmatpush2.msra.mxu0 0.0
    %1321 = vmatprep.subr.mxu0 0.0
    %1322 = vmatpush2.msra.mxu0 0.0
    %1323 = vmatprep.subr.mxu0 0.0
    %1324 = vmatpush2.msra.mxu0 0.0
    %1325 = vmatprep.subr.mxu0 0.0
    %1326 = vmatpush2.msra.mxu0 0.0
    %1327 = vmatprep.subr.mxu0 0.0
    %1328 = vmatpush2.msra.mxu0 0.0
    %1329 = vmatprep.subr.mxu0 0.0
    %1330 = vmatpush2.msra.mxu0 0.0
    %1331 = vmatprep.subr.mxu0 0.0
    %1332 = vmatpush2.msra.mxu0 0.0
    %1333 = vmatprep.subr.mxu0 0.0
    %1334 = vmatpush2.msra.mxu0 0.0
    %1335 = vmatprep.subr.mxu0 0.0
    %1336 = vmatpush2.msra.mxu0 0.0
    %1337 = vmatprep.subr.mxu0 0.0
    %1338 = vmatpush2.msra.mxu0 0.0
    %1339 = vmatprep.subr.mxu0 0.0
    %1340 = vmatpush2.msra.mxu0 0.0
    %1341 = vmatprep.subr.mxu0 0.0
    %1342 = vmatpush2.msra.mxu0 0.0
    %1343 = vmatprep.subr.mxu0 0.0
    %1344 = vmatpush2.msra.mxu0 0.0
    %1345 = vmatprep.subr.mxu0 0.0
    %1346 = vmatpush2.msra.mxu0 0.0
    %1347 = vmatprep.subr.mxu0 0.0
    %1348 = vmatpush2.msra.mxu0 0.0
    %1349 = vmatprep.mubr.f32.mxu0 0.0
    %1350 = vmatmul.mubr.f32.gmra.mxu0 %v1144
    %v1351 = vpop.f32.mrf.mxu0
    %v1352 = vadd.f32 0.0, %v1351
    %v1353 = vpop.f32.mrf.mxu0
    %v1354 = vadd.f32 0.0, %v1353
    %1355 = vdwg.mxu0
    %v1356 = vadd.f32 %v1146, %v1281
    %v1357 = vadd.f32 %v1147, %v1283
    %v1358 = vadd.f32 %v1148, %v1352
    %v1359 = vadd.f32 %v1149, %v1354
    %v1360 = vxor.u32 %v1356, 2147483648
    %v1361 = vmul.f32 %v1360, 1.442695
    %v1362 = vpow.pop %v1361
    %v1363 = vadd.f32 %v1362, 1.0
    %v1364 = vrcp.pop %v1363
    %v1365 = vmul.f32 1.0, %v1364
    %v1366 = vtanh.pop %v1358
    %v1367 = vxor.u32 %v1359, 2147483648
    %v1368 = vmul.f32 %v1367, 1.442695
    %v1369 = vpow.pop %v1368
    %v1370 = vadd.f32 %v1369, 1.0
    %v1371 = vrcp.pop %v1370
    %v1372 = vmul.f32 1.0, %v1371
    %v1373 = vxor.u32 %v1357, 2147483648
    %v1374 = vmul.f32 %v1373, 1.442695
    %v1375 = vpow.pop %v1374
    %v1376 = vadd.f32 %v1375, 1.0
    %v1377 = vrcp.pop %v1376
    %v1378 = vmul.f32 1.0, %v1377
    %v1379 = vmul.f32 %v1378, %v1142
    %v1380 = vmul.f32 %v1365, %v1366
    %v1381 = vadd.f32 %v1379, %v1380
    %v1382 = vtanh.pop %v1381
    %v1383 = vmul.f32 %v1372, %v1382
    %1384 = vst [vmem:[#allocation3 + $0x20] sm:$0xff] %v1383
    %v1385 = vld [vmem:[#allocation2 + $0xa0] sm:$0xff]
    %v1386 = vld [vmem:[#allocation2 + $0xa8] sm:$0xff]
    %v1387 = vld [vmem:[#allocation2 + $0xb0] sm:$0xff]
    %v1388 = vld [vmem:[#allocation2 + $0xb8] sm:$0xff]
    %v1389 = vld [vmem:[#allocation4] sm:$0xff]
    %v1390 = vld [vmem:[#allocation4 + $0x8] sm:$0xff]
    %v1391 = vld [vmem:[#allocation4 + $0x10] sm:$0xff]
    %v1392 = vld [vmem:[#allocation4 + $0x18] sm:$0xff]
    %v1393 = vld [vmem:[#allocation4 + $0x20] sm:$0xff]
    %v1394 = vld [vmem:[#allocation4 + $0x28] sm:$0xff]
    %v1395 = vld [vmem:[#allocation4 + $0x30] sm:$0xff]
    %v1396 = vld [vmem:[#allocation4 + $0x38] sm:$0xff]
    %v1397 = vld [vmem:[#allocation4 + $0x40] sm:$0xff]
    %v1398 = vld [vmem:[#allocation4 + $0x48] sm:$0xff]
    %v1399 = vld [vmem:[#allocation4 + $0x50] sm:$0xff]
    %v1400 = vld [vmem:[#allocation4 + $0x58] sm:$0xff]
    %v1401 = vld [vmem:[#allocation4 + $0x60] sm:$0xff]
    %v1402 = vld [vmem:[#allocation4 + $0x68] sm:$0xff]
    %v1403 = vld [vmem:[#allocation4 + $0x70] sm:$0xff]
    %v1404 = vld [vmem:[#allocation4 + $0x78] sm:$0xff]
    %v1405 = vld [vmem:[#allocation4 + $0x80] sm:$0xff]
    %v1406 = vld [vmem:[#allocation4 + $0x88] sm:$0xff]
    %v1407 = vld [vmem:[#allocation4 + $0x90] sm:$0xff]
    %v1408 = vld [vmem:[#allocation4 + $0x98] sm:$0xff]
    %v1409 = vld [vmem:[#allocation4 + $0xa0] sm:$0xff]
    %v1410 = vld [vmem:[#allocation4 + $0xa8] sm:$0xff]
    %v1411 = vld [vmem:[#allocation4 + $0xb0] sm:$0xff]
    %v1412 = vld [vmem:[#allocation4 + $0xb8] sm:$0xff]
    %v1413 = vld [vmem:[#allocation4 + $0xc0] sm:$0xff]
    %v1414 = vld [vmem:[#allocation4 + $0xc8] sm:$0xff]
    %v1415 = vld [vmem:[#allocation4 + $0xd0] sm:$0xff]
    %v1416 = vld [vmem:[#allocation4 + $0xd8] sm:$0xff]
    %v1417 = vld [vmem:[#allocation4 + $0xe0] sm:$0xff]
    %v1418 = vld [vmem:[#allocation4 + $0xe8] sm:$0xff]
    %v1419 = vld [vmem:[#allocation4 + $0xf0] sm:$0xff]
    %v1420 = vld [vmem:[#allocation4 + $0xf8] sm:$0xff]
    %v1421 = vld [vmem:[#allocation4 + $0x100] sm:$0xff]
    %v1422 = vld [vmem:[#allocation4 + $0x108] sm:$0xff]
    %v1423 = vld [vmem:[#allocation4 + $0x110] sm:$0xff]
    %v1424 = vld [vmem:[#allocation4 + $0x118] sm:$0xff]
    %v1425 = vld [vmem:[#allocation4 + $0x120] sm:$0xff]
    %v1426 = vld [vmem:[#allocation4 + $0x128] sm:$0xff]
    %v1427 = vld [vmem:[#allocation4 + $0x130] sm:$0xff]
    %v1428 = vld [vmem:[#allocation4 + $0x138] sm:$0xff]
    %v1429 = vld [vmem:[#allocation4 + $0x140] sm:$0xff]
    %v1430 = vld [vmem:[#allocation4 + $0x148] sm:$0xff]
    %v1431 = vld [vmem:[#allocation4 + $0x150] sm:$0xff]
    %v1432 = vld [vmem:[#allocation4 + $0x158] sm:$0xff]
    %v1433 = vld [vmem:[#allocation4 + $0x160] sm:$0xff]
    %v1434 = vld [vmem:[#allocation4 + $0x168] sm:$0xff]
    %v1435 = vld [vmem:[#allocation4 + $0x170] sm:$0xff]
    %v1436 = vld [vmem:[#allocation4 + $0x178] sm:$0xff]
    %v1437 = vld [vmem:[#allocation4 + $0x180] sm:$0xff]
    %v1438 = vld [vmem:[#allocation4 + $0x188] sm:$0xff]
    %v1439 = vld [vmem:[#allocation4 + $0x190] sm:$0xff]
    %v1440 = vld [vmem:[#allocation4 + $0x198] sm:$0xff]
    %v1441 = vld [vmem:[#allocation4 + $0x1a0] sm:$0xff]
    %v1442 = vld [vmem:[#allocation4 + $0x1a8] sm:$0xff]
    %v1443 = vld [vmem:[#allocation4 + $0x1b0] sm:$0xff]
    %v1444 = vld [vmem:[#allocation4 + $0x1b8] sm:$0xff]
    %v1445 = vld [vmem:[#allocation4 + $0x1c0] sm:$0xff]
    %v1446 = vld [vmem:[#allocation4 + $0x1c8] sm:$0xff]
    %v1447 = vld [vmem:[#allocation4 + $0x1d0] sm:$0xff]
    %v1448 = vld [vmem:[#allocation4 + $0x1d8] sm:$0xff]
    %v1449 = vld [vmem:[#allocation4 + $0x1e0] sm:$0xff]
    %v1450 = vld [vmem:[#allocation4 + $0x1e8] sm:$0xff]
    %v1451 = vld [vmem:[#allocation4 + $0x1f0] sm:$0xff]
    %v1452 = vld [vmem:[#allocation4 + $0x1f8] sm:$0xff]
    %1453 = vmatprep.subr.mxu0 %v1450
    %1454 = vmatpush1.msra.mxu0 %v1449
    %1455 = vmatprep.subr.mxu0 %v1446
    %1456 = vmatpush1.msra.mxu0 %v1445
    %1457 = vmatprep.subr.mxu0 %v1442
    %1458 = vmatpush1.msra.mxu0 %v1441
    %1459 = vmatprep.subr.mxu0 %v1438
    %1460 = vmatpush1.msra.mxu0 %v1437
    %1461 = vmatprep.subr.mxu0 %v1434
    %1462 = vmatpush1.msra.mxu0 %v1433
    %1463 = vmatprep.subr.mxu0 %v1430
    %1464 = vmatpush1.msra.mxu0 %v1429
    %1465 = vmatprep.subr.mxu0 %v1426
    %1466 = vmatpush1.msra.mxu0 %v1425
    %1467 = vmatprep.subr.mxu0 %v1422
    %1468 = vmatpush1.msra.mxu0 %v1421
    %1469 = vmatprep.subr.mxu0 %v1418
    %1470 = vmatpush1.msra.mxu0 %v1417
    %1471 = vmatprep.subr.mxu0 %v1414
    %1472 = vmatpush1.msra.mxu0 %v1413
    %1473 = vmatprep.subr.mxu0 %v1410
    %1474 = vmatpush1.msra.mxu0 %v1409
    %1475 = vmatprep.subr.mxu0 %v1406
    %1476 = vmatpush1.msra.mxu0 %v1405
    %1477 = vmatprep.subr.mxu0 %v1402
    %1478 = vmatpush1.msra.mxu0 %v1401
    %1479 = vmatprep.subr.mxu0 %v1398
    %1480 = vmatpush1.msra.mxu0 %v1397
    %1481 = vmatprep.subr.mxu0 %v1394
    %1482 = vmatpush1.msra.mxu0 %v1393
    %1483 = vmatprep.subr.mxu0 %v1390
    %1484 = vmatpush1.msra.mxu0 %v1389
    %1485 = vmatprep.subr.mxu0 0.0
    %1486 = vmatpush2.msra.mxu0 0.0
    %1487 = vmatprep.subr.mxu0 0.0
    %1488 = vmatpush2.msra.mxu0 0.0
    %1489 = vmatprep.subr.mxu0 0.0
    %1490 = vmatpush2.msra.mxu0 0.0
    %1491 = vmatprep.subr.mxu0 0.0
    %1492 = vmatpush2.msra.mxu0 0.0
    %1493 = vmatprep.subr.mxu0 0.0
    %1494 = vmatpush2.msra.mxu0 0.0
    %1495 = vmatprep.subr.mxu0 0.0
    %1496 = vmatpush2.msra.mxu0 0.0
    %1497 = vmatprep.subr.mxu0 0.0
    %1498 = vmatpush2.msra.mxu0 0.0
    %1499 = vmatprep.subr.mxu0 0.0
    %1500 = vmatpush2.msra.mxu0 0.0
    %1501 = vmatprep.subr.mxu0 0.0
    %1502 = vmatpush2.msra.mxu0 0.0
    %1503 = vmatprep.subr.mxu0 0.0
    %1504 = vmatpush2.msra.mxu0 0.0
    %1505 = vmatprep.subr.mxu0 0.0
    %1506 = vmatpush2.msra.mxu0 0.0
    %1507 = vmatprep.subr.mxu0 0.0
    %1508 = vmatpush2.msra.mxu0 0.0
    %1509 = vmatprep.subr.mxu0 0.0
    %1510 = vmatpush2.msra.mxu0 0.0
    %1511 = vmatprep.subr.mxu0 0.0
    %1512 = vmatpush2.msra.mxu0 0.0
    %1513 = vmatprep.subr.mxu0 0.0
    %1514 = vmatpush2.msra.mxu0 0.0
    %1515 = vmatprep.subr.mxu0 0.0
    %1516 = vmatpush2.msra.mxu0 0.0
    %1517 = vmatprep.mubr.f32.mxu0 0.0
    %1518 = vmatmul.mubr.f32.gmra.mxu0 %v1383
    %v1519 = vpop.f32.mrf.mxu0
    %v1520 = vadd.f32 0.0, %v1519
    %v1521 = vpop.f32.mrf.mxu0
    %v1522 = vadd.f32 0.0, %v1521
    %1523 = vdwg.mxu0
    %1524 = vmatprep.subr.mxu0 %v1452
    %1525 = vmatpush1.msra.mxu0 %v1451
    %1526 = vmatprep.subr.mxu0 %v1448
    %1527 = vmatpush1.msra.mxu0 %v1447
    %1528 = vmatprep.subr.mxu0 %v1444
    %1529 = vmatpush1.msra.mxu0 %v1443
    %1530 = vmatprep.subr.mxu0 %v1440
    %1531 = vmatpush1.msra.mxu0 %v1439
    %1532 = vmatprep.subr.mxu0 %v1436
    %1533 = vmatpush1.msra.mxu0 %v1435
    %1534 = vmatprep.subr.mxu0 %v1432
    %1535 = vmatpush1.msra.mxu0 %v1431
    %1536 = vmatprep.subr.mxu0 %v1428
    %1537 = vmatpush1.msra.mxu0 %v1427
    %1538 = vmatprep.subr.mxu0 %v1424
    %1539 = vmatpush1.msra.mxu0 %v1423
    %1540 = vmatprep.subr.mxu0 %v1420
    %1541 = vmatpush1.msra.mxu0 %v1419
    %1542 = vmatprep.subr.mxu0 %v1416
    %1543 = vmatpush1.msra.mxu0 %v1415
    %1544 = vmatprep.subr.mxu0 %v1412
    %1545 = vmatpush1.msra.mxu0 %v1411
    %1546 = vmatprep.subr.mxu0 %v1408
    %1547 = vmatpush1.msra.mxu0 %v1407
    %1548 = vmatprep.subr.mxu0 %v1404
    %1549 = vmatpush1.msra.mxu0 %v1403
    %1550 = vmatprep.subr.mxu0 %v1400
    %1551 = vmatpush1.msra.mxu0 %v1399
    %1552 = vmatprep.subr.mxu0 %v1396
    %1553 = vmatpush1.msra.mxu0 %v1395
    %1554 = vmatprep.subr.mxu0 %v1392
    %1555 = vmatpush1.msra.mxu0 %v1391
    %1556 = vmatprep.subr.mxu0 0.0
    %1557 = vmatpush2.msra.mxu0 0.0
    %1558 = vmatprep.subr.mxu0 0.0
    %1559 = vmatpush2.msra.mxu0 0.0
    %1560 = vmatprep.subr.mxu0 0.0
    %1561 = vmatpush2.msra.mxu0 0.0
    %1562 = vmatprep.subr.mxu0 0.0
    %1563 = vmatpush2.msra.mxu0 0.0
    %1564 = vmatprep.subr.mxu0 0.0
    %1565 = vmatpush2.msra.mxu0 0.0
    %1566 = vmatprep.subr.mxu0 0.0
    %1567 = vmatpush2.msra.mxu0 0.0
    %1568 = vmatprep.subr.mxu0 0.0
    %1569 = vmatpush2.msra.mxu0 0.0
    %1570 = vmatprep.subr.mxu0 0.0
    %1571 = vmatpush2.msra.mxu0 0.0
    %1572 = vmatprep.subr.mxu0 0.0
    %1573 = vmatpush2.msra.mxu0 0.0
    %1574 = vmatprep.subr.mxu0 0.0
    %1575 = vmatpush2.msra.mxu0 0.0
    %1576 = vmatprep.subr.mxu0 0.0
    %1577 = vmatpush2.msra.mxu0 0.0
    %1578 = vmatprep.subr.mxu0 0.0
    %1579 = vmatpush2.msra.mxu0 0.0
    %1580 = vmatprep.subr.mxu0 0.0
    %1581 = vmatpush2.msra.mxu0 0.0
    %1582 = vmatprep.subr.mxu0 0.0
    %1583 = vmatpush2.msra.mxu0 0.0
    %1584 = vmatprep.subr.mxu0 0.0
    %1585 = vmatpush2.msra.mxu0 0.0
    %1586 = vmatprep.subr.mxu0 0.0
    %1587 = vmatpush2.msra.mxu0 0.0
    %1588 = vmatprep.mubr.f32.mxu0 0.0
    %1589 = vmatmul.mubr.f32.gmra.mxu0 %v1383
    %v1590 = vpop.f32.mrf.mxu0
    %v1591 = vadd.f32 0.0, %v1590
    %v1592 = vpop.f32.mrf.mxu0
    %v1593 = vadd.f32 0.0, %v1592
    %1594 = vdwg.mxu0
    %v1595 = vadd.f32 %v1385, %v1520
    %v1596 = vadd.f32 %v1386, %v1522
    %v1597 = vadd.f32 %v1387, %v1591
    %v1598 = vadd.f32 %v1388, %v1593
    %v1599 = vxor.u32 %v1595, 2147483648
    %v1600 = vmul.f32 %v1599, 1.442695
    %v1601 = vpow.pop %v1600
    %v1602 = vadd.f32 %v1601, 1.0
    %v1603 = vrcp.pop %v1602
    %v1604 = vmul.f32 1.0, %v1603
    %v1605 = vtanh.pop %v1597
    %v1606 = vxor.u32 %v1598, 2147483648
    %v1607 = vmul.f32 %v1606, 1.442695
    %v1608 = vpow.pop %v1607
    %v1609 = vadd.f32 %v1608, 1.0
    %v1610 = vrcp.pop %v1609
    %v1611 = vmul.f32 1.0, %v1610
    %v1612 = vxor.u32 %v1596, 2147483648
    %v1613 = vmul.f32 %v1612, 1.442695
    %v1614 = vpow.pop %v1613
    %v1615 = vadd.f32 %v1614, 1.0
    %v1616 = vrcp.pop %v1615
    %v1617 = vmul.f32 1.0, %v1616
    %v1618 = vmul.f32 %v1617, %v1381
    %v1619 = vmul.f32 %v1604, %v1605
    %v1620 = vadd.f32 %v1618, %v1619
    %v1621 = vtanh.pop %v1620
    %v1622 = vmul.f32 %v1611, %v1621
    %1623 = vst [vmem:[#allocation3 + $0x28] sm:$0xff] %v1622
    %v1624 = vld [vmem:[#allocation2 + $0xc0] sm:$0xff]
    %v1625 = vld [vmem:[#allocation2 + $0xc8] sm:$0xff]
    %v1626 = vld [vmem:[#allocation2 + $0xd0] sm:$0xff]
    %v1627 = vld [vmem:[#allocation2 + $0xd8] sm:$0xff]
    %v1628 = vld [vmem:[#allocation4] sm:$0xff]
    %v1629 = vld [vmem:[#allocation4 + $0x8] sm:$0xff]
    %v1630 = vld [vmem:[#allocation4 + $0x10] sm:$0xff]
    %v1631 = vld [vmem:[#allocation4 + $0x18] sm:$0xff]
    %v1632 = vld [vmem:[#allocation4 + $0x20] sm:$0xff]
    %v1633 = vld [vmem:[#allocation4 + $0x28] sm:$0xff]
    %v1634 = vld [vmem:[#allocation4 + $0x30] sm:$0xff]
    %v1635 = vld [vmem:[#allocation4 + $0x38] sm:$0xff]
    %v1636 = vld [vmem:[#allocation4 + $0x40] sm:$0xff]
    %v1637 = vld [vmem:[#allocation4 + $0x48] sm:$0xff]
    %v1638 = vld [vmem:[#allocation4 + $0x50] sm:$0xff]
    %v1639 = vld [vmem:[#allocation4 + $0x58] sm:$0xff]
    %v1640 = vld [vmem:[#allocation4 + $0x60] sm:$0xff]
    %v1641 = vld [vmem:[#allocation4 + $0x68] sm:$0xff]
    %v1642 = vld [vmem:[#allocation4 + $0x70] sm:$0xff]
    %v1643 = vld [vmem:[#allocation4 + $0x78] sm:$0xff]
    %v1644 = vld [vmem:[#allocation4 + $0x80] sm:$0xff]
    %v1645 = vld [vmem:[#allocation4 + $0x88] sm:$0xff]
    %v1646 = vld [vmem:[#allocation4 + $0x90] sm:$0xff]
    %v1647 = vld [vmem:[#allocation4 + $0x98] sm:$0xff]
    %v1648 = vld [vmem:[#allocation4 + $0xa0] sm:$0xff]
    %v1649 = vld [vmem:[#allocation4 + $0xa8] sm:$0xff]
    %v1650 = vld [vmem:[#allocation4 + $0xb0] sm:$0xff]
    %v1651 = vld [vmem:[#allocation4 + $0xb8] sm:$0xff]
    %v1652 = vld [vmem:[#allocation4 + $0xc0] sm:$0xff]
    %v1653 = vld [vmem:[#allocation4 + $0xc8] sm:$0xff]
    %v1654 = vld [vmem:[#allocation4 + $0xd0] sm:$0xff]
    %v1655 = vld [vmem:[#allocation4 + $0xd8] sm:$0xff]
    %v1656 = vld [vmem:[#allocation4 + $0xe0] sm:$0xff]
    %v1657 = vld [vmem:[#allocation4 + $0xe8] sm:$0xff]
    %v1658 = vld [vmem:[#allocation4 + $0xf0] sm:$0xff]
    %v1659 = vld [vmem:[#allocation4 + $0xf8] sm:$0xff]
    %v1660 = vld [vmem:[#allocation4 + $0x100] sm:$0xff]
    %v1661 = vld [vmem:[#allocation4 + $0x108] sm:$0xff]
    %v1662 = vld [vmem:[#allocation4 + $0x110] sm:$0xff]
    %v1663 = vld [vmem:[#allocation4 + $0x118] sm:$0xff]
    %v1664 = vld [vmem:[#allocation4 + $0x120] sm:$0xff]
    %v1665 = vld [vmem:[#allocation4 + $0x128] sm:$0xff]
    %v1666 = vld [vmem:[#allocation4 + $0x130] sm:$0xff]
    %v1667 = vld [vmem:[#allocation4 + $0x138] sm:$0xff]
    %v1668 = vld [vmem:[#allocation4 + $0x140] sm:$0xff]
    %v1669 = vld [vmem:[#allocation4 + $0x148] sm:$0xff]
    %v1670 = vld [vmem:[#allocation4 + $0x150] sm:$0xff]
    %v1671 = vld [vmem:[#allocation4 + $0x158] sm:$0xff]
    %v1672 = vld [vmem:[#allocation4 + $0x160] sm:$0xff]
    %v1673 = vld [vmem:[#allocation4 + $0x168] sm:$0xff]
    %v1674 = vld [vmem:[#allocation4 + $0x170] sm:$0xff]
    %v1675 = vld [vmem:[#allocation4 + $0x178] sm:$0xff]
    %v1676 = vld [vmem:[#allocation4 + $0x180] sm:$0xff]
    %v1677 = vld [vmem:[#allocation4 + $0x188] sm:$0xff]
    %v1678 = vld [vmem:[#allocation4 + $0x190] sm:$0xff]
    %v1679 = vld [vmem:[#allocation4 + $0x198] sm:$0xff]
    %v1680 = vld [vmem:[#allocation4 + $0x1a0] sm:$0xff]
    %v1681 = vld [vmem:[#allocation4 + $0x1a8] sm:$0xff]
    %v1682 = vld [vmem:[#allocation4 + $0x1b0] sm:$0xff]
    %v1683 = vld [vmem:[#allocation4 + $0x1b8] sm:$0xff]
    %v1684 = vld [vmem:[#allocation4 + $0x1c0] sm:$0xff]
    %v1685 = vld [vmem:[#allocation4 + $0x1c8] sm:$0xff]
    %v1686 = vld [vmem:[#allocation4 + $0x1d0] sm:$0xff]
    %v1687 = vld [vmem:[#allocation4 + $0x1d8] sm:$0xff]
    %v1688 = vld [vmem:[#allocation4 + $0x1e0] sm:$0xff]
    %v1689 = vld [vmem:[#allocation4 + $0x1e8] sm:$0xff]
    %v1690 = vld [vmem:[#allocation4 + $0x1f0] sm:$0xff]
    %v1691 = vld [vmem:[#allocation4 + $0x1f8] sm:$0xff]
    %1692 = vmatprep.subr.mxu0 %v1689
    %1693 = vmatpush1.msra.mxu0 %v1688
    %1694 = vmatprep.subr.mxu0 %v1685
    %1695 = vmatpush1.msra.mxu0 %v1684
    %1696 = vmatprep.subr.mxu0 %v1681
    %1697 = vmatpush1.msra.mxu0 %v1680
    %1698 = vmatprep.subr.mxu0 %v1677
    %1699 = vmatpush1.msra.mxu0 %v1676
    %1700 = vmatprep.subr.mxu0 %v1673
    %1701 = vmatpush1.msra.mxu0 %v1672
    %1702 = vmatprep.subr.mxu0 %v1669
    %1703 = vmatpush1.msra.mxu0 %v1668
    %1704 = vmatprep.subr.mxu0 %v1665
    %1705 = vmatpush1.msra.mxu0 %v1664
    %1706 = vmatprep.subr.mxu0 %v1661
    %1707 = vmatpush1.msra.mxu0 %v1660
    %1708 = vmatprep.subr.mxu0 %v1657
    %1709 = vmatpush1.msra.mxu0 %v1656
    %1710 = vmatprep.subr.mxu0 %v1653
    %1711 = vmatpush1.msra.mxu0 %v1652
    %1712 = vmatprep.subr.mxu0 %v1649
    %1713 = vmatpush1.msra.mxu0 %v1648
    %1714 = vmatprep.subr.mxu0 %v1645
    %1715 = vmatpush1.msra.mxu0 %v1644
    %1716 = vmatprep.subr.mxu0 %v1641
    %1717 = vmatpush1.msra.mxu0 %v1640
    %1718 = vmatprep.subr.mxu0 %v1637
    %1719 = vmatpush1.msra.mxu0 %v1636
    %1720 = vmatprep.subr.mxu0 %v1633
    %1721 = vmatpush1.msra.mxu0 %v1632
    %1722 = vmatprep.subr.mxu0 %v1629
    %1723 = vmatpush1.msra.mxu0 %v1628
    %1724 = vmatprep.subr.mxu0 0.0
    %1725 = vmatpush2.msra.mxu0 0.0
    %1726 = vmatprep.subr.mxu0 0.0
    %1727 = vmatpush2.msra.mxu0 0.0
    %1728 = vmatprep.subr.mxu0 0.0
    %1729 = vmatpush2.msra.mxu0 0.0
    %1730 = vmatprep.subr.mxu0 0.0
    %1731 = vmatpush2.msra.mxu0 0.0
    %1732 = vmatprep.subr.mxu0 0.0
    %1733 = vmatpush2.msra.mxu0 0.0
    %1734 = vmatprep.subr.mxu0 0.0
    %1735 = vmatpush2.msra.mxu0 0.0
    %1736 = vmatprep.subr.mxu0 0.0
    %1737 = vmatpush2.msra.mxu0 0.0
    %1738 = vmatprep.subr.mxu0 0.0
    %1739 = vmatpush2.msra.mxu0 0.0
    %1740 = vmatprep.subr.mxu0 0.0
    %1741 = vmatpush2.msra.mxu0 0.0
    %1742 = vmatprep.subr.mxu0 0.0
    %1743 = vmatpush2.msra.mxu0 0.0
    %1744 = vmatprep.subr.mxu0 0.0
    %1745 = vmatpush2.msra.mxu0 0.0
    %1746 = vmatprep.subr.mxu0 0.0
    %1747 = vmatpush2.msra.mxu0 0.0
    %1748 = vmatprep.subr.mxu0 0.0
    %1749 = vmatpush2.msra.mxu0 0.0
    %1750 = vmatprep.subr.mxu0 0.0
    %1751 = vmatpush2.msra.mxu0 0.0
    %1752 = vmatprep.subr.mxu0 0.0
    %1753 = vmatpush2.msra.mxu0 0.0
    %1754 = vmatprep.subr.mxu0 0.0
    %1755 = vmatpush2.msra.mxu0 0.0
    %1756 = vmatprep.mubr.f32.mxu0 0.0
    %1757 = vmatmul.mubr.f32.gmra.mxu0 %v1622
    %v1758 = vpop.f32.mrf.mxu0
    %v1759 = vadd.f32 0.0, %v1758
    %v1760 = vpop.f32.mrf.mxu0
    %v1761 = vadd.f32 0.0, %v1760
    %1762 = vdwg.mxu0
    %1763 = vmatprep.subr.mxu0 %v1691
    %1764 = vmatpush1.msra.mxu0 %v1690
    %1765 = vmatprep.subr.mxu0 %v1687
    %1766 = vmatpush1.msra.mxu0 %v1686
    %1767 = vmatprep.subr.mxu0 %v1683
    %1768 = vmatpush1.msra.mxu0 %v1682
    %1769 = vmatprep.subr.mxu0 %v1679
    %1770 = vmatpush1.msra.mxu0 %v1678
    %1771 = vmatprep.subr.mxu0 %v1675
    %1772 = vmatpush1.msra.mxu0 %v1674
    %1773 = vmatprep.subr.mxu0 %v1671
    %1774 = vmatpush1.msra.mxu0 %v1670
    %1775 = vmatprep.subr.mxu0 %v1667
    %1776 = vmatpush1.msra.mxu0 %v1666
    %1777 = vmatprep.subr.mxu0 %v1663
    %1778 = vmatpush1.msra.mxu0 %v1662
    %1779 = vmatprep.subr.mxu0 %v1659
    %1780 = vmatpush1.msra.mxu0 %v1658
    %1781 = vmatprep.subr.mxu0 %v1655
    %1782 = vmatpush1.msra.mxu0 %v1654
    %1783 = vmatprep.subr.mxu0 %v1651
    %1784 = vmatpush1.msra.mxu0 %v1650
    %1785 = vmatprep.subr.mxu0 %v1647
    %1786 = vmatpush1.msra.mxu0 %v1646
    %1787 = vmatprep.subr.mxu0 %v1643
    %1788 = vmatpush1.msra.mxu0 %v1642
    %1789 = vmatprep.subr.mxu0 %v1639
    %1790 = vmatpush1.msra.mxu0 %v1638
    %1791 = vmatprep.subr.mxu0 %v1635
    %1792 = vmatpush1.msra.mxu0 %v1634
    %1793 = vmatprep.subr.mxu0 %v1631
    %1794 = vmatpush1.msra.mxu0 %v1630
    %1795 = vmatprep.subr.mxu0 0.0
    %1796 = vmatpush2.msra.mxu0 0.0
    %1797 = vmatprep.subr.mxu0 0.0
    %1798 = vmatpush2.msra.mxu0 0.0
    %1799 = vmatprep.subr.mxu0 0.0
    %1800 = vmatpush2.msra.mxu0 0.0
    %1801 = vmatprep.subr.mxu0 0.0
    %1802 = vmatpush2.msra.mxu0 0.0
    %1803 = vmatprep.subr.mxu0 0.0
    %1804 = vmatpush2.msra.mxu0 0.0
    %1805 = vmatprep.subr.mxu0 0.0
    %1806 = vmatpush2.msra.mxu0 0.0
    %1807 = vmatprep.subr.mxu0 0.0
    %1808 = vmatpush2.msra.mxu0 0.0
    %1809 = vmatprep.subr.mxu0 0.0
    %1810 = vmatpush2.msra.mxu0 0.0
    %1811 = vmatprep.subr.mxu0 0.0
    %1812 = vmatpush2.msra.mxu0 0.0
    %1813 = vmatprep.subr.mxu0 0.0
    %1814 = vmatpush2.msra.mxu0 0.0
    %1815 = vmatprep.subr.mxu0 0.0
    %1816 = vmatpush2.msra.mxu0 0.0
    %1817 = vmatprep.subr.mxu0 0.0
    %1818 = vmatpush2.msra.mxu0 0.0
    %1819 = vmatprep.subr.mxu0 0.0
    %1820 = vmatpush2.msra.mxu0 0.0
    %1821 = vmatprep.subr.mxu0 0.0
    %1822 = vmatpush2.msra.mxu0 0.0
    %1823 = vmatprep.subr.mxu0 0.0
    %1824 = vmatpush2.msra.mxu0 0.0
    %1825 = vmatprep.subr.mxu0 0.0
    %1826 = vmatpush2.msra.mxu0 0.0
    %1827 = vmatprep.mubr.f32.mxu0 0.0
    %1828 = vmatmul.mubr.f32.gmra.mxu0 %v1622
    %v1829 = vpop.f32.mrf.mxu0
    %v1830 = vadd.f32 0.0, %v1829
    %v1831 = vpop.f32.mrf.mxu0
    %v1832 = vadd.f32 0.0, %v1831
    %1833 = vdwg.mxu0
    %v1834 = vadd.f32 %v1624, %v1759
    %v1835 = vadd.f32 %v1625, %v1761
    %v1836 = vadd.f32 %v1626, %v1830
    %v1837 = vadd.f32 %v1627, %v1832
    %v1838 = vxor.u32 %v1834, 2147483648
    %v1839 = vmul.f32 %v1838, 1.442695
    %v1840 = vpow.pop %v1839
    %v1841 = vadd.f32 %v1840, 1.0
    %v1842 = vrcp.pop %v1841
    %v1843 = vmul.f32 1.0, %v1842
    %v1844 = vtanh.pop %v1836
    %v1845 = vxor.u32 %v1837, 2147483648
    %v1846 = vmul.f32 %v1845, 1.442695
    %v1847 = vpow.pop %v1846
    %v1848 = vadd.f32 %v1847, 1.0
    %v1849 = vrcp.pop %v1848
    %v1850 = vmul.f32 1.0, %v1849
    %v1851 = vxor.u32 %v1835, 2147483648
    %v1852 = vmul.f32 %v1851, 1.442695
    %v1853 = vpow.pop %v1852
    %v1854 = vadd.f32 %v1853, 1.0
    %v1855 = vrcp.pop %v1854
    %v1856 = vmul.f32 1.0, %v1855
    %v1857 = vmul.f32 %v1856, %v1620
    %v1858 = vmul.f32 %v1843, %v1844
    %v1859 = vadd.f32 %v1857, %v1858
    %v1860 = vtanh.pop %v1859
    %v1861 = vmul.f32 %v1850, %v1860
    %1862 = vst [vmem:[#allocation3 + $0x30] sm:$0xff] %v1861
    %v1863 = vld [vmem:[#allocation2 + $0xe0] sm:$0xff]
    %v1864 = vld [vmem:[#allocation2 + $0xe8] sm:$0xff]
    %v1865 = vld [vmem:[#allocation2 + $0xf0] sm:$0xff]
    %v1866 = vld [vmem:[#allocation2 + $0xf8] sm:$0xff]
    %v1867 = vld [vmem:[#allocation4] sm:$0xff]
    %v1868 = vld [vmem:[#allocation4 + $0x8] sm:$0xff]
    %v1869 = vld [vmem:[#allocation4 + $0x10] sm:$0xff]
    %v1870 = vld [vmem:[#allocation4 + $0x18] sm:$0xff]
    %v1871 = vld [vmem:[#allocation4 + $0x20] sm:$0xff]
    %v1872 = vld [vmem:[#allocation4 + $0x28] sm:$0xff]
    %v1873 = vld [vmem:[#allocation4 + $0x30] sm:$0xff]
    %v1874 = vld [vmem:[#allocation4 + $0x38] sm:$0xff]
    %v1875 = vld [vmem:[#allocation4 + $0x40] sm:$0xff]
    %v1876 = vld [vmem:[#allocation4 + $0x48] sm:$0xff]
    %v1877 = vld [vmem:[#allocation4 + $0x50] sm:$0xff]
    %v1878 = vld [vmem:[#allocation4 + $0x58] sm:$0xff]
    %v1879 = vld [vmem:[#allocation4 + $0x60] sm:$0xff]
    %v1880 = vld [vmem:[#allocation4 + $0x68] sm:$0xff]
    %v1881 = vld [vmem:[#allocation4 + $0x70] sm:$0xff]
    %v1882 = vld [vmem:[#allocation4 + $0x78] sm:$0xff]
    %v1883 = vld [vmem:[#allocation4 + $0x80] sm:$0xff]
    %v1884 = vld [vmem:[#allocation4 + $0x88] sm:$0xff]
    %v1885 = vld [vmem:[#allocation4 + $0x90] sm:$0xff]
    %v1886 = vld [vmem:[#allocation4 + $0x98] sm:$0xff]
    %v1887 = vld [vmem:[#allocation4 + $0xa0] sm:$0xff]
    %v1888 = vld [vmem:[#allocation4 + $0xa8] sm:$0xff]
    %v1889 = vld [vmem:[#allocation4 + $0xb0] sm:$0xff]
    %v1890 = vld [vmem:[#allocation4 + $0xb8] sm:$0xff]
    %v1891 = vld [vmem:[#allocation4 + $0xc0] sm:$0xff]
    %v1892 = vld [vmem:[#allocation4 + $0xc8] sm:$0xff]
    %v1893 = vld [vmem:[#allocation4 + $0xd0] sm:$0xff]
    %v1894 = vld [vmem:[#allocation4 + $0xd8] sm:$0xff]
    %v1895 = vld [vmem:[#allocation4 + $0xe0] sm:$0xff]
    %v1896 = vld [vmem:[#allocation4 + $0xe8] sm:$0xff]
    %v1897 = vld [vmem:[#allocation4 + $0xf0] sm:$0xff]
    %v1898 = vld [vmem:[#allocation4 + $0xf8] sm:$0xff]
    %v1899 = vld [vmem:[#allocation4 + $0x100] sm:$0xff]
    %v1900 = vld [vmem:[#allocation4 + $0x108] sm:$0xff]
    %v1901 = vld [vmem:[#allocation4 + $0x110] sm:$0xff]
    %v1902 = vld [vmem:[#allocation4 + $0x118] sm:$0xff]
    %v1903 = vld [vmem:[#allocation4 + $0x120] sm:$0xff]
    %v1904 = vld [vmem:[#allocation4 + $0x128] sm:$0xff]
    %v1905 = vld [vmem:[#allocation4 + $0x130] sm:$0xff]
    %v1906 = vld [vmem:[#allocation4 + $0x138] sm:$0xff]
    %v1907 = vld [vmem:[#allocation4 + $0x140] sm:$0xff]
    %v1908 = vld [vmem:[#allocation4 + $0x148] sm:$0xff]
    %v1909 = vld [vmem:[#allocation4 + $0x150] sm:$0xff]
    %v1910 = vld [vmem:[#allocation4 + $0x158] sm:$0xff]
    %v1911 = vld [vmem:[#allocation4 + $0x160] sm:$0xff]
    %v1912 = vld [vmem:[#allocation4 + $0x168] sm:$0xff]
    %v1913 = vld [vmem:[#allocation4 + $0x170] sm:$0xff]
    %v1914 = vld [vmem:[#allocation4 + $0x178] sm:$0xff]
    %v1915 = vld [vmem:[#allocation4 + $0x180] sm:$0xff]
    %v1916 = vld [vmem:[#allocation4 + $0x188] sm:$0xff]
    %v1917 = vld [vmem:[#allocation4 + $0x190] sm:$0xff]
    %v1918 = vld [vmem:[#allocation4 + $0x198] sm:$0xff]
    %v1919 = vld [vmem:[#allocation4 + $0x1a0] sm:$0xff]
    %v1920 = vld [vmem:[#allocation4 + $0x1a8] sm:$0xff]
    %v1921 = vld [vmem:[#allocation4 + $0x1b0] sm:$0xff]
    %v1922 = vld [vmem:[#allocation4 + $0x1b8] sm:$0xff]
    %v1923 = vld [vmem:[#allocation4 + $0x1c0] sm:$0xff]
    %v1924 = vld [vmem:[#allocation4 + $0x1c8] sm:$0xff]
    %v1925 = vld [vmem:[#allocation4 + $0x1d0] sm:$0xff]
    %v1926 = vld [vmem:[#allocation4 + $0x1d8] sm:$0xff]
    %v1927 = vld [vmem:[#allocation4 + $0x1e0] sm:$0xff]
    %v1928 = vld [vmem:[#allocation4 + $0x1e8] sm:$0xff]
    %v1929 = vld [vmem:[#allocation4 + $0x1f0] sm:$0xff]
    %v1930 = vld [vmem:[#allocation4 + $0x1f8] sm:$0xff]
    %1931 = vmatprep.subr.mxu0 %v1928
    %1932 = vmatpush1.msra.mxu0 %v1927
    %1933 = vmatprep.subr.mxu0 %v1924
    %1934 = vmatpush1.msra.mxu0 %v1923
    %1935 = vmatprep.subr.mxu0 %v1920
    %1936 = vmatpush1.msra.mxu0 %v1919
    %1937 = vmatprep.subr.mxu0 %v1916
    %1938 = vmatpush1.msra.mxu0 %v1915
    %1939 = vmatprep.subr.mxu0 %v1912
    %1940 = vmatpush1.msra.mxu0 %v1911
    %1941 = vmatprep.subr.mxu0 %v1908
    %1942 = vmatpush1.msra.mxu0 %v1907
    %1943 = vmatprep.subr.mxu0 %v1904
    %1944 = vmatpush1.msra.mxu0 %v1903
    %1945 = vmatprep.subr.mxu0 %v1900
    %1946 = vmatpush1.msra.mxu0 %v1899
    %1947 = vmatprep.subr.mxu0 %v1896
    %1948 = vmatpush1.msra.mxu0 %v1895
    %1949 = vmatprep.subr.mxu0 %v1892
    %1950 = vmatpush1.msra.mxu0 %v1891
    %1951 = vmatprep.subr.mxu0 %v1888
    %1952 = vmatpush1.msra.mxu0 %v1887
    %1953 = vmatprep.subr.mxu0 %v1884
    %1954 = vmatpush1.msra.mxu0 %v1883
    %1955 = vmatprep.subr.mxu0 %v1880
    %1956 = vmatpush1.msra.mxu0 %v1879
    %1957 = vmatprep.subr.mxu0 %v1876
    %1958 = vmatpush1.msra.mxu0 %v1875
    %1959 = vmatprep.subr.mxu0 %v1872
    %1960 = vmatpush1.msra.mxu0 %v1871
    %1961 = vmatprep.subr.mxu0 %v1868
    %1962 = vmatpush1.msra.mxu0 %v1867
    %1963 = vmatprep.subr.mxu0 0.0
    %1964 = vmatpush2.msra.mxu0 0.0
    %1965 = vmatprep.subr.mxu0 0.0
    %1966 = vmatpush2.msra.mxu0 0.0
    %1967 = vmatprep.subr.mxu0 0.0
    %1968 = vmatpush2.msra.mxu0 0.0
    %1969 = vmatprep.subr.mxu0 0.0
    %1970 = vmatpush2.msra.mxu0 0.0
    %1971 = vmatprep.subr.mxu0 0.0
    %1972 = vmatpush2.msra.mxu0 0.0
    %1973 = vmatprep.subr.mxu0 0.0
    %1974 = vmatpush2.msra.mxu0 0.0
    %1975 = vmatprep.subr.mxu0 0.0
    %1976 = vmatpush2.msra.mxu0 0.0
    %1977 = vmatprep.subr.mxu0 0.0
    %1978 = vmatpush2.msra.mxu0 0.0
    %1979 = vmatprep.subr.mxu0 0.0
    %1980 = vmatpush2.msra.mxu0 0.0
    %1981 = vmatprep.subr.mxu0 0.0
    %1982 = vmatpush2.msra.mxu0 0.0
    %1983 = vmatprep.subr.mxu0 0.0
    %1984 = vmatpush2.msra.mxu0 0.0
    %1985 = vmatprep.subr.mxu0 0.0
    %1986 = vmatpush2.msra.mxu0 0.0
    %1987 = vmatprep.subr.mxu0 0.0
    %1988 = vmatpush2.msra.mxu0 0.0
    %1989 = vmatprep.subr.mxu0 0.0
    %1990 = vmatpush2.msra.mxu0 0.0
    %1991 = vmatprep.subr.mxu0 0.0
    %1992 = vmatpush2.msra.mxu0 0.0
    %1993 = vmatprep.subr.mxu0 0.0
    %1994 = vmatpush2.msra.mxu0 0.0
    %1995 = vmatprep.mubr.f32.mxu0 0.0
    %1996 = vmatmul.mubr.f32.gmra.mxu0 %v1861
    %v1997 = vpop.f32.mrf.mxu0
    %v1998 = vadd.f32 0.0, %v1997
    %v1999 = vpop.f32.mrf.mxu0
    %v2000 = vadd.f32 0.0, %v1999
    %2001 = vdwg.mxu0
    %2002 = vmatprep.subr.mxu0 %v1930
    %2003 = vmatpush1.msra.mxu0 %v1929
    %2004 = vmatprep.subr.mxu0 %v1926
    %2005 = vmatpush1.msra.mxu0 %v1925
    %2006 = vmatprep.subr.mxu0 %v1922
    %2007 = vmatpush1.msra.mxu0 %v1921
    %2008 = vmatprep.subr.mxu0 %v1918
    %2009 = vmatpush1.msra.mxu0 %v1917
    %2010 = vmatprep.subr.mxu0 %v1914
    %2011 = vmatpush1.msra.mxu0 %v1913
    %2012 = vmatprep.subr.mxu0 %v1910
    %2013 = vmatpush1.msra.mxu0 %v1909
    %2014 = vmatprep.subr.mxu0 %v1906
    %2015 = vmatpush1.msra.mxu0 %v1905
    %2016 = vmatprep.subr.mxu0 %v1902
    %2017 = vmatpush1.msra.mxu0 %v1901
    %2018 = vmatprep.subr.mxu0 %v1898
    %2019 = vmatpush1.msra.mxu0 %v1897
    %2020 = vmatprep.subr.mxu0 %v1894
    %2021 = vmatpush1.msra.mxu0 %v1893
    %2022 = vmatprep.subr.mxu0 %v1890
    %2023 = vmatpush1.msra.mxu0 %v1889
    %2024 = vmatprep.subr.mxu0 %v1886
    %2025 = vmatpush1.msra.mxu0 %v1885
    %2026 = vmatprep.subr.mxu0 %v1882
    %2027 = vmatpush1.msra.mxu0 %v1881
    %2028 = vmatprep.subr.mxu0 %v1878
    %2029 = vmatpush1.msra.mxu0 %v1877
    %2030 = vmatprep.subr.mxu0 %v1874
    %2031 = vmatpush1.msra.mxu0 %v1873
    %2032 = vmatprep.subr.mxu0 %v1870
    %2033 = vmatpush1.msra.mxu0 %v1869
    %2034 = vmatprep.subr.mxu0 0.0
    %2035 = vmatpush2.msra.mxu0 0.0
    %2036 = vmatprep.subr.mxu0 0.0
    %2037 = vmatpush2.msra.mxu0 0.0
    %2038 = vmatprep.subr.mxu0 0.0
    %2039 = vmatpush2.msra.mxu0 0.0
    %2040 = vmatprep.subr.mxu0 0.0
    %2041 = vmatpush2.msra.mxu0 0.0
    %2042 = vmatprep.subr.mxu0 0.0
    %2043 = vmatpush2.msra.mxu0 0.0
    %2044 = vmatprep.subr.mxu0 0.0
    %2045 = vmatpush2.msra.mxu0 0.0
    %2046 = vmatprep.subr.mxu0 0.0
    %2047 = vmatpush2.msra.mxu0 0.0
    %2048 = vmatprep.subr.mxu0 0.0
    %2049 = vmatpush2.msra.mxu0 0.0
    %2050 = vmatprep.subr.mxu0 0.0
    %2051 = vmatpush2.msra.mxu0 0.0
    %2052 = vmatprep.subr.mxu0 0.0
    %2053 = vmatpush2.msra.mxu0 0.0
    %2054 = vmatprep.subr.mxu0 0.0
    %2055 = vmatpush2.msra.mxu0 0.0
    %2056 = vmatprep.subr.mxu0 0.0
    %2057 = vmatpush2.msra.mxu0 0.0
    %2058 = vmatprep.subr.mxu0 0.0
    %2059 = vmatpush2.msra.mxu0 0.0
    %2060 = vmatprep.subr.mxu0 0.0
    %2061 = vmatpush2.msra.mxu0 0.0
    %2062 = vmatprep.subr.mxu0 0.0
    %2063 = vmatpush2.msra.mxu0 0.0
    %2064 = vmatprep.subr.mxu0 0.0
    %2065 = vmatpush2.msra.mxu0 0.0
    %2066 = vmatprep.mubr.f32.mxu0 0.0
    %2067 = vmatmul.mubr.f32.gmra.mxu0 %v1861
    %v2068 = vpop.f32.mrf.mxu0
    %v2069 = vadd.f32 0.0, %v2068
    %v2070 = vpop.f32.mrf.mxu0
    %v2071 = vadd.f32 0.0, %v2070
    %2072 = vdwg.mxu0
    %v2073 = vadd.f32 %v1863, %v1998
    %v2074 = vadd.f32 %v1864, %v2000
    %v2075 = vadd.f32 %v1865, %v2069
    %v2076 = vadd.f32 %v1866, %v2071
    %v2077 = vxor.u32 %v2073, 2147483648
    %v2078 = vmul.f32 %v2077, 1.442695
    %v2079 = vpow.pop %v2078
    %v2080 = vadd.f32 %v2079, 1.0
    %v2081 = vrcp.pop %v2080
    %v2082 = vmul.f32 1.0, %v2081
    %v2083 = vtanh.pop %v2075
    %v2084 = vxor.u32 %v2076, 2147483648
    %v2085 = vmul.f32 %v2084, 1.442695
    %v2086 = vpow.pop %v2085
    %v2087 = vadd.f32 %v2086, 1.0
    %v2088 = vrcp.pop %v2087
    %v2089 = vmul.f32 1.0, %v2088
    %v2090 = vxor.u32 %v2074, 2147483648
    %v2091 = vmul.f32 %v2090, 1.442695
    %v2092 = vpow.pop %v2091
    %v2093 = vadd.f32 %v2092, 1.0
    %v2094 = vrcp.pop %v2093
    %v2095 = vmul.f32 1.0, %v2094
    %v2096 = vmul.f32 %v2095, %v1859
    %v2097 = vmul.f32 %v2082, %v2083
    %v2098 = vadd.f32 %v2096, %v2097
    %v2099 = vtanh.pop %v2098
    %v2100 = vmul.f32 %v2089, %v2099
    %2101 = vst [vmem:[#allocation3 + $0x38] sm:$0xff] %v2100
    %v2102 = vld [vmem:[#allocation3] sm:$0xff]
    %v2103 = vld [vmem:[#allocation3 + $0x8] sm:$0xff]
    %v2104 = vld [vmem:[#allocation3 + $0x10] sm:$0xff]
    %v2105 = vld [vmem:[#allocation3 + $0x18] sm:$0xff]
    %v2106 = vld [vmem:[#allocation3 + $0x20] sm:$0xff]
    %v2107 = vld [vmem:[#allocation3 + $0x28] sm:$0xff]
    %v2108 = vld [vmem:[#allocation3 + $0x30] sm:$0xff]
    %v2109 = vld [vmem:[#allocation3 + $0x38] sm:$0xff]
    %v2110 = vld [vmem:[#allocation7] sm:$0xff]
    %v2111 = vld [vmem:[#allocation7 + $0x8] sm:$0xff]
    %v2112 = vld [vmem:[#allocation7 + $0x10] sm:$0xff]
    %v2113 = vld [vmem:[#allocation7 + $0x18] sm:$0xff]
    %v2114 = vld [vmem:[#allocation7 + $0x20] sm:$0xff]
    %v2115 = vld [vmem:[#allocation7 + $0x28] sm:$0xff]
    %v2116 = vld [vmem:[#allocation7 + $0x30] sm:$0xff]
    %v2117 = vld [vmem:[#allocation7 + $0x38] sm:$0xff]
    %v2118 = vld [vmem:[#allocation7 + $0x40] sm:$0xff]
    %v2119 = vld [vmem:[#allocation7 + $0x48] sm:$0xff]
    %v2120 = vld [vmem:[#allocation7 + $0x50] sm:$0xff]
    %v2121 = vld [vmem:[#allocation7 + $0x58] sm:$0xff]
    %v2122 = vld [vmem:[#allocation7 + $0x60] sm:$0xff]
    %v2123 = vld [vmem:[#allocation7 + $0x68] sm:$0xff]
    %v2124 = vld [vmem:[#allocation7 + $0x70] sm:$0xff]
    %v2125 = vld [vmem:[#allocation7 + $0x78] sm:$0xff]
    %v2126 = vld [vmem:[#allocation7 + $0x80] sm:$0xff]
    %v2127 = vld [vmem:[#allocation7 + $0x88] sm:$0xff]
    %v2128 = vld [vmem:[#allocation7 + $0x90] sm:$0xff]
    %v2129 = vld [vmem:[#allocation7 + $0x98] sm:$0xff]
    %v2130 = vld [vmem:[#allocation7 + $0xa0] sm:$0xff]
    %v2131 = vld [vmem:[#allocation7 + $0xa8] sm:$0xff]
    %v2132 = vld [vmem:[#allocation7 + $0xb0] sm:$0xff]
    %v2133 = vld [vmem:[#allocation7 + $0xb8] sm:$0xff]
    %v2134 = vld [vmem:[#allocation7 + $0xc0] sm:$0xff]
    %v2135 = vld [vmem:[#allocation7 + $0xc8] sm:$0xff]
    %v2136 = vld [vmem:[#allocation7 + $0xd0] sm:$0xff]
    %v2137 = vld [vmem:[#allocation7 + $0xd8] sm:$0xff]
    %v2138 = vld [vmem:[#allocation7 + $0xe0] sm:$0xff]
    %v2139 = vld [vmem:[#allocation7 + $0xe8] sm:$0xff]
    %v2140 = vld [vmem:[#allocation7 + $0xf0] sm:$0xff]
    %v2141 = vld [vmem:[#allocation7 + $0xf8] sm:$0xff]
    %v2142 = vld [vmem:[#allocation7 + $0x100] sm:$0xff]
    %v2143 = vld [vmem:[#allocation7 + $0x108] sm:$0xff]
    %v2144 = vld [vmem:[#allocation7 + $0x110] sm:$0xff]
    %v2145 = vld [vmem:[#allocation7 + $0x118] sm:$0xff]
    %v2146 = vld [vmem:[#allocation7 + $0x120] sm:$0xff]
    %v2147 = vld [vmem:[#allocation7 + $0x128] sm:$0xff]
    %v2148 = vld [vmem:[#allocation7 + $0x130] sm:$0xff]
    %v2149 = vld [vmem:[#allocation7 + $0x138] sm:$0xff]
    %v2150 = vld [vmem:[#allocation7 + $0x140] sm:$0xff]
    %v2151 = vld [vmem:[#allocation7 + $0x148] sm:$0xff]
    %v2152 = vld [vmem:[#allocation7 + $0x150] sm:$0xff]
    %v2153 = vld [vmem:[#allocation7 + $0x158] sm:$0xff]
    %v2154 = vld [vmem:[#allocation7 + $0x160] sm:$0xff]
    %v2155 = vld [vmem:[#allocation7 + $0x168] sm:$0xff]
    %v2156 = vld [vmem:[#allocation7 + $0x170] sm:$0xff]
    %v2157 = vld [vmem:[#allocation7 + $0x178] sm:$0xff]
    %v2158 = vld [vmem:[#allocation7 + $0x180] sm:$0xff]
    %v2159 = vld [vmem:[#allocation7 + $0x188] sm:$0xff]
    %v2160 = vld [vmem:[#allocation7 + $0x190] sm:$0xff]
    %v2161 = vld [vmem:[#allocation7 + $0x198] sm:$0xff]
    %v2162 = vld [vmem:[#allocation7 + $0x1a0] sm:$0xff]
    %v2163 = vld [vmem:[#allocation7 + $0x1a8] sm:$0xff]
    %v2164 = vld [vmem:[#allocation7 + $0x1b0] sm:$0xff]
    %v2165 = vld [vmem:[#allocation7 + $0x1b8] sm:$0xff]
    %v2166 = vld [vmem:[#allocation7 + $0x1c0] sm:$0xff]
    %v2167 = vld [vmem:[#allocation7 + $0x1c8] sm:$0xff]
    %v2168 = vld [vmem:[#allocation7 + $0x1d0] sm:$0xff]
    %v2169 = vld [vmem:[#allocation7 + $0x1d8] sm:$0xff]
    %v2170 = vld [vmem:[#allocation7 + $0x1e0] sm:$0xff]
    %v2171 = vld [vmem:[#allocation7 + $0x1e8] sm:$0xff]
    %v2172 = vld [vmem:[#allocation7 + $0x1f0] sm:$0xff]
    %v2173 = vld [vmem:[#allocation7 + $0x1f8] sm:$0xff]
    %v2174 = vld [vmem:[%s6] sm:$0xf]
    %v2176 = vlaneseq
    %v2177 = vshrl.u32 %v2176, 7
    %v2178 = vsub.s32 0, %v2177
    %v2179 = vrot.slane %v2174, %v2178
    %v2180 = vlaneseq
    %v2181 = vshrl.u32 %v2180, 7
    %v2182 = vsub.s32 1, %v2181
    %v2183 = vrot.slane %v2174, %v2182
    %v2184 = vlaneseq
    %v2185 = vshrl.u32 %v2184, 7
    %v2186 = vsub.s32 2, %v2185
    %v2187 = vrot.slane %v2174, %v2186
    %v2188 = vlaneseq
    %v2189 = vshrl.u32 %v2188, 7
    %v2190 = vsub.s32 3, %v2189
    %v2191 = vrot.slane %v2174, %v2190
    %2196 = vmatprep.subr.mxu0 %v2171
    %2197 = vmatpush1.msra.mxu0 %v2170
    %2198 = vmatprep.subr.mxu0 %v2167
    %2199 = vmatpush1.msra.mxu0 %v2166
    %2200 = vmatprep.subr.mxu0 %v2163
    %2201 = vmatpush1.msra.mxu0 %v2162
    %2202 = vmatprep.subr.mxu0 %v2159
    %2203 = vmatpush1.msra.mxu0 %v2158
    %2204 = vmatprep.subr.mxu0 %v2155
    %2205 = vmatpush1.msra.mxu0 %v2154
    %2206 = vmatprep.subr.mxu0 %v2151
    %2207 = vmatpush1.msra.mxu0 %v2150
    %2208 = vmatprep.subr.mxu0 %v2147
    %2209 = vmatpush1.msra.mxu0 %v2146
    %2210 = vmatprep.subr.mxu0 %v2143
    %2211 = vmatpush1.msra.mxu0 %v2142
    %2212 = vmatprep.subr.mxu0 %v2139
    %2213 = vmatpush1.msra.mxu0 %v2138
    %2214 = vmatprep.subr.mxu0 %v2135
    %2215 = vmatpush1.msra.mxu0 %v2134
    %2216 = vmatprep.subr.mxu0 %v2131
    %2217 = vmatpush1.msra.mxu0 %v2130
    %2218 = vmatprep.subr.mxu0 %v2127
    %2219 = vmatpush1.msra.mxu0 %v2126
    %2220 = vmatprep.subr.mxu0 %v2123
    %2221 = vmatpush1.msra.mxu0 %v2122
    %2222 = vmatprep.subr.mxu0 %v2119
    %2223 = vmatpush1.msra.mxu0 %v2118
    %2224 = vmatprep.subr.mxu0 %v2115
    %2225 = vmatpush1.msra.mxu0 %v2114
    %2226 = vmatprep.subr.mxu0 %v2111
    %2227 = vmatpush1.msra.mxu0 %v2110
    %2228 = vmatprep.subr.mxu0 0.0
    %2229 = vmatpush2.msra.mxu0 0.0
    %2230 = vmatprep.subr.mxu0 0.0
    %2231 = vmatpush2.msra.mxu0 0.0
    %2232 = vmatprep.subr.mxu0 0.0
    %2233 = vmatpush2.msra.mxu0 0.0
    %2234 = vmatprep.subr.mxu0 0.0
    %2235 = vmatpush2.msra.mxu0 0.0
    %2236 = vmatprep.subr.mxu0 0.0
    %2237 = vmatpush2.msra.mxu0 0.0
    %2238 = vmatprep.subr.mxu0 0.0
    %2239 = vmatpush2.msra.mxu0 0.0
    %2240 = vmatprep.subr.mxu0 0.0
    %2241 = vmatpush2.msra.mxu0 0.0
    %2242 = vmatprep.subr.mxu0 0.0
    %2243 = vmatpush2.msra.mxu0 0.0
    %2244 = vmatprep.subr.mxu0 0.0
    %2245 = vmatpush2.msra.mxu0 0.0
    %2246 = vmatprep.subr.mxu0 0.0
    %2247 = vmatpush2.msra.mxu0 0.0
    %2248 = vmatprep.subr.mxu0 0.0
    %2249 = vmatpush2.msra.mxu0 0.0
    %2250 = vmatprep.subr.mxu0 0.0
    %2251 = vmatpush2.msra.mxu0 0.0
    %2252 = vmatprep.subr.mxu0 0.0
    %2253 = vmatpush2.msra.mxu0 0.0
    %2254 = vmatprep.subr.mxu0 0.0
    %2255 = vmatpush2.msra.mxu0 0.0
    %2256 = vmatprep.subr.mxu0 0.0
    %2257 = vmatpush2.msra.mxu0 0.0
    %2258 = vmatprep.subr.mxu0 0.0
    %2259 = vmatpush2.msra.mxu0 0.0
    %2260 = vmatprep.mubr.f32.mxu0 0.0
    %2261 = vmatmul.mubr.f32.gmra.mxu0 %v2102
    %v2262 = vpop.f32.mrf.mxu0
    %v2263 = vadd.f32 %v2179, %v2262
    %v2264 = vpop.f32.mrf.mxu0
    %v2265 = vadd.f32 %v2183, %v2264
    %2266 = vmatprep.mubr.f32.mxu0 0.0
    %2267 = vmatmul.mubr.f32.gmra.mxu0 %v2103
    %v2268 = vpop.f32.mrf.mxu0
    %v2269 = vadd.f32 %v2179, %v2268
    %v2270 = vpop.f32.mrf.mxu0
    %v2271 = vadd.f32 %v2183, %v2270
    %2272 = vmatprep.mubr.f32.mxu0 0.0
    %2273 = vmatmul.mubr.f32.gmra.mxu0 %v2104
    %v2274 = vpop.f32.mrf.mxu0
    %v2275 = vadd.f32 %v2179, %v2274
    %v2276 = vpop.f32.mrf.mxu0
    %v2277 = vadd.f32 %v2183, %v2276
    %2278 = vmatprep.mubr.f32.mxu0 0.0
    %2279 = vmatmul.mubr.f32.gmra.mxu0 %v2105
    %v2280 = vpop.f32.mrf.mxu0
    %v2281 = vadd.f32 %v2179, %v2280
    %v2282 = vpop.f32.mrf.mxu0
    %v2283 = vadd.f32 %v2183, %v2282
    %2284 = vmatprep.mubr.f32.mxu0 0.0
    %2285 = vmatmul.mubr.f32.gmra.mxu0 %v2106
    %v2286 = vpop.f32.mrf.mxu0
    %v2287 = vadd.f32 %v2179, %v2286
    %v2288 = vpop.f32.mrf.mxu0
    %v2289 = vadd.f32 %v2183, %v2288
    %2290 = vmatprep.mubr.f32.mxu0 0.0
    %2291 = vmatmul.mubr.f32.gmra.mxu0 %v2107
    %v2292 = vpop.f32.mrf.mxu0
    %v2293 = vadd.f32 %v2179, %v2292
    %v2294 = vpop.f32.mrf.mxu0
    %v2295 = vadd.f32 %v2183, %v2294
    %2296 = vmatprep.mubr.f32.mxu0 0.0
    %2297 = vmatmul.mubr.f32.gmra.mxu0 %v2108
    %v2298 = vpop.f32.mrf.mxu0
    %v2299 = vadd.f32 %v2179, %v2298
    %v2300 = vpop.f32.mrf.mxu0
    %v2301 = vadd.f32 %v2183, %v2300
    %2302 = vmatprep.mubr.f32.mxu0 0.0
    %2303 = vmatmul.mubr.f32.gmra.mxu0 %v2109
    %v2304 = vpop.f32.mrf.mxu0
    %v2305 = vadd.f32 %v2179, %v2304
    %v2306 = vpop.f32.mrf.mxu0
    %v2307 = vadd.f32 %v2183, %v2306
    %2308 = vdwg.mxu0
    %2309 = vmatprep.subr.mxu0 %v2173
    %2310 = vmatpush1.msra.mxu0 %v2172
    %2311 = vmatprep.subr.mxu0 %v2169
    %2312 = vmatpush1.msra.mxu0 %v2168
    %2313 = vmatprep.subr.mxu0 %v2165
    %2314 = vmatpush1.msra.mxu0 %v2164
    %2315 = vmatprep.subr.mxu0 %v2161
    %2316 = vmatpush1.msra.mxu0 %v2160
    %2317 = vmatprep.subr.mxu0 %v2157
    %2318 = vmatpush1.msra.mxu0 %v2156
    %2319 = vmatprep.subr.mxu0 %v2153
    %2320 = vmatpush1.msra.mxu0 %v2152
    %2321 = vmatprep.subr.mxu0 %v2149
    %2322 = vmatpush1.msra.mxu0 %v2148
    %2323 = vmatprep.subr.mxu0 %v2145
    %2324 = vmatpush1.msra.mxu0 %v2144
    %2325 = vmatprep.subr.mxu0 %v2141
    %2326 = vmatpush1.msra.mxu0 %v2140
    %2327 = vmatprep.subr.mxu0 %v2137
    %2328 = vmatpush1.msra.mxu0 %v2136
    %2329 = vmatprep.subr.mxu0 %v2133
    %2330 = vmatpush1.msra.mxu0 %v2132
    %2331 = vmatprep.subr.mxu0 %v2129
    %2332 = vmatpush1.msra.mxu0 %v2128
    %2333 = vmatprep.subr.mxu0 %v2125
    %2334 = vmatpush1.msra.mxu0 %v2124
    %2335 = vmatprep.subr.mxu0 %v2121
    %2336 = vmatpush1.msra.mxu0 %v2120
    %2337 = vmatprep.subr.mxu0 %v2117
    %2338 = vmatpush1.msra.mxu0 %v2116
    %2339 = vmatprep.subr.mxu0 %v2113
    %2340 = vmatpush1.msra.mxu0 %v2112
    %2341 = vmatprep.subr.mxu0 0.0
    %2342 = vmatpush2.msra.mxu0 0.0
    %2343 = vmatprep.subr.mxu0 0.0
    %2344 = vmatpush2.msra.mxu0 0.0
    %2345 = vmatprep.subr.mxu0 0.0
    %2346 = vmatpush2.msra.mxu0 0.0
    %2347 = vmatprep.subr.mxu0 0.0
    %2348 = vmatpush2.msra.mxu0 0.0
    %2349 = vmatprep.subr.mxu0 0.0
    %2350 = vmatpush2.msra.mxu0 0.0
    %2351 = vmatprep.subr.mxu0 0.0
    %2352 = vmatpush2.msra.mxu0 0.0
    %2353 = vmatprep.subr.mxu0 0.0
    %2354 = vmatpush2.msra.mxu0 0.0
    %2355 = vmatprep.subr.mxu0 0.0
    %2356 = vmatpush2.msra.mxu0 0.0
    %2357 = vmatprep.subr.mxu0 0.0
    %2358 = vmatpush2.msra.mxu0 0.0
    %2359 = vmatprep.subr.mxu0 0.0
    %2360 = vmatpush2.msra.mxu0 0.0
    %2361 = vmatprep.subr.mxu0 0.0
    %2362 = vmatpush2.msra.mxu0 0.0
    %2363 = vmatprep.subr.mxu0 0.0
    %2364 = vmatpush2.msra.mxu0 0.0
    %2365 = vmatprep.subr.mxu0 0.0
    %2366 = vmatpush2.msra.mxu0 0.0
    %2367 = vmatprep.subr.mxu0 0.0
    %2368 = vmatpush2.msra.mxu0 0.0
    %2369 = vmatprep.subr.mxu0 0.0
    %2370 = vmatpush2.msra.mxu0 0.0
    %2371 = vmatprep.subr.mxu0 0.0
    %2372 = vmatpush2.msra.mxu0 0.0
    %2373 = vmatprep.mubr.f32.mxu0 0.0
    %2374 = vmatmul.mubr.f32.gmra.mxu0 %v2102
    %v2375 = vpop.f32.mrf.mxu0
    %v2376 = vadd.f32 %v2187, %v2375
    %v2377 = vpop.f32.mrf.mxu0
    %v2378 = vadd.f32 %v2191, %v2377
    %2379 = vmatprep.mubr.f32.mxu0 0.0
    %2380 = vmatmul.mubr.f32.gmra.mxu0 %v2103
    %v2381 = vpop.f32.mrf.mxu0
    %v2382 = vadd.f32 %v2187, %v2381
    %v2383 = vpop.f32.mrf.mxu0
    %v2384 = vadd.f32 %v2191, %v2383
    %2385 = vmatprep.mubr.f32.mxu0 0.0
    %2386 = vmatmul.mubr.f32.gmra.mxu0 %v2104
    %v2387 = vpop.f32.mrf.mxu0
    %v2388 = vadd.f32 %v2187, %v2387
    %v2389 = vpop.f32.mrf.mxu0
    %v2390 = vadd.f32 %v2191, %v2389
    %2391 = vmatprep.mubr.f32.mxu0 0.0
    %2392 = vmatmul.mubr.f32.gmra.mxu0 %v2105
    %v2393 = vpop.f32.mrf.mxu0
    %v2394 = vadd.f32 %v2187, %v2393
    %v2395 = vpop.f32.mrf.mxu0
    %v2396 = vadd.f32 %v2191, %v2395
    %2397 = vmatprep.mubr.f32.mxu0 0.0
    %2398 = vmatmul.mubr.f32.gmra.mxu0 %v2106
    %v2399 = vpop.f32.mrf.mxu0
    %v2400 = vadd.f32 %v2187, %v2399
    %v2401 = vpop.f32.mrf.mxu0
    %v2402 = vadd.f32 %v2191, %v2401
    %2403 = vmatprep.mubr.f32.mxu0 0.0
    %2404 = vmatmul.mubr.f32.gmra.mxu0 %v2107
    %v2405 = vpop.f32.mrf.mxu0
    %v2406 = vadd.f32 %v2187, %v2405
    %v2407 = vpop.f32.mrf.mxu0
    %v2408 = vadd.f32 %v2191, %v2407
    %2409 = vmatprep.mubr.f32.mxu0 0.0
    %2410 = vmatmul.mubr.f32.gmra.mxu0 %v2108
    %v2411 = vpop.f32.mrf.mxu0
    %v2412 = vadd.f32 %v2187, %v2411
    %v2413 = vpop.f32.mrf.mxu0
    %v2414 = vadd.f32 %v2191, %v2413
    %2415 = vmatprep.mubr.f32.mxu0 0.0
    %2416 = vmatmul.mubr.f32.gmra.mxu0 %v2109
    %v2417 = vpop.f32.mrf.mxu0
    %v2418 = vadd.f32 %v2187, %v2417
    %v2419 = vpop.f32.mrf.mxu0
    %v2420 = vadd.f32 %v2191, %v2419
    %2421 = vdwg.mxu0
    %2422 = vst [vmem:[#allocation2] sm:$0xff] %v2263
    %2423 = vst [vmem:[#allocation2 + $0x8] sm:$0xff] %v2265
    %2424 = vst [vmem:[#allocation2 + $0x10] sm:$0xff] %v2376
    %2425 = vst [vmem:[#allocation2 + $0x18] sm:$0xff] %v2378
    %2426 = vst [vmem:[#allocation2 + $0x20] sm:$0xff] %v2269
    %2427 = vst [vmem:[#allocation2 + $0x28] sm:$0xff] %v2271
    %2428 = vst [vmem:[#allocation2 + $0x30] sm:$0xff] %v2382
    %2429 = vst [vmem:[#allocation2 + $0x38] sm:$0xff] %v2384
    %2430 = vst [vmem:[#allocation2 + $0x40] sm:$0xff] %v2275
    %2431 = vst [vmem:[#allocation2 + $0x48] sm:$0xff] %v2277
    %2432 = vst [vmem:[#allocation2 + $0x50] sm:$0xff] %v2388
    %2433 = vst [vmem:[#allocation2 + $0x58] sm:$0xff] %v2390
    %2434 = vst [vmem:[#allocation2 + $0x60] sm:$0xff] %v2281
    %2435 = vst [vmem:[#allocation2 + $0x68] sm:$0xff] %v2283
    %2436 = vst [vmem:[#allocation2 + $0x70] sm:$0xff] %v2394
    %2437 = vst [vmem:[#allocation2 + $0x78] sm:$0xff] %v2396
    %2438 = vst [vmem:[#allocation2 + $0x80] sm:$0xff] %v2287
    %2439 = vst [vmem:[#allocation2 + $0x88] sm:$0xff] %v2289
    %2440 = vst [vmem:[#allocation2 + $0x90] sm:$0xff] %v2400
    %2441 = vst [vmem:[#allocation2 + $0x98] sm:$0xff] %v2402
    %2442 = vst [vmem:[#allocation2 + $0xa0] sm:$0xff] %v2293
    %2443 = vst [vmem:[#allocation2 + $0xa8] sm:$0xff] %v2295
    %2444 = vst [vmem:[#allocation2 + $0xb0] sm:$0xff] %v2406
    %2445 = vst [vmem:[#allocation2 + $0xb8] sm:$0xff] %v2408
    %2446 = vst [vmem:[#allocation2 + $0xc0] sm:$0xff] %v2299
    %2447 = vst [vmem:[#allocation2 + $0xc8] sm:$0xff] %v2301
    %2448 = vst [vmem:[#allocation2 + $0xd0] sm:$0xff] %v2412
    %2449 = vst [vmem:[#allocation2 + $0xd8] sm:$0xff] %v2414
    %2450 = vst [vmem:[#allocation2 + $0xe0] sm:$0xff] %v2305
    %2451 = vst [vmem:[#allocation2 + $0xe8] sm:$0xff] %v2307
    %2452 = vst [vmem:[#allocation2 + $0xf0] sm:$0xff] %v2418
    %2453 = vst [vmem:[#allocation2 + $0xf8] sm:$0xff] %v2420
    %v2454 = vld [vmem:[#allocation2] sm:$0xff]
    %v2455 = vld [vmem:[#allocation2 + $0x10] sm:$0xff]
    %v2456 = vld [vmem:[#allocation2 + $0x18] sm:$0xff]
    %v2457 = vxor.u32 %v2454, 2147483648
    %v2458 = vmul.f32 %v2457, 1.442695
    %v2459 = vpow.pop %v2458
    %v2460 = vadd.f32 %v2459, 1.0
    %v2461 = vrcp.pop %v2460
    %v2462 = vmul.f32 1.0, %v2461
    %v2463 = vtanh.pop %v2455
    %v2464 = vxor.u32 %v2456, 2147483648
    %v2465 = vmul.f32 %v2464, 1.442695
    %v2466 = vpow.pop %v2465
    %v2467 = vadd.f32 %v2466, 1.0
    %v2468 = vrcp.pop %v2467
    %v2469 = vmul.f32 1.0, %v2468
    %v2470 = vmul.f32 %v2462, %v2463
    %v2471 = vtanh.pop %v2470
    %v2472 = vmul.f32 %v2469, %v2471
    %2473 = vst [vmem:[#allocation3] sm:$0xff] %v2472
    %v2474 = vld [vmem:[#allocation2 + $0x20] sm:$0xff]
    %v2475 = vld [vmem:[#allocation2 + $0x28] sm:$0xff]
    %v2476 = vld [vmem:[#allocation2 + $0x30] sm:$0xff]
    %v2477 = vld [vmem:[#allocation2 + $0x38] sm:$0xff]
    %v2478 = vld [vmem:[#allocation9] sm:$0xff]
    %v2479 = vld [vmem:[#allocation9 + $0x8] sm:$0xff]
    %v2480 = vld [vmem:[#allocation9 + $0x10] sm:$0xff]
    %v2481 = vld [vmem:[#allocation9 + $0x18] sm:$0xff]
    %v2482 = vld [vmem:[#allocation9 + $0x20] sm:$0xff]
    %v2483 = vld [vmem:[#allocation9 + $0x28] sm:$0xff]
    %v2484 = vld [vmem:[#allocation9 + $0x30] sm:$0xff]
    %v2485 = vld [vmem:[#allocation9 + $0x38] sm:$0xff]
    %v2486 = vld [vmem:[#allocation9 + $0x40] sm:$0xff]
    %v2487 = vld [vmem:[#allocation9 + $0x48] sm:$0xff]
    %v2488 = vld [vmem:[#allocation9 + $0x50] sm:$0xff]
    %v2489 = vld [vmem:[#allocation9 + $0x58] sm:$0xff]
    %v2490 = vld [vmem:[#allocation9 + $0x60] sm:$0xff]
    %v2491 = vld [vmem:[#allocation9 + $0x68] sm:$0xff]
    %v2492 = vld [vmem:[#allocation9 + $0x70] sm:$0xff]
    %v2493 = vld [vmem:[#allocation9 + $0x78] sm:$0xff]
    %v2494 = vld [vmem:[#allocation9 + $0x80] sm:$0xff]
    %v2495 = vld [vmem:[#allocation9 + $0x88] sm:$0xff]
    %v2496 = vld [vmem:[#allocation9 + $0x90] sm:$0xff]
    %v2497 = vld [vmem:[#allocation9 + $0x98] sm:$0xff]
    %v2498 = vld [vmem:[#allocation9 + $0xa0] sm:$0xff]
    %v2499 = vld [vmem:[#allocation9 + $0xa8] sm:$0xff]
    %v2500 = vld [vmem:[#allocation9 + $0xb0] sm:$0xff]
    %v2501 = vld [vmem:[#allocation9 + $0xb8] sm:$0xff]
    %v2502 = vld [vmem:[#allocation9 + $0xc0] sm:$0xff]
    %v2503 = vld [vmem:[#allocation9 + $0xc8] sm:$0xff]
    %v2504 = vld [vmem:[#allocation9 + $0xd0] sm:$0xff]
    %v2505 = vld [vmem:[#allocation9 + $0xd8] sm:$0xff]
    %v2506 = vld [vmem:[#allocation9 + $0xe0] sm:$0xff]
    %v2507 = vld [vmem:[#allocation9 + $0xe8] sm:$0xff]
    %v2508 = vld [vmem:[#allocation9 + $0xf0] sm:$0xff]
    %v2509 = vld [vmem:[#allocation9 + $0xf8] sm:$0xff]
    %v2510 = vld [vmem:[#allocation9 + $0x100] sm:$0xff]
    %v2511 = vld [vmem:[#allocation9 + $0x108] sm:$0xff]
    %v2512 = vld [vmem:[#allocation9 + $0x110] sm:$0xff]
    %v2513 = vld [vmem:[#allocation9 + $0x118] sm:$0xff]
    %v2514 = vld [vmem:[#allocation9 + $0x120] sm:$0xff]
    %v2515 = vld [vmem:[#allocation9 + $0x128] sm:$0xff]
    %v2516 = vld [vmem:[#allocation9 + $0x130] sm:$0xff]
    %v2517 = vld [vmem:[#allocation9 + $0x138] sm:$0xff]
    %v2518 = vld [vmem:[#allocation9 + $0x140] sm:$0xff]
    %v2519 = vld [vmem:[#allocation9 + $0x148] sm:$0xff]
    %v2520 = vld [vmem:[#allocation9 + $0x150] sm:$0xff]
    %v2521 = vld [vmem:[#allocation9 + $0x158] sm:$0xff]
    %v2522 = vld [vmem:[#allocation9 + $0x160] sm:$0xff]
    %v2523 = vld [vmem:[#allocation9 + $0x168] sm:$0xff]
    %v2524 = vld [vmem:[#allocation9 + $0x170] sm:$0xff]
    %v2525 = vld [vmem:[#allocation9 + $0x178] sm:$0xff]
    %v2526 = vld [vmem:[#allocation9 + $0x180] sm:$0xff]
    %v2527 = vld [vmem:[#allocation9 + $0x188] sm:$0xff]
    %v2528 = vld [vmem:[#allocation9 + $0x190] sm:$0xff]
    %v2529 = vld [vmem:[#allocation9 + $0x198] sm:$0xff]
    %v2530 = vld [vmem:[#allocation9 + $0x1a0] sm:$0xff]
    %v2531 = vld [vmem:[#allocation9 + $0x1a8] sm:$0xff]
    %v2532 = vld [vmem:[#allocation9 + $0x1b0] sm:$0xff]
    %v2533 = vld [vmem:[#allocation9 + $0x1b8] sm:$0xff]
    %v2534 = vld [vmem:[#allocation9 + $0x1c0] sm:$0xff]
    %v2535 = vld [vmem:[#allocation9 + $0x1c8] sm:$0xff]
    %v2536 = vld [vmem:[#allocation9 + $0x1d0] sm:$0xff]
    %v2537 = vld [vmem:[#allocation9 + $0x1d8] sm:$0xff]
    %v2538 = vld [vmem:[#allocation9 + $0x1e0] sm:$0xff]
    %v2539 = vld [vmem:[#allocation9 + $0x1e8] sm:$0xff]
    %v2540 = vld [vmem:[#allocation9 + $0x1f0] sm:$0xff]
    %v2541 = vld [vmem:[#allocation9 + $0x1f8] sm:$0xff]
    %2542 = vmatprep.subr.mxu0 %v2539
    %2543 = vmatpush1.msra.mxu0 %v2538
    %2544 = vmatprep.subr.mxu0 %v2535
    %2545 = vmatpush1.msra.mxu0 %v2534
    %2546 = vmatprep.subr.mxu0 %v2531
    %2547 = vmatpush1.msra.mxu0 %v2530
    %2548 = vmatprep.subr.mxu0 %v2527
    %2549 = vmatpush1.msra.mxu0 %v2526
    %2550 = vmatprep.subr.mxu0 %v2523
    %2551 = vmatpush1.msra.mxu0 %v2522
    %2552 = vmatprep.subr.mxu0 %v2519
    %2553 = vmatpush1.msra.mxu0 %v2518
    %2554 = vmatprep.subr.mxu0 %v2515
    %2555 = vmatpush1.msra.mxu0 %v2514
    %2556 = vmatprep.subr.mxu0 %v2511
    %2557 = vmatpush1.msra.mxu0 %v2510
    %2558 = vmatprep.subr.mxu0 %v2507
    %2559 = vmatpush1.msra.mxu0 %v2506
    %2560 = vmatprep.subr.mxu0 %v2503
    %2561 = vmatpush1.msra.mxu0 %v2502
    %2562 = vmatprep.subr.mxu0 %v2499
    %2563 = vmatpush1.msra.mxu0 %v2498
    %2564 = vmatprep.subr.mxu0 %v2495
    %2565 = vmatpush1.msra.mxu0 %v2494
    %2566 = vmatprep.subr.mxu0 %v2491
    %2567 = vmatpush1.msra.mxu0 %v2490
    %2568 = vmatprep.subr.mxu0 %v2487
    %2569 = vmatpush1.msra.mxu0 %v2486
    %2570 = vmatprep.subr.mxu0 %v2483
    %2571 = vmatpush1.msra.mxu0 %v2482
    %2572 = vmatprep.subr.mxu0 %v2479
    %2573 = vmatpush1.msra.mxu0 %v2478
    %2574 = vmatprep.subr.mxu0 0.0
    %2575 = vmatpush2.msra.mxu0 0.0
    %2576 = vmatprep.subr.mxu0 0.0
    %2577 = vmatpush2.msra.mxu0 0.0
    %2578 = vmatprep.subr.mxu0 0.0
    %2579 = vmatpush2.msra.mxu0 0.0
    %2580 = vmatprep.subr.mxu0 0.0
    %2581 = vmatpush2.msra.mxu0 0.0
    %2582 = vmatprep.subr.mxu0 0.0
    %2583 = vmatpush2.msra.mxu0 0.0
    %2584 = vmatprep.subr.mxu0 0.0
    %2585 = vmatpush2.msra.mxu0 0.0
    %2586 = vmatprep.subr.mxu0 0.0
    %2587 = vmatpush2.msra.mxu0 0.0
    %2588 = vmatprep.subr.mxu0 0.0
    %2589 = vmatpush2.msra.mxu0 0.0
    %2590 = vmatprep.subr.mxu0 0.0
    %2591 = vmatpush2.msra.mxu0 0.0
    %2592 = vmatprep.subr.mxu0 0.0
    %2593 = vmatpush2.msra.mxu0 0.0
    %2594 = vmatprep.subr.mxu0 0.0
    %2595 = vmatpush2.msra.mxu0 0.0
    %2596 = vmatprep.subr.mxu0 0.0
    %2597 = vmatpush2.msra.mxu0 0.0
    %2598 = vmatprep.subr.mxu0 0.0
    %2599 = vmatpush2.msra.mxu0 0.0
    %2600 = vmatprep.subr.mxu0 0.0
    %2601 = vmatpush2.msra.mxu0 0.0
    %2602 = vmatprep.subr.mxu0 0.0
    %2603 = vmatpush2.msra.mxu0 0.0
    %2604 = vmatprep.subr.mxu0 0.0
    %2605 = vmatpush2.msra.mxu0 0.0
    %2606 = vmatprep.mubr.f32.mxu0 0.0
    %2607 = vmatmul.mubr.f32.gmra.mxu0 %v2472
    %v2608 = vpop.f32.mrf.mxu0
    %v2609 = vadd.f32 0.0, %v2608
    %v2610 = vpop.f32.mrf.mxu0
    %v2611 = vadd.f32 0.0, %v2610
    %2612 = vdwg.mxu0
    %2613 = vmatprep.subr.mxu0 %v2541
    %2614 = vmatpush1.msra.mxu0 %v2540
    %2615 = vmatprep.subr.mxu0 %v2537
    %2616 = vmatpush1.msra.mxu0 %v2536
    %2617 = vmatprep.subr.mxu0 %v2533
    %2618 = vmatpush1.msra.mxu0 %v2532
    %2619 = vmatprep.subr.mxu0 %v2529
    %2620 = vmatpush1.msra.mxu0 %v2528
    %2621 = vmatprep.subr.mxu0 %v2525
    %2622 = vmatpush1.msra.mxu0 %v2524
    %2623 = vmatprep.subr.mxu0 %v2521
    %2624 = vmatpush1.msra.mxu0 %v2520
    %2625 = vmatprep.subr.mxu0 %v2517
    %2626 = vmatpush1.msra.mxu0 %v2516
    %2627 = vmatprep.subr.mxu0 %v2513
    %2628 = vmatpush1.msra.mxu0 %v2512
    %2629 = vmatprep.subr.mxu0 %v2509
    %2630 = vmatpush1.msra.mxu0 %v2508
    %2631 = vmatprep.subr.mxu0 %v2505
    %2632 = vmatpush1.msra.mxu0 %v2504
    %2633 = vmatprep.subr.mxu0 %v2501
    %2634 = vmatpush1.msra.mxu0 %v2500
    %2635 = vmatprep.subr.mxu0 %v2497
    %2636 = vmatpush1.msra.mxu0 %v2496
    %2637 = vmatprep.subr.mxu0 %v2493
    %2638 = vmatpush1.msra.mxu0 %v2492
    %2639 = vmatprep.subr.mxu0 %v2489
    %2640 = vmatpush1.msra.mxu0 %v2488
    %2641 = vmatprep.subr.mxu0 %v2485
    %2642 = vmatpush1.msra.mxu0 %v2484
    %2643 = vmatprep.subr.mxu0 %v2481
    %2644 = vmatpush1.msra.mxu0 %v2480
    %2645 = vmatprep.subr.mxu0 0.0
    %2646 = vmatpush2.msra.mxu0 0.0
    %2647 = vmatprep.subr.mxu0 0.0
    %2648 = vmatpush2.msra.mxu0 0.0
    %2649 = vmatprep.subr.mxu0 0.0
    %2650 = vmatpush2.msra.mxu0 0.0
    %2651 = vmatprep.subr.mxu0 0.0
    %2652 = vmatpush2.msra.mxu0 0.0
    %2653 = vmatprep.subr.mxu0 0.0
    %2654 = vmatpush2.msra.mxu0 0.0
    %2655 = vmatprep.subr.mxu0 0.0
    %2656 = vmatpush2.msra.mxu0 0.0
    %2657 = vmatprep.subr.mxu0 0.0
    %2658 = vmatpush2.msra.mxu0 0.0
    %2659 = vmatprep.subr.mxu0 0.0
    %2660 = vmatpush2.msra.mxu0 0.0
    %2661 = vmatprep.subr.mxu0 0.0
    %2662 = vmatpush2.msra.mxu0 0.0
    %2663 = vmatprep.subr.mxu0 0.0
    %2664 = vmatpush2.msra.mxu0 0.0
    %2665 = vmatprep.subr.mxu0 0.0
    %2666 = vmatpush2.msra.mxu0 0.0
    %2667 = vmatprep.subr.mxu0 0.0
    %2668 = vmatpush2.msra.mxu0 0.0
    %2669 = vmatprep.subr.mxu0 0.0
    %2670 = vmatpush2.msra.mxu0 0.0
    %2671 = vmatprep.subr.mxu0 0.0
    %2672 = vmatpush2.msra.mxu0 0.0
    %2673 = vmatprep.subr.mxu0 0.0
    %2674 = vmatpush2.msra.mxu0 0.0
    %2675 = vmatprep.subr.mxu0 0.0
    %2676 = vmatpush2.msra.mxu0 0.0
    %2677 = vmatprep.mubr.f32.mxu0 0.0
    %2678 = vmatmul.mubr.f32.gmra.mxu0 %v2472
    %v2679 = vpop.f32.mrf.mxu0
    %v2680 = vadd.f32 0.0, %v2679
    %v2681 = vpop.f32.mrf.mxu0
    %v2682 = vadd.f32 0.0, %v2681
    %2683 = vdwg.mxu0
    %v2684 = vadd.f32 %v2474, %v2609
    %v2685 = vadd.f32 %v2475, %v2611
    %v2686 = vadd.f32 %v2476, %v2680
    %v2687 = vadd.f32 %v2477, %v2682
    %v2688 = vxor.u32 %v2684, 2147483648
    %v2689 = vmul.f32 %v2688, 1.442695
    %v2690 = vpow.pop %v2689
    %v2691 = vadd.f32 %v2690, 1.0
    %v2692 = vrcp.pop %v2691
    %v2693 = vmul.f32 1.0, %v2692
    %v2694 = vtanh.pop %v2686
    %v2695 = vxor.u32 %v2687, 2147483648
    %v2696 = vmul.f32 %v2695, 1.442695
    %v2697 = vpow.pop %v2696
    %v2698 = vadd.f32 %v2697, 1.0
    %v2699 = vrcp.pop %v2698
    %v2700 = vmul.f32 1.0, %v2699
    %v2701 = vxor.u32 %v2685, 2147483648
    %v2702 = vmul.f32 %v2701, 1.442695
    %v2703 = vpow.pop %v2702
    %v2704 = vadd.f32 %v2703, 1.0
    %v2705 = vrcp.pop %v2704
    %v2706 = vmul.f32 1.0, %v2705
    %v2707 = vmul.f32 %v2706, %v2470
    %v2708 = vmul.f32 %v2693, %v2694
    %v2709 = vadd.f32 %v2707, %v2708
    %v2710 = vtanh.pop %v2709
    %v2711 = vmul.f32 %v2700, %v2710
    %2712 = vst [vmem:[#allocation3 + $0x8] sm:$0xff] %v2711
    %v2713 = vld [vmem:[#allocation2 + $0x40] sm:$0xff]
    %v2714 = vld [vmem:[#allocation2 + $0x48] sm:$0xff]
    %v2715 = vld [vmem:[#allocation2 + $0x50] sm:$0xff]
    %v2716 = vld [vmem:[#allocation2 + $0x58] sm:$0xff]
    %v2717 = vld [vmem:[#allocation9] sm:$0xff]
    %v2718 = vld [vmem:[#allocation9 + $0x8] sm:$0xff]
    %v2719 = vld [vmem:[#allocation9 + $0x10] sm:$0xff]
    %v2720 = vld [vmem:[#allocation9 + $0x18] sm:$0xff]
    %v2721 = vld [vmem:[#allocation9 + $0x20] sm:$0xff]
    %v2722 = vld [vmem:[#allocation9 + $0x28] sm:$0xff]
    %v2723 = vld [vmem:[#allocation9 + $0x30] sm:$0xff]
    %v2724 = vld [vmem:[#allocation9 + $0x38] sm:$0xff]
    %v2725 = vld [vmem:[#allocation9 + $0x40] sm:$0xff]
    %v2726 = vld [vmem:[#allocation9 + $0x48] sm:$0xff]
    %v2727 = vld [vmem:[#allocation9 + $0x50] sm:$0xff]
    %v2728 = vld [vmem:[#allocation9 + $0x58] sm:$0xff]
    %v2729 = vld [vmem:[#allocation9 + $0x60] sm:$0xff]
    %v2730 = vld [vmem:[#allocation9 + $0x68] sm:$0xff]
    %v2731 = vld [vmem:[#allocation9 + $0x70] sm:$0xff]
    %v2732 = vld [vmem:[#allocation9 + $0x78] sm:$0xff]
    %v2733 = vld [vmem:[#allocation9 + $0x80] sm:$0xff]
    %v2734 = vld [vmem:[#allocation9 + $0x88] sm:$0xff]
    %v2735 = vld [vmem:[#allocation9 + $0x90] sm:$0xff]
    %v2736 = vld [vmem:[#allocation9 + $0x98] sm:$0xff]
    %v2737 = vld [vmem:[#allocation9 + $0xa0] sm:$0xff]
    %v2738 = vld [vmem:[#allocation9 + $0xa8] sm:$0xff]
    %v2739 = vld [vmem:[#allocation9 + $0xb0] sm:$0xff]
    %v2740 = vld [vmem:[#allocation9 + $0xb8] sm:$0xff]
    %v2741 = vld [vmem:[#allocation9 + $0xc0] sm:$0xff]
    %v2742 = vld [vmem:[#allocation9 + $0xc8] sm:$0xff]
    %v2743 = vld [vmem:[#allocation9 + $0xd0] sm:$0xff]
    %v2744 = vld [vmem:[#allocation9 + $0xd8] sm:$0xff]
    %v2745 = vld [vmem:[#allocation9 + $0xe0] sm:$0xff]
    %v2746 = vld [vmem:[#allocation9 + $0xe8] sm:$0xff]
    %v2747 = vld [vmem:[#allocation9 + $0xf0] sm:$0xff]
    %v2748 = vld [vmem:[#allocation9 + $0xf8] sm:$0xff]
    %v2749 = vld [vmem:[#allocation9 + $0x100] sm:$0xff]
    %v2750 = vld [vmem:[#allocation9 + $0x108] sm:$0xff]
    %v2751 = vld [vmem:[#allocation9 + $0x110] sm:$0xff]
    %v2752 = vld [vmem:[#allocation9 + $0x118] sm:$0xff]
    %v2753 = vld [vmem:[#allocation9 + $0x120] sm:$0xff]
    %v2754 = vld [vmem:[#allocation9 + $0x128] sm:$0xff]
    %v2755 = vld [vmem:[#allocation9 + $0x130] sm:$0xff]
    %v2756 = vld [vmem:[#allocation9 + $0x138] sm:$0xff]
    %v2757 = vld [vmem:[#allocation9 + $0x140] sm:$0xff]
    %v2758 = vld [vmem:[#allocation9 + $0x148] sm:$0xff]
    %v2759 = vld [vmem:[#allocation9 + $0x150] sm:$0xff]
    %v2760 = vld [vmem:[#allocation9 + $0x158] sm:$0xff]
    %v2761 = vld [vmem:[#allocation9 + $0x160] sm:$0xff]
    %v2762 = vld [vmem:[#allocation9 + $0x168] sm:$0xff]
    %v2763 = vld [vmem:[#allocation9 + $0x170] sm:$0xff]
    %v2764 = vld [vmem:[#allocation9 + $0x178] sm:$0xff]
    %v2765 = vld [vmem:[#allocation9 + $0x180] sm:$0xff]
    %v2766 = vld [vmem:[#allocation9 + $0x188] sm:$0xff]
    %v2767 = vld [vmem:[#allocation9 + $0x190] sm:$0xff]
    %v2768 = vld [vmem:[#allocation9 + $0x198] sm:$0xff]
    %v2769 = vld [vmem:[#allocation9 + $0x1a0] sm:$0xff]
    %v2770 = vld [vmem:[#allocation9 + $0x1a8] sm:$0xff]
    %v2771 = vld [vmem:[#allocation9 + $0x1b0] sm:$0xff]
    %v2772 = vld [vmem:[#allocation9 + $0x1b8] sm:$0xff]
    %v2773 = vld [vmem:[#allocation9 + $0x1c0] sm:$0xff]
    %v2774 = vld [vmem:[#allocation9 + $0x1c8] sm:$0xff]
    %v2775 = vld [vmem:[#allocation9 + $0x1d0] sm:$0xff]
    %v2776 = vld [vmem:[#allocation9 + $0x1d8] sm:$0xff]
    %v2777 = vld [vmem:[#allocation9 + $0x1e0] sm:$0xff]
    %v2778 = vld [vmem:[#allocation9 + $0x1e8] sm:$0xff]
    %v2779 = vld [vmem:[#allocation9 + $0x1f0] sm:$0xff]
    %v2780 = vld [vmem:[#allocation9 + $0x1f8] sm:$0xff]
    %2781 = vmatprep.subr.mxu0 %v2778
    %2782 = vmatpush1.msra.mxu0 %v2777
    %2783 = vmatprep.subr.mxu0 %v2774
    %2784 = vmatpush1.msra.mxu0 %v2773
    %2785 = vmatprep.subr.mxu0 %v2770
    %2786 = vmatpush1.msra.mxu0 %v2769
    %2787 = vmatprep.subr.mxu0 %v2766
    %2788 = vmatpush1.msra.mxu0 %v2765
    %2789 = vmatprep.subr.mxu0 %v2762
    %2790 = vmatpush1.msra.mxu0 %v2761
    %2791 = vmatprep.subr.mxu0 %v2758
    %2792 = vmatpush1.msra.mxu0 %v2757
    %2793 = vmatprep.subr.mxu0 %v2754
    %2794 = vmatpush1.msra.mxu0 %v2753
    %2795 = vmatprep.subr.mxu0 %v2750
    %2796 = vmatpush1.msra.mxu0 %v2749
    %2797 = vmatprep.subr.mxu0 %v2746
    %2798 = vmatpush1.msra.mxu0 %v2745
    %2799 = vmatprep.subr.mxu0 %v2742
    %2800 = vmatpush1.msra.mxu0 %v2741
    %2801 = vmatprep.subr.mxu0 %v2738
    %2802 = vmatpush1.msra.mxu0 %v2737
    %2803 = vmatprep.subr.mxu0 %v2734
    %2804 = vmatpush1.msra.mxu0 %v2733
    %2805 = vmatprep.subr.mxu0 %v2730
    %2806 = vmatpush1.msra.mxu0 %v2729
    %2807 = vmatprep.subr.mxu0 %v2726
    %2808 = vmatpush1.msra.mxu0 %v2725
    %2809 = vmatprep.subr.mxu0 %v2722
    %2810 = vmatpush1.msra.mxu0 %v2721
    %2811 = vmatprep.subr.mxu0 %v2718
    %2812 = vmatpush1.msra.mxu0 %v2717
    %2813 = vmatprep.subr.mxu0 0.0
    %2814 = vmatpush2.msra.mxu0 0.0
    %2815 = vmatprep.subr.mxu0 0.0
    %2816 = vmatpush2.msra.mxu0 0.0
    %2817 = vmatprep.subr.mxu0 0.0
    %2818 = vmatpush2.msra.mxu0 0.0
    %2819 = vmatprep.subr.mxu0 0.0
    %2820 = vmatpush2.msra.mxu0 0.0
    %2821 = vmatprep.subr.mxu0 0.0
    %2822 = vmatpush2.msra.mxu0 0.0
    %2823 = vmatprep.subr.mxu0 0.0
    %2824 = vmatpush2.msra.mxu0 0.0
    %2825 = vmatprep.subr.mxu0 0.0
    %2826 = vmatpush2.msra.mxu0 0.0
    %2827 = vmatprep.subr.mxu0 0.0
    %2828 = vmatpush2.msra.mxu0 0.0
    %2829 = vmatprep.subr.mxu0 0.0
    %2830 = vmatpush2.msra.mxu0 0.0
    %2831 = vmatprep.subr.mxu0 0.0
    %2832 = vmatpush2.msra.mxu0 0.0
    %2833 = vmatprep.subr.mxu0 0.0
    %2834 = vmatpush2.msra.mxu0 0.0
    %2835 = vmatprep.subr.mxu0 0.0
    %2836 = vmatpush2.msra.mxu0 0.0
    %2837 = vmatprep.subr.mxu0 0.0
    %2838 = vmatpush2.msra.mxu0 0.0
    %2839 = vmatprep.subr.mxu0 0.0
    %2840 = vmatpush2.msra.mxu0 0.0
    %2841 = vmatprep.subr.mxu0 0.0
    %2842 = vmatpush2.msra.mxu0 0.0
    %2843 = vmatprep.subr.mxu0 0.0
    %2844 = vmatpush2.msra.mxu0 0.0
    %2845 = vmatprep.mubr.f32.mxu0 0.0
    %2846 = vmatmul.mubr.f32.gmra.mxu0 %v2711
    %v2847 = vpop.f32.mrf.mxu0
    %v2848 = vadd.f32 0.0, %v2847
    %v2849 = vpop.f32.mrf.mxu0
    %v2850 = vadd.f32 0.0, %v2849
    %2851 = vdwg.mxu0
    %2852 = vmatprep.subr.mxu0 %v2780
    %2853 = vmatpush1.msra.mxu0 %v2779
    %2854 = vmatprep.subr.mxu0 %v2776
    %2855 = vmatpush1.msra.mxu0 %v2775
    %2856 = vmatprep.subr.mxu0 %v2772
    %2857 = vmatpush1.msra.mxu0 %v2771
    %2858 = vmatprep.subr.mxu0 %v2768
    %2859 = vmatpush1.msra.mxu0 %v2767
    %2860 = vmatprep.subr.mxu0 %v2764
    %2861 = vmatpush1.msra.mxu0 %v2763
    %2862 = vmatprep.subr.mxu0 %v2760
    %2863 = vmatpush1.msra.mxu0 %v2759
    %2864 = vmatprep.subr.mxu0 %v2756
    %2865 = vmatpush1.msra.mxu0 %v2755
    %2866 = vmatprep.subr.mxu0 %v2752
    %2867 = vmatpush1.msra.mxu0 %v2751
    %2868 = vmatprep.subr.mxu0 %v2748
    %2869 = vmatpush1.msra.mxu0 %v2747
    %2870 = vmatprep.subr.mxu0 %v2744
    %2871 = vmatpush1.msra.mxu0 %v2743
    %2872 = vmatprep.subr.mxu0 %v2740
    %2873 = vmatpush1.msra.mxu0 %v2739
    %2874 = vmatprep.subr.mxu0 %v2736
    %2875 = vmatpush1.msra.mxu0 %v2735
    %2876 = vmatprep.subr.mxu0 %v2732
    %2877 = vmatpush1.msra.mxu0 %v2731
    %2878 = vmatprep.subr.mxu0 %v2728
    %2879 = vmatpush1.msra.mxu0 %v2727
    %2880 = vmatprep.subr.mxu0 %v2724
    %2881 = vmatpush1.msra.mxu0 %v2723
    %2882 = vmatprep.subr.mxu0 %v2720
    %2883 = vmatpush1.msra.mxu0 %v2719
    %2884 = vmatprep.subr.mxu0 0.0
    %2885 = vmatpush2.msra.mxu0 0.0
    %2886 = vmatprep.subr.mxu0 0.0
    %2887 = vmatpush2.msra.mxu0 0.0
    %2888 = vmatprep.subr.mxu0 0.0
    %2889 = vmatpush2.msra.mxu0 0.0
    %2890 = vmatprep.subr.mxu0 0.0
    %2891 = vmatpush2.msra.mxu0 0.0
    %2892 = vmatprep.subr.mxu0 0.0
    %2893 = vmatpush2.msra.mxu0 0.0
    %2894 = vmatprep.subr.mxu0 0.0
    %2895 = vmatpush2.msra.mxu0 0.0
    %2896 = vmatprep.subr.mxu0 0.0
    %2897 = vmatpush2.msra.mxu0 0.0
    %2898 = vmatprep.subr.mxu0 0.0
    %2899 = vmatpush2.msra.mxu0 0.0
    %2900 = vmatprep.subr.mxu0 0.0
    %2901 = vmatpush2.msra.mxu0 0.0
    %2902 = vmatprep.subr.mxu0 0.0
    %2903 = vmatpush2.msra.mxu0 0.0
    %2904 = vmatprep.subr.mxu0 0.0
    %2905 = vmatpush2.msra.mxu0 0.0
    %2906 = vmatprep.subr.mxu0 0.0
    %2907 = vmatpush2.msra.mxu0 0.0
    %2908 = vmatprep.subr.mxu0 0.0
    %2909 = vmatpush2.msra.mxu0 0.0
    %2910 = vmatprep.subr.mxu0 0.0
    %2911 = vmatpush2.msra.mxu0 0.0
    %2912 = vmatprep.subr.mxu0 0.0
    %2913 = vmatpush2.msra.mxu0 0.0
    %2914 = vmatprep.subr.mxu0 0.0
    %2915 = vmatpush2.msra.mxu0 0.0
    %2916 = vmatprep.mubr.f32.mxu0 0.0
    %2917 = vmatmul.mubr.f32.gmra.mxu0 %v2711
    %v2918 = vpop.f32.mrf.mxu0
    %v2919 = vadd.f32 0.0, %v2918
    %v2920 = vpop.f32.mrf.mxu0
    %v2921 = vadd.f32 0.0, %v2920
    %2922 = vdwg.mxu0
    %v2923 = vadd.f32 %v2713, %v2848
    %v2924 = vadd.f32 %v2714, %v2850
    %v2925 = vadd.f32 %v2715, %v2919
    %v2926 = vadd.f32 %v2716, %v2921
    %v2927 = vxor.u32 %v2923, 2147483648
    %v2928 = vmul.f32 %v2927, 1.442695
    %v2929 = vpow.pop %v2928
    %v2930 = vadd.f32 %v2929, 1.0
    %v2931 = vrcp.pop %v2930
    %v2932 = vmul.f32 1.0, %v2931
    %v2933 = vtanh.pop %v2925
    %v2934 = vxor.u32 %v2926, 2147483648
    %v2935 = vmul.f32 %v2934, 1.442695
    %v2936 = vpow.pop %v2935
    %v2937 = vadd.f32 %v2936, 1.0
    %v2938 = vrcp.pop %v2937
    %v2939 = vmul.f32 1.0, %v2938
    %v2940 = vxor.u32 %v2924, 2147483648
    %v2941 = vmul.f32 %v2940, 1.442695
    %v2942 = vpow.pop %v2941
    %v2943 = vadd.f32 %v2942, 1.0
    %v2944 = vrcp.pop %v2943
    %v2945 = vmul.f32 1.0, %v2944
    %v2946 = vmul.f32 %v2945, %v2709
    %v2947 = vmul.f32 %v2932, %v2933
    %v2948 = vadd.f32 %v2946, %v2947
    %v2949 = vtanh.pop %v2948
    %v2950 = vmul.f32 %v2939, %v2949
    %2951 = vst [vmem:[#allocation3 + $0x10] sm:$0xff] %v2950
    %v2952 = vld [vmem:[#allocation2 + $0x60] sm:$0xff]
    %v2953 = vld [vmem:[#allocation2 + $0x68] sm:$0xff]
    %v2954 = vld [vmem:[#allocation2 + $0x70] sm:$0xff]
    %v2955 = vld [vmem:[#allocation2 + $0x78] sm:$0xff]
    %v2956 = vld [vmem:[#allocation9] sm:$0xff]
    %v2957 = vld [vmem:[#allocation9 + $0x8] sm:$0xff]
    %v2958 = vld [vmem:[#allocation9 + $0x10] sm:$0xff]
    %v2959 = vld [vmem:[#allocation9 + $0x18] sm:$0xff]
    %v2960 = vld [vmem:[#allocation9 + $0x20] sm:$0xff]
    %v2961 = vld [vmem:[#allocation9 + $0x28] sm:$0xff]
    %v2962 = vld [vmem:[#allocation9 + $0x30] sm:$0xff]
    %v2963 = vld [vmem:[#allocation9 + $0x38] sm:$0xff]
    %v2964 = vld [vmem:[#allocation9 + $0x40] sm:$0xff]
    %v2965 = vld [vmem:[#allocation9 + $0x48] sm:$0xff]
    %v2966 = vld [vmem:[#allocation9 + $0x50] sm:$0xff]
    %v2967 = vld [vmem:[#allocation9 + $0x58] sm:$0xff]
    %v2968 = vld [vmem:[#allocation9 + $0x60] sm:$0xff]
    %v2969 = vld [vmem:[#allocation9 + $0x68] sm:$0xff]
    %v2970 = vld [vmem:[#allocation9 + $0x70] sm:$0xff]
    %v2971 = vld [vmem:[#allocation9 + $0x78] sm:$0xff]
    %v2972 = vld [vmem:[#allocation9 + $0x80] sm:$0xff]
    %v2973 = vld [vmem:[#allocation9 + $0x88] sm:$0xff]
    %v2974 = vld [vmem:[#allocation9 + $0x90] sm:$0xff]
    %v2975 = vld [vmem:[#allocation9 + $0x98] sm:$0xff]
    %v2976 = vld [vmem:[#allocation9 + $0xa0] sm:$0xff]
    %v2977 = vld [vmem:[#allocation9 + $0xa8] sm:$0xff]
    %v2978 = vld [vmem:[#allocation9 + $0xb0] sm:$0xff]
    %v2979 = vld [vmem:[#allocation9 + $0xb8] sm:$0xff]
    %v2980 = vld [vmem:[#allocation9 + $0xc0] sm:$0xff]
    %v2981 = vld [vmem:[#allocation9 + $0xc8] sm:$0xff]
    %v2982 = vld [vmem:[#allocation9 + $0xd0] sm:$0xff]
    %v2983 = vld [vmem:[#allocation9 + $0xd8] sm:$0xff]
    %v2984 = vld [vmem:[#allocation9 + $0xe0] sm:$0xff]
    %v2985 = vld [vmem:[#allocation9 + $0xe8] sm:$0xff]
    %v2986 = vld [vmem:[#allocation9 + $0xf0] sm:$0xff]
    %v2987 = vld [vmem:[#allocation9 + $0xf8] sm:$0xff]
    %v2988 = vld [vmem:[#allocation9 + $0x100] sm:$0xff]
    %v2989 = vld [vmem:[#allocation9 + $0x108] sm:$0xff]
    %v2990 = vld [vmem:[#allocation9 + $0x110] sm:$0xff]
    %v2991 = vld [vmem:[#allocation9 + $0x118] sm:$0xff]
    %v2992 = vld [vmem:[#allocation9 + $0x120] sm:$0xff]
    %v2993 = vld [vmem:[#allocation9 + $0x128] sm:$0xff]
    %v2994 = vld [vmem:[#allocation9 + $0x130] sm:$0xff]
    %v2995 = vld [vmem:[#allocation9 + $0x138] sm:$0xff]
    %v2996 = vld [vmem:[#allocation9 + $0x140] sm:$0xff]
    %v2997 = vld [vmem:[#allocation9 + $0x148] sm:$0xff]
    %v2998 = vld [vmem:[#allocation9 + $0x150] sm:$0xff]
    %v2999 = vld [vmem:[#allocation9 + $0x158] sm:$0xff]
    %v3000 = vld [vmem:[#allocation9 + $0x160] sm:$0xff]
    %v3001 = vld [vmem:[#allocation9 + $0x168] sm:$0xff]
    %v3002 = vld [vmem:[#allocation9 + $0x170] sm:$0xff]
    %v3003 = vld [vmem:[#allocation9 + $0x178] sm:$0xff]
    %v3004 = vld [vmem:[#allocation9 + $0x180] sm:$0xff]
    %v3005 = vld [vmem:[#allocation9 + $0x188] sm:$0xff]
    %v3006 = vld [vmem:[#allocation9 + $0x190] sm:$0xff]
    %v3007 = vld [vmem:[#allocation9 + $0x198] sm:$0xff]
    %v3008 = vld [vmem:[#allocation9 + $0x1a0] sm:$0xff]
    %v3009 = vld [vmem:[#allocation9 + $0x1a8] sm:$0xff]
    %v3010 = vld [vmem:[#allocation9 + $0x1b0] sm:$0xff]
    %v3011 = vld [vmem:[#allocation9 + $0x1b8] sm:$0xff]
    %v3012 = vld [vmem:[#allocation9 + $0x1c0] sm:$0xff]
    %v3013 = vld [vmem:[#allocation9 + $0x1c8] sm:$0xff]
    %v3014 = vld [vmem:[#allocation9 + $0x1d0] sm:$0xff]
    %v3015 = vld [vmem:[#allocation9 + $0x1d8] sm:$0xff]
    %v3016 = vld [vmem:[#allocation9 + $0x1e0] sm:$0xff]
    %v3017 = vld [vmem:[#allocation9 + $0x1e8] sm:$0xff]
    %v3018 = vld [vmem:[#allocation9 + $0x1f0] sm:$0xff]
    %v3019 = vld [vmem:[#allocation9 + $0x1f8] sm:$0xff]
    %3020 = vmatprep.subr.mxu0 %v3017
    %3021 = vmatpush1.msra.mxu0 %v3016
    %3022 = vmatprep.subr.mxu0 %v3013
    %3023 = vmatpush1.msra.mxu0 %v3012
    %3024 = vmatprep.subr.mxu0 %v3009
    %3025 = vmatpush1.msra.mxu0 %v3008
    %3026 = vmatprep.subr.mxu0 %v3005
    %3027 = vmatpush1.msra.mxu0 %v3004
    %3028 = vmatprep.subr.mxu0 %v3001
    %3029 = vmatpush1.msra.mxu0 %v3000
    %3030 = vmatprep.subr.mxu0 %v2997
    %3031 = vmatpush1.msra.mxu0 %v2996
    %3032 = vmatprep.subr.mxu0 %v2993
    %3033 = vmatpush1.msra.mxu0 %v2992
    %3034 = vmatprep.subr.mxu0 %v2989
    %3035 = vmatpush1.msra.mxu0 %v2988
    %3036 = vmatprep.subr.mxu0 %v2985
    %3037 = vmatpush1.msra.mxu0 %v2984
    %3038 = vmatprep.subr.mxu0 %v2981
    %3039 = vmatpush1.msra.mxu0 %v2980
    %3040 = vmatprep.subr.mxu0 %v2977
    %3041 = vmatpush1.msra.mxu0 %v2976
    %3042 = vmatprep.subr.mxu0 %v2973
    %3043 = vmatpush1.msra.mxu0 %v2972
    %3044 = vmatprep.subr.mxu0 %v2969
    %3045 = vmatpush1.msra.mxu0 %v2968
    %3046 = vmatprep.subr.mxu0 %v2965
    %3047 = vmatpush1.msra.mxu0 %v2964
    %3048 = vmatprep.subr.mxu0 %v2961
    %3049 = vmatpush1.msra.mxu0 %v2960
    %3050 = vmatprep.subr.mxu0 %v2957
    %3051 = vmatpush1.msra.mxu0 %v2956
    %3052 = vmatprep.subr.mxu0 0.0
    %3053 = vmatpush2.msra.mxu0 0.0
    %3054 = vmatprep.subr.mxu0 0.0
    %3055 = vmatpush2.msra.mxu0 0.0
    %3056 = vmatprep.subr.mxu0 0.0
    %3057 = vmatpush2.msra.mxu0 0.0
    %3058 = vmatprep.subr.mxu0 0.0
    %3059 = vmatpush2.msra.mxu0 0.0
    %3060 = vmatprep.subr.mxu0 0.0
    %3061 = vmatpush2.msra.mxu0 0.0
    %3062 = vmatprep.subr.mxu0 0.0
    %3063 = vmatpush2.msra.mxu0 0.0
    %3064 = vmatprep.subr.mxu0 0.0
    %3065 = vmatpush2.msra.mxu0 0.0
    %3066 = vmatprep.subr.mxu0 0.0
    %3067 = vmatpush2.msra.mxu0 0.0
    %3068 = vmatprep.subr.mxu0 0.0
    %3069 = vmatpush2.msra.mxu0 0.0
    %3070 = vmatprep.subr.mxu0 0.0
    %3071 = vmatpush2.msra.mxu0 0.0
    %3072 = vmatprep.subr.mxu0 0.0
    %3073 = vmatpush2.msra.mxu0 0.0
    %3074 = vmatprep.subr.mxu0 0.0
    %3075 = vmatpush2.msra.mxu0 0.0
    %3076 = vmatprep.subr.mxu0 0.0
    %3077 = vmatpush2.msra.mxu0 0.0
    %3078 = vmatprep.subr.mxu0 0.0
    %3079 = vmatpush2.msra.mxu0 0.0
    %3080 = vmatprep.subr.mxu0 0.0
    %3081 = vmatpush2.msra.mxu0 0.0
    %3082 = vmatprep.subr.mxu0 0.0
    %3083 = vmatpush2.msra.mxu0 0.0
    %3084 = vmatprep.mubr.f32.mxu0 0.0
    %3085 = vmatmul.mubr.f32.gmra.mxu0 %v2950
    %v3086 = vpop.f32.mrf.mxu0
    %v3087 = vadd.f32 0.0, %v3086
    %v3088 = vpop.f32.mrf.mxu0
    %v3089 = vadd.f32 0.0, %v3088
    %3090 = vdwg.mxu0
    %3091 = vmatprep.subr.mxu0 %v3019
    %3092 = vmatpush1.msra.mxu0 %v3018
    %3093 = vmatprep.subr.mxu0 %v3015
    %3094 = vmatpush1.msra.mxu0 %v3014
    %3095 = vmatprep.subr.mxu0 %v3011
    %3096 = vmatpush1.msra.mxu0 %v3010
    %3097 = vmatprep.subr.mxu0 %v3007
    %3098 = vmatpush1.msra.mxu0 %v3006
    %3099 = vmatprep.subr.mxu0 %v3003
    %3100 = vmatpush1.msra.mxu0 %v3002
    %3101 = vmatprep.subr.mxu0 %v2999
    %3102 = vmatpush1.msra.mxu0 %v2998
    %3103 = vmatprep.subr.mxu0 %v2995
    %3104 = vmatpush1.msra.mxu0 %v2994
    %3105 = vmatprep.subr.mxu0 %v2991
    %3106 = vmatpush1.msra.mxu0 %v2990
    %3107 = vmatprep.subr.mxu0 %v2987
    %3108 = vmatpush1.msra.mxu0 %v2986
    %3109 = vmatprep.subr.mxu0 %v2983
    %3110 = vmatpush1.msra.mxu0 %v2982
    %3111 = vmatprep.subr.mxu0 %v2979
    %3112 = vmatpush1.msra.mxu0 %v2978
    %3113 = vmatprep.subr.mxu0 %v2975
    %3114 = vmatpush1.msra.mxu0 %v2974
    %3115 = vmatprep.subr.mxu0 %v2971
    %3116 = vmatpush1.msra.mxu0 %v2970
    %3117 = vmatprep.subr.mxu0 %v2967
    %3118 = vmatpush1.msra.mxu0 %v2966
    %3119 = vmatprep.subr.mxu0 %v2963
    %3120 = vmatpush1.msra.mxu0 %v2962
    %3121 = vmatprep.subr.mxu0 %v2959
    %3122 = vmatpush1.msra.mxu0 %v2958
    %3123 = vmatprep.subr.mxu0 0.0
    %3124 = vmatpush2.msra.mxu0 0.0
    %3125 = vmatprep.subr.mxu0 0.0
    %3126 = vmatpush2.msra.mxu0 0.0
    %3127 = vmatprep.subr.mxu0 0.0
    %3128 = vmatpush2.msra.mxu0 0.0
    %3129 = vmatprep.subr.mxu0 0.0
    %3130 = vmatpush2.msra.mxu0 0.0
    %3131 = vmatprep.subr.mxu0 0.0
    %3132 = vmatpush2.msra.mxu0 0.0
    %3133 = vmatprep.subr.mxu0 0.0
    %3134 = vmatpush2.msra.mxu0 0.0
    %3135 = vmatprep.subr.mxu0 0.0
    %3136 = vmatpush2.msra.mxu0 0.0
    %3137 = vmatprep.subr.mxu0 0.0
    %3138 = vmatpush2.msra.mxu0 0.0
    %3139 = vmatprep.subr.mxu0 0.0
    %3140 = vmatpush2.msra.mxu0 0.0
    %3141 = vmatprep.subr.mxu0 0.0
    %3142 = vmatpush2.msra.mxu0 0.0
    %3143 = vmatprep.subr.mxu0 0.0
    %3144 = vmatpush2.msra.mxu0 0.0
    %3145 = vmatprep.subr.mxu0 0.0
    %3146 = vmatpush2.msra.mxu0 0.0
    %3147 = vmatprep.subr.mxu0 0.0
    %3148 = vmatpush2.msra.mxu0 0.0
    %3149 = vmatprep.subr.mxu0 0.0
    %3150 = vmatpush2.msra.mxu0 0.0
    %3151 = vmatprep.subr.mxu0 0.0
    %3152 = vmatpush2.msra.mxu0 0.0
    %3153 = vmatprep.subr.mxu0 0.0
    %3154 = vmatpush2.msra.mxu0 0.0
    %3155 = vmatprep.mubr.f32.mxu0 0.0
    %3156 = vmatmul.mubr.f32.gmra.mxu0 %v2950
    %v3157 = vpop.f32.mrf.mxu0
    %v3158 = vadd.f32 0.0, %v3157
    %v3159 = vpop.f32.mrf.mxu0
    %v3160 = vadd.f32 0.0, %v3159
    %3161 = vdwg.mxu0
    %v3162 = vadd.f32 %v2952, %v3087
    %v3163 = vadd.f32 %v2953, %v3089
    %v3164 = vadd.f32 %v2954, %v3158
    %v3165 = vadd.f32 %v2955, %v3160
    %v3166 = vxor.u32 %v3162, 2147483648
    %v3167 = vmul.f32 %v3166, 1.442695
    %v3168 = vpow.pop %v3167
    %v3169 = vadd.f32 %v3168, 1.0
    %v3170 = vrcp.pop %v3169
    %v3171 = vmul.f32 1.0, %v3170
    %v3172 = vtanh.pop %v3164
    %v3173 = vxor.u32 %v3165, 2147483648
    %v3174 = vmul.f32 %v3173, 1.442695
    %v3175 = vpow.pop %v3174
    %v3176 = vadd.f32 %v3175, 1.0
    %v3177 = vrcp.pop %v3176
    %v3178 = vmul.f32 1.0, %v3177
    %v3179 = vxor.u32 %v3163, 2147483648
    %v3180 = vmul.f32 %v3179, 1.442695
    %v3181 = vpow.pop %v3180
    %v3182 = vadd.f32 %v3181, 1.0
    %v3183 = vrcp.pop %v3182
    %v3184 = vmul.f32 1.0, %v3183
    %v3185 = vmul.f32 %v3184, %v2948
    %v3186 = vmul.f32 %v3171, %v3172
    %v3187 = vadd.f32 %v3185, %v3186
    %v3188 = vtanh.pop %v3187
    %v3189 = vmul.f32 %v3178, %v3188
    %3190 = vst [vmem:[#allocation3 + $0x18] sm:$0xff] %v3189
    %v3191 = vld [vmem:[#allocation2 + $0x80] sm:$0xff]
    %v3192 = vld [vmem:[#allocation2 + $0x88] sm:$0xff]
    %v3193 = vld [vmem:[#allocation2 + $0x90] sm:$0xff]
    %v3194 = vld [vmem:[#allocation2 + $0x98] sm:$0xff]
    %v3195 = vld [vmem:[#allocation9] sm:$0xff]
    %v3196 = vld [vmem:[#allocation9 + $0x8] sm:$0xff]
    %v3197 = vld [vmem:[#allocation9 + $0x10] sm:$0xff]
    %v3198 = vld [vmem:[#allocation9 + $0x18] sm:$0xff]
    %v3199 = vld [vmem:[#allocation9 + $0x20] sm:$0xff]
    %v3200 = vld [vmem:[#allocation9 + $0x28] sm:$0xff]
    %v3201 = vld [vmem:[#allocation9 + $0x30] sm:$0xff]
    %v3202 = vld [vmem:[#allocation9 + $0x38] sm:$0xff]
    %v3203 = vld [vmem:[#allocation9 + $0x40] sm:$0xff]
    %v3204 = vld [vmem:[#allocation9 + $0x48] sm:$0xff]
    %v3205 = vld [vmem:[#allocation9 + $0x50] sm:$0xff]
    %v3206 = vld [vmem:[#allocation9 + $0x58] sm:$0xff]
    %v3207 = vld [vmem:[#allocation9 + $0x60] sm:$0xff]
    %v3208 = vld [vmem:[#allocation9 + $0x68] sm:$0xff]
    %v3209 = vld [vmem:[#allocation9 + $0x70] sm:$0xff]
    %v3210 = vld [vmem:[#allocation9 + $0x78] sm:$0xff]
    %v3211 = vld [vmem:[#allocation9 + $0x80] sm:$0xff]
    %v3212 = vld [vmem:[#allocation9 + $0x88] sm:$0xff]
    %v3213 = vld [vmem:[#allocation9 + $0x90] sm:$0xff]
    %v3214 = vld [vmem:[#allocation9 + $0x98] sm:$0xff]
    %v3215 = vld [vmem:[#allocation9 + $0xa0] sm:$0xff]
    %v3216 = vld [vmem:[#allocation9 + $0xa8] sm:$0xff]
    %v3217 = vld [vmem:[#allocation9 + $0xb0] sm:$0xff]
    %v3218 = vld [vmem:[#allocation9 + $0xb8] sm:$0xff]
    %v3219 = vld [vmem:[#allocation9 + $0xc0] sm:$0xff]
    %v3220 = vld [vmem:[#allocation9 + $0xc8] sm:$0xff]
    %v3221 = vld [vmem:[#allocation9 + $0xd0] sm:$0xff]
    %v3222 = vld [vmem:[#allocation9 + $0xd8] sm:$0xff]
    %v3223 = vld [vmem:[#allocation9 + $0xe0] sm:$0xff]
    %v3224 = vld [vmem:[#allocation9 + $0xe8] sm:$0xff]
    %v3225 = vld [vmem:[#allocation9 + $0xf0] sm:$0xff]
    %v3226 = vld [vmem:[#allocation9 + $0xf8] sm:$0xff]
    %v3227 = vld [vmem:[#allocation9 + $0x100] sm:$0xff]
    %v3228 = vld [vmem:[#allocation9 + $0x108] sm:$0xff]
    %v3229 = vld [vmem:[#allocation9 + $0x110] sm:$0xff]
    %v3230 = vld [vmem:[#allocation9 + $0x118] sm:$0xff]
    %v3231 = vld [vmem:[#allocation9 + $0x120] sm:$0xff]
    %v3232 = vld [vmem:[#allocation9 + $0x128] sm:$0xff]
    %v3233 = vld [vmem:[#allocation9 + $0x130] sm:$0xff]
    %v3234 = vld [vmem:[#allocation9 + $0x138] sm:$0xff]
    %v3235 = vld [vmem:[#allocation9 + $0x140] sm:$0xff]
    %v3236 = vld [vmem:[#allocation9 + $0x148] sm:$0xff]
    %v3237 = vld [vmem:[#allocation9 + $0x150] sm:$0xff]
    %v3238 = vld [vmem:[#allocation9 + $0x158] sm:$0xff]
    %v3239 = vld [vmem:[#allocation9 + $0x160] sm:$0xff]
    %v3240 = vld [vmem:[#allocation9 + $0x168] sm:$0xff]
    %v3241 = vld [vmem:[#allocation9 + $0x170] sm:$0xff]
    %v3242 = vld [vmem:[#allocation9 + $0x178] sm:$0xff]
    %v3243 = vld [vmem:[#allocation9 + $0x180] sm:$0xff]
    %v3244 = vld [vmem:[#allocation9 + $0x188] sm:$0xff]
    %v3245 = vld [vmem:[#allocation9 + $0x190] sm:$0xff]
    %v3246 = vld [vmem:[#allocation9 + $0x198] sm:$0xff]
    %v3247 = vld [vmem:[#allocation9 + $0x1a0] sm:$0xff]
    %v3248 = vld [vmem:[#allocation9 + $0x1a8] sm:$0xff]
    %v3249 = vld [vmem:[#allocation9 + $0x1b0] sm:$0xff]
    %v3250 = vld [vmem:[#allocation9 + $0x1b8] sm:$0xff]
    %v3251 = vld [vmem:[#allocation9 + $0x1c0] sm:$0xff]
    %v3252 = vld [vmem:[#allocation9 + $0x1c8] sm:$0xff]
    %v3253 = vld [vmem:[#allocation9 + $0x1d0] sm:$0xff]
    %v3254 = vld [vmem:[#allocation9 + $0x1d8] sm:$0xff]
    %v3255 = vld [vmem:[#allocation9 + $0x1e0] sm:$0xff]
    %v3256 = vld [vmem:[#allocation9 + $0x1e8] sm:$0xff]
    %v3257 = vld [vmem:[#allocation9 + $0x1f0] sm:$0xff]
    %v3258 = vld [vmem:[#allocation9 + $0x1f8] sm:$0xff]
    %3259 = vmatprep.subr.mxu0 %v3256
    %3260 = vmatpush1.msra.mxu0 %v3255
    %3261 = vmatprep.subr.mxu0 %v3252
    %3262 = vmatpush1.msra.mxu0 %v3251
    %3263 = vmatprep.subr.mxu0 %v3248
    %3264 = vmatpush1.msra.mxu0 %v3247
    %3265 = vmatprep.subr.mxu0 %v3244
    %3266 = vmatpush1.msra.mxu0 %v3243
    %3267 = vmatprep.subr.mxu0 %v3240
    %3268 = vmatpush1.msra.mxu0 %v3239
    %3269 = vmatprep.subr.mxu0 %v3236
    %3270 = vmatpush1.msra.mxu0 %v3235
    %3271 = vmatprep.subr.mxu0 %v3232
    %3272 = vmatpush1.msra.mxu0 %v3231
    %3273 = vmatprep.subr.mxu0 %v3228
    %3274 = vmatpush1.msra.mxu0 %v3227
    %3275 = vmatprep.subr.mxu0 %v3224
    %3276 = vmatpush1.msra.mxu0 %v3223
    %3277 = vmatprep.subr.mxu0 %v3220
    %3278 = vmatpush1.msra.mxu0 %v3219
    %3279 = vmatprep.subr.mxu0 %v3216
    %3280 = vmatpush1.msra.mxu0 %v3215
    %3281 = vmatprep.subr.mxu0 %v3212
    %3282 = vmatpush1.msra.mxu0 %v3211
    %3283 = vmatprep.subr.mxu0 %v3208
    %3284 = vmatpush1.msra.mxu0 %v3207
    %3285 = vmatprep.subr.mxu0 %v3204
    %3286 = vmatpush1.msra.mxu0 %v3203
    %3287 = vmatprep.subr.mxu0 %v3200
    %3288 = vmatpush1.msra.mxu0 %v3199
    %3289 = vmatprep.subr.mxu0 %v3196
    %3290 = vmatpush1.msra.mxu0 %v3195
    %3291 = vmatprep.subr.mxu0 0.0
    %3292 = vmatpush2.msra.mxu0 0.0
    %3293 = vmatprep.subr.mxu0 0.0
    %3294 = vmatpush2.msra.mxu0 0.0
    %3295 = vmatprep.subr.mxu0 0.0
    %3296 = vmatpush2.msra.mxu0 0.0
    %3297 = vmatprep.subr.mxu0 0.0
    %3298 = vmatpush2.msra.mxu0 0.0
    %3299 = vmatprep.subr.mxu0 0.0
    %3300 = vmatpush2.msra.mxu0 0.0
    %3301 = vmatprep.subr.mxu0 0.0
    %3302 = vmatpush2.msra.mxu0 0.0
    %3303 = vmatprep.subr.mxu0 0.0
    %3304 = vmatpush2.msra.mxu0 0.0
    %3305 = vmatprep.subr.mxu0 0.0
    %3306 = vmatpush2.msra.mxu0 0.0
    %3307 = vmatprep.subr.mxu0 0.0
    %3308 = vmatpush2.msra.mxu0 0.0
    %3309 = vmatprep.subr.mxu0 0.0
    %3310 = vmatpush2.msra.mxu0 0.0
    %3311 = vmatprep.subr.mxu0 0.0
    %3312 = vmatpush2.msra.mxu0 0.0
    %3313 = vmatprep.subr.mxu0 0.0
    %3314 = vmatpush2.msra.mxu0 0.0
    %3315 = vmatprep.subr.mxu0 0.0
    %3316 = vmatpush2.msra.mxu0 0.0
    %3317 = vmatprep.subr.mxu0 0.0
    %3318 = vmatpush2.msra.mxu0 0.0
    %3319 = vmatprep.subr.mxu0 0.0
    %3320 = vmatpush2.msra.mxu0 0.0
    %3321 = vmatprep.subr.mxu0 0.0
    %3322 = vmatpush2.msra.mxu0 0.0
    %3323 = vmatprep.mubr.f32.mxu0 0.0
    %3324 = vmatmul.mubr.f32.gmra.mxu0 %v3189
    %v3325 = vpop.f32.mrf.mxu0
    %v3326 = vadd.f32 0.0, %v3325
    %v3327 = vpop.f32.mrf.mxu0
    %v3328 = vadd.f32 0.0, %v3327
    %3329 = vdwg.mxu0
    %3330 = vmatprep.subr.mxu0 %v3258
    %3331 = vmatpush1.msra.mxu0 %v3257
    %3332 = vmatprep.subr.mxu0 %v3254
    %3333 = vmatpush1.msra.mxu0 %v3253
    %3334 = vmatprep.subr.mxu0 %v3250
    %3335 = vmatpush1.msra.mxu0 %v3249
    %3336 = vmatprep.subr.mxu0 %v3246
    %3337 = vmatpush1.msra.mxu0 %v3245
    %3338 = vmatprep.subr.mxu0 %v3242
    %3339 = vmatpush1.msra.mxu0 %v3241
    %3340 = vmatprep.subr.mxu0 %v3238
    %3341 = vmatpush1.msra.mxu0 %v3237
    %3342 = vmatprep.subr.mxu0 %v3234
    %3343 = vmatpush1.msra.mxu0 %v3233
    %3344 = vmatprep.subr.mxu0 %v3230
    %3345 = vmatpush1.msra.mxu0 %v3229
    %3346 = vmatprep.subr.mxu0 %v3226
    %3347 = vmatpush1.msra.mxu0 %v3225
    %3348 = vmatprep.subr.mxu0 %v3222
    %3349 = vmatpush1.msra.mxu0 %v3221
    %3350 = vmatprep.subr.mxu0 %v3218
    %3351 = vmatpush1.msra.mxu0 %v3217
    %3352 = vmatprep.subr.mxu0 %v3214
    %3353 = vmatpush1.msra.mxu0 %v3213
    %3354 = vmatprep.subr.mxu0 %v3210
    %3355 = vmatpush1.msra.mxu0 %v3209
    %3356 = vmatprep.subr.mxu0 %v3206
    %3357 = vmatpush1.msra.mxu0 %v3205
    %3358 = vmatprep.subr.mxu0 %v3202
    %3359 = vmatpush1.msra.mxu0 %v3201
    %3360 = vmatprep.subr.mxu0 %v3198
    %3361 = vmatpush1.msra.mxu0 %v3197
    %3362 = vmatprep.subr.mxu0 0.0
    %3363 = vmatpush2.msra.mxu0 0.0
    %3364 = vmatprep.subr.mxu0 0.0
    %3365 = vmatpush2.msra.mxu0 0.0
    %3366 = vmatprep.subr.mxu0 0.0
    %3367 = vmatpush2.msra.mxu0 0.0
    %3368 = vmatprep.subr.mxu0 0.0
    %3369 = vmatpush2.msra.mxu0 0.0
    %3370 = vmatprep.subr.mxu0 0.0
    %3371 = vmatpush2.msra.mxu0 0.0
    %3372 = vmatprep.subr.mxu0 0.0
    %3373 = vmatpush2.msra.mxu0 0.0
    %3374 = vmatprep.subr.mxu0 0.0
    %3375 = vmatpush2.msra.mxu0 0.0
    %3376 = vmatprep.subr.mxu0 0.0
    %3377 = vmatpush2.msra.mxu0 0.0
    %3378 = vmatprep.subr.mxu0 0.0
    %3379 = vmatpush2.msra.mxu0 0.0
    %3380 = vmatprep.subr.mxu0 0.0
    %3381 = vmatpush2.msra.mxu0 0.0
    %3382 = vmatprep.subr.mxu0 0.0
    %3383 = vmatpush2.msra.mxu0 0.0
    %3384 = vmatprep.subr.mxu0 0.0
    %3385 = vmatpush2.msra.mxu0 0.0
    %3386 = vmatprep.subr.mxu0 0.0
    %3387 = vmatpush2.msra.mxu0 0.0
    %3388 = vmatprep.subr.mxu0 0.0
    %3389 = vmatpush2.msra.mxu0 0.0
    %3390 = vmatprep.subr.mxu0 0.0
    %3391 = vmatpush2.msra.mxu0 0.0
    %3392 = vmatprep.subr.mxu0 0.0
    %3393 = vmatpush2.msra.mxu0 0.0
    %3394 = vmatprep.mubr.f32.mxu0 0.0
    %3395 = vmatmul.mubr.f32.gmra.mxu0 %v3189
    %v3396 = vpop.f32.mrf.mxu0
    %v3397 = vadd.f32 0.0, %v3396
    %v3398 = vpop.f32.mrf.mxu0
    %v3399 = vadd.f32 0.0, %v3398
    %3400 = vdwg.mxu0
    %v3401 = vadd.f32 %v3191, %v3326
    %v3402 = vadd.f32 %v3192, %v3328
    %v3403 = vadd.f32 %v3193, %v3397
    %v3404 = vadd.f32 %v3194, %v3399
    %v3405 = vxor.u32 %v3401, 2147483648
    %v3406 = vmul.f32 %v3405, 1.442695
    %v3407 = vpow.pop %v3406
    %v3408 = vadd.f32 %v3407, 1.0
    %v3409 = vrcp.pop %v3408
    %v3410 = vmul.f32 1.0, %v3409
    %v3411 = vtanh.pop %v3403
    %v3412 = vxor.u32 %v3404, 2147483648
    %v3413 = vmul.f32 %v3412, 1.442695
    %v3414 = vpow.pop %v3413
    %v3415 = vadd.f32 %v3414, 1.0
    %v3416 = vrcp.pop %v3415
    %v3417 = vmul.f32 1.0, %v3416
    %v3418 = vxor.u32 %v3402, 2147483648
    %v3419 = vmul.f32 %v3418, 1.442695
    %v3420 = vpow.pop %v3419
    %v3421 = vadd.f32 %v3420, 1.0
    %v3422 = vrcp.pop %v3421
    %v3423 = vmul.f32 1.0, %v3422
    %v3424 = vmul.f32 %v3423, %v3187
    %v3425 = vmul.f32 %v3410, %v3411
    %v3426 = vadd.f32 %v3424, %v3425
    %v3427 = vtanh.pop %v3426
    %v3428 = vmul.f32 %v3417, %v3427
    %3429 = vst [vmem:[#allocation3 + $0x20] sm:$0xff] %v3428
    %v3430 = vld [vmem:[#allocation2 + $0xa0] sm:$0xff]
    %v3431 = vld [vmem:[#allocation2 + $0xa8] sm:$0xff]
    %v3432 = vld [vmem:[#allocation2 + $0xb0] sm:$0xff]
    %v3433 = vld [vmem:[#allocation2 + $0xb8] sm:$0xff]
    %v3434 = vld [vmem:[#allocation9] sm:$0xff]
    %v3435 = vld [vmem:[#allocation9 + $0x8] sm:$0xff]
    %v3436 = vld [vmem:[#allocation9 + $0x10] sm:$0xff]
    %v3437 = vld [vmem:[#allocation9 + $0x18] sm:$0xff]
    %v3438 = vld [vmem:[#allocation9 + $0x20] sm:$0xff]
    %v3439 = vld [vmem:[#allocation9 + $0x28] sm:$0xff]
    %v3440 = vld [vmem:[#allocation9 + $0x30] sm:$0xff]
    %v3441 = vld [vmem:[#allocation9 + $0x38] sm:$0xff]
    %v3442 = vld [vmem:[#allocation9 + $0x40] sm:$0xff]
    %v3443 = vld [vmem:[#allocation9 + $0x48] sm:$0xff]
    %v3444 = vld [vmem:[#allocation9 + $0x50] sm:$0xff]
    %v3445 = vld [vmem:[#allocation9 + $0x58] sm:$0xff]
    %v3446 = vld [vmem:[#allocation9 + $0x60] sm:$0xff]
    %v3447 = vld [vmem:[#allocation9 + $0x68] sm:$0xff]
    %v3448 = vld [vmem:[#allocation9 + $0x70] sm:$0xff]
    %v3449 = vld [vmem:[#allocation9 + $0x78] sm:$0xff]
    %v3450 = vld [vmem:[#allocation9 + $0x80] sm:$0xff]
    %v3451 = vld [vmem:[#allocation9 + $0x88] sm:$0xff]
    %v3452 = vld [vmem:[#allocation9 + $0x90] sm:$0xff]
    %v3453 = vld [vmem:[#allocation9 + $0x98] sm:$0xff]
    %v3454 = vld [vmem:[#allocation9 + $0xa0] sm:$0xff]
    %v3455 = vld [vmem:[#allocation9 + $0xa8] sm:$0xff]
    %v3456 = vld [vmem:[#allocation9 + $0xb0] sm:$0xff]
    %v3457 = vld [vmem:[#allocation9 + $0xb8] sm:$0xff]
    %v3458 = vld [vmem:[#allocation9 + $0xc0] sm:$0xff]
    %v3459 = vld [vmem:[#allocation9 + $0xc8] sm:$0xff]
    %v3460 = vld [vmem:[#allocation9 + $0xd0] sm:$0xff]
    %v3461 = vld [vmem:[#allocation9 + $0xd8] sm:$0xff]
    %v3462 = vld [vmem:[#allocation9 + $0xe0] sm:$0xff]
    %v3463 = vld [vmem:[#allocation9 + $0xe8] sm:$0xff]
    %v3464 = vld [vmem:[#allocation9 + $0xf0] sm:$0xff]
    %v3465 = vld [vmem:[#allocation9 + $0xf8] sm:$0xff]
    %v3466 = vld [vmem:[#allocation9 + $0x100] sm:$0xff]
    %v3467 = vld [vmem:[#allocation9 + $0x108] sm:$0xff]
    %v3468 = vld [vmem:[#allocation9 + $0x110] sm:$0xff]
    %v3469 = vld [vmem:[#allocation9 + $0x118] sm:$0xff]
    %v3470 = vld [vmem:[#allocation9 + $0x120] sm:$0xff]
    %v3471 = vld [vmem:[#allocation9 + $0x128] sm:$0xff]
    %v3472 = vld [vmem:[#allocation9 + $0x130] sm:$0xff]
    %v3473 = vld [vmem:[#allocation9 + $0x138] sm:$0xff]
    %v3474 = vld [vmem:[#allocation9 + $0x140] sm:$0xff]
    %v3475 = vld [vmem:[#allocation9 + $0x148] sm:$0xff]
    %v3476 = vld [vmem:[#allocation9 + $0x150] sm:$0xff]
    %v3477 = vld [vmem:[#allocation9 + $0x158] sm:$0xff]
    %v3478 = vld [vmem:[#allocation9 + $0x160] sm:$0xff]
    %v3479 = vld [vmem:[#allocation9 + $0x168] sm:$0xff]
    %v3480 = vld [vmem:[#allocation9 + $0x170] sm:$0xff]
    %v3481 = vld [vmem:[#allocation9 + $0x178] sm:$0xff]
    %v3482 = vld [vmem:[#allocation9 + $0x180] sm:$0xff]
    %v3483 = vld [vmem:[#allocation9 + $0x188] sm:$0xff]
    %v3484 = vld [vmem:[#allocation9 + $0x190] sm:$0xff]
    %v3485 = vld [vmem:[#allocation9 + $0x198] sm:$0xff]
    %v3486 = vld [vmem:[#allocation9 + $0x1a0] sm:$0xff]
    %v3487 = vld [vmem:[#allocation9 + $0x1a8] sm:$0xff]
    %v3488 = vld [vmem:[#allocation9 + $0x1b0] sm:$0xff]
    %v3489 = vld [vmem:[#allocation9 + $0x1b8] sm:$0xff]
    %v3490 = vld [vmem:[#allocation9 + $0x1c0] sm:$0xff]
    %v3491 = vld [vmem:[#allocation9 + $0x1c8] sm:$0xff]
    %v3492 = vld [vmem:[#allocation9 + $0x1d0] sm:$0xff]
    %v3493 = vld [vmem:[#allocation9 + $0x1d8] sm:$0xff]
    %v3494 = vld [vmem:[#allocation9 + $0x1e0] sm:$0xff]
    %v3495 = vld [vmem:[#allocation9 + $0x1e8] sm:$0xff]
    %v3496 = vld [vmem:[#allocation9 + $0x1f0] sm:$0xff]
    %v3497 = vld [vmem:[#allocation9 + $0x1f8] sm:$0xff]
    %3498 = vmatprep.subr.mxu0 %v3495
    %3499 = vmatpush1.msra.mxu0 %v3494
    %3500 = vmatprep.subr.mxu0 %v3491
    %3501 = vmatpush1.msra.mxu0 %v3490
    %3502 = vmatprep.subr.mxu0 %v3487
    %3503 = vmatpush1.msra.mxu0 %v3486
    %3504 = vmatprep.subr.mxu0 %v3483
    %3505 = vmatpush1.msra.mxu0 %v3482
    %3506 = vmatprep.subr.mxu0 %v3479
    %3507 = vmatpush1.msra.mxu0 %v3478
    %3508 = vmatprep.subr.mxu0 %v3475
    %3509 = vmatpush1.msra.mxu0 %v3474
    %3510 = vmatprep.subr.mxu0 %v3471
    %3511 = vmatpush1.msra.mxu0 %v3470
    %3512 = vmatprep.subr.mxu0 %v3467
    %3513 = vmatpush1.msra.mxu0 %v3466
    %3514 = vmatprep.subr.mxu0 %v3463
    %3515 = vmatpush1.msra.mxu0 %v3462
    %3516 = vmatprep.subr.mxu0 %v3459
    %3517 = vmatpush1.msra.mxu0 %v3458
    %3518 = vmatprep.subr.mxu0 %v3455
    %3519 = vmatpush1.msra.mxu0 %v3454
    %3520 = vmatprep.subr.mxu0 %v3451
    %3521 = vmatpush1.msra.mxu0 %v3450
    %3522 = vmatprep.subr.mxu0 %v3447
    %3523 = vmatpush1.msra.mxu0 %v3446
    %3524 = vmatprep.subr.mxu0 %v3443
    %3525 = vmatpush1.msra.mxu0 %v3442
    %3526 = vmatprep.subr.mxu0 %v3439
    %3527 = vmatpush1.msra.mxu0 %v3438
    %3528 = vmatprep.subr.mxu0 %v3435
    %3529 = vmatpush1.msra.mxu0 %v3434
    %3530 = vmatprep.subr.mxu0 0.0
    %3531 = vmatpush2.msra.mxu0 0.0
    %3532 = vmatprep.subr.mxu0 0.0
    %3533 = vmatpush2.msra.mxu0 0.0
    %3534 = vmatprep.subr.mxu0 0.0
    %3535 = vmatpush2.msra.mxu0 0.0
    %3536 = vmatprep.subr.mxu0 0.0
    %3537 = vmatpush2.msra.mxu0 0.0
    %3538 = vmatprep.subr.mxu0 0.0
    %3539 = vmatpush2.msra.mxu0 0.0
    %3540 = vmatprep.subr.mxu0 0.0
    %3541 = vmatpush2.msra.mxu0 0.0
    %3542 = vmatprep.subr.mxu0 0.0
    %3543 = vmatpush2.msra.mxu0 0.0
    %3544 = vmatprep.subr.mxu0 0.0
    %3545 = vmatpush2.msra.mxu0 0.0
    %3546 = vmatprep.subr.mxu0 0.0
    %3547 = vmatpush2.msra.mxu0 0.0
    %3548 = vmatprep.subr.mxu0 0.0
    %3549 = vmatpush2.msra.mxu0 0.0
    %3550 = vmatprep.subr.mxu0 0.0
    %3551 = vmatpush2.msra.mxu0 0.0
    %3552 = vmatprep.subr.mxu0 0.0
    %3553 = vmatpush2.msra.mxu0 0.0
    %3554 = vmatprep.subr.mxu0 0.0
    %3555 = vmatpush2.msra.mxu0 0.0
    %3556 = vmatprep.subr.mxu0 0.0
    %3557 = vmatpush2.msra.mxu0 0.0
    %3558 = vmatprep.subr.mxu0 0.0
    %3559 = vmatpush2.msra.mxu0 0.0
    %3560 = vmatprep.subr.mxu0 0.0
    %3561 = vmatpush2.msra.mxu0 0.0
    %3562 = vmatprep.mubr.f32.mxu0 0.0
    %3563 = vmatmul.mubr.f32.gmra.mxu0 %v3428
    %v3564 = vpop.f32.mrf.mxu0
    %v3565 = vadd.f32 0.0, %v3564
    %v3566 = vpop.f32.mrf.mxu0
    %v3567 = vadd.f32 0.0, %v3566
    %3568 = vdwg.mxu0
    %3569 = vmatprep.subr.mxu0 %v3497
    %3570 = vmatpush1.msra.mxu0 %v3496
    %3571 = vmatprep.subr.mxu0 %v3493
    %3572 = vmatpush1.msra.mxu0 %v3492
    %3573 = vmatprep.subr.mxu0 %v3489
    %3574 = vmatpush1.msra.mxu0 %v3488
    %3575 = vmatprep.subr.mxu0 %v3485
    %3576 = vmatpush1.msra.mxu0 %v3484
    %3577 = vmatprep.subr.mxu0 %v3481
    %3578 = vmatpush1.msra.mxu0 %v3480
    %3579 = vmatprep.subr.mxu0 %v3477
    %3580 = vmatpush1.msra.mxu0 %v3476
    %3581 = vmatprep.subr.mxu0 %v3473
    %3582 = vmatpush1.msra.mxu0 %v3472
    %3583 = vmatprep.subr.mxu0 %v3469
    %3584 = vmatpush1.msra.mxu0 %v3468
    %3585 = vmatprep.subr.mxu0 %v3465
    %3586 = vmatpush1.msra.mxu0 %v3464
    %3587 = vmatprep.subr.mxu0 %v3461
    %3588 = vmatpush1.msra.mxu0 %v3460
    %3589 = vmatprep.subr.mxu0 %v3457
    %3590 = vmatpush1.msra.mxu0 %v3456
    %3591 = vmatprep.subr.mxu0 %v3453
    %3592 = vmatpush1.msra.mxu0 %v3452
    %3593 = vmatprep.subr.mxu0 %v3449
    %3594 = vmatpush1.msra.mxu0 %v3448
    %3595 = vmatprep.subr.mxu0 %v3445
    %3596 = vmatpush1.msra.mxu0 %v3444
    %3597 = vmatprep.subr.mxu0 %v3441
    %3598 = vmatpush1.msra.mxu0 %v3440
    %3599 = vmatprep.subr.mxu0 %v3437
    %3600 = vmatpush1.msra.mxu0 %v3436
    %3601 = vmatprep.subr.mxu0 0.0
    %3602 = vmatpush2.msra.mxu0 0.0
    %3603 = vmatprep.subr.mxu0 0.0
    %3604 = vmatpush2.msra.mxu0 0.0
    %3605 = vmatprep.subr.mxu0 0.0
    %3606 = vmatpush2.msra.mxu0 0.0
    %3607 = vmatprep.subr.mxu0 0.0
    %3608 = vmatpush2.msra.mxu0 0.0
    %3609 = vmatprep.subr.mxu0 0.0
    %3610 = vmatpush2.msra.mxu0 0.0
    %3611 = vmatprep.subr.mxu0 0.0
    %3612 = vmatpush2.msra.mxu0 0.0
    %3613 = vmatprep.subr.mxu0 0.0
    %3614 = vmatpush2.msra.mxu0 0.0
    %3615 = vmatprep.subr.mxu0 0.0
    %3616 = vmatpush2.msra.mxu0 0.0
    %3617 = vmatprep.subr.mxu0 0.0
    %3618 = vmatpush2.msra.mxu0 0.0
    %3619 = vmatprep.subr.mxu0 0.0
    %3620 = vmatpush2.msra.mxu0 0.0
    %3621 = vmatprep.subr.mxu0 0.0
    %3622 = vmatpush2.msra.mxu0 0.0
    %3623 = vmatprep.subr.mxu0 0.0
    %3624 = vmatpush2.msra.mxu0 0.0
    %3625 = vmatprep.subr.mxu0 0.0
    %3626 = vmatpush2.msra.mxu0 0.0
    %3627 = vmatprep.subr.mxu0 0.0
    %3628 = vmatpush2.msra.mxu0 0.0
    %3629 = vmatprep.subr.mxu0 0.0
    %3630 = vmatpush2.msra.mxu0 0.0
    %3631 = vmatprep.subr.mxu0 0.0
    %3632 = vmatpush2.msra.mxu0 0.0
    %3633 = vmatprep.mubr.f32.mxu0 0.0
    %3634 = vmatmul.mubr.f32.gmra.mxu0 %v3428
    %v3635 = vpop.f32.mrf.mxu0
    %v3636 = vadd.f32 0.0, %v3635
    %v3637 = vpop.f32.mrf.mxu0
    %v3638 = vadd.f32 0.0, %v3637
    %3639 = vdwg.mxu0
    %v3640 = vadd.f32 %v3430, %v3565
    %v3641 = vadd.f32 %v3431, %v3567
    %v3642 = vadd.f32 %v3432, %v3636
    %v3643 = vadd.f32 %v3433, %v3638
    %v3644 = vxor.u32 %v3640, 2147483648
    %v3645 = vmul.f32 %v3644, 1.442695
    %v3646 = vpow.pop %v3645
    %v3647 = vadd.f32 %v3646, 1.0
    %v3648 = vrcp.pop %v3647
    %v3649 = vmul.f32 1.0, %v3648
    %v3650 = vtanh.pop %v3642
    %v3651 = vxor.u32 %v3643, 2147483648
    %v3652 = vmul.f32 %v3651, 1.442695
    %v3653 = vpow.pop %v3652
    %v3654 = vadd.f32 %v3653, 1.0
    %v3655 = vrcp.pop %v3654
    %v3656 = vmul.f32 1.0, %v3655
    %v3657 = vxor.u32 %v3641, 2147483648
    %v3658 = vmul.f32 %v3657, 1.442695
    %v3659 = vpow.pop %v3658
    %v3660 = vadd.f32 %v3659, 1.0
    %v3661 = vrcp.pop %v3660
    %v3662 = vmul.f32 1.0, %v3661
    %v3663 = vmul.f32 %v3662, %v3426
    %v3664 = vmul.f32 %v3649, %v3650
    %v3665 = vadd.f32 %v3663, %v3664
    %v3666 = vtanh.pop %v3665
    %v3667 = vmul.f32 %v3656, %v3666
    %3668 = vst [vmem:[#allocation3 + $0x28] sm:$0xff] %v3667
    %v3669 = vld [vmem:[#allocation2 + $0xc0] sm:$0xff]
    %v3670 = vld [vmem:[#allocation2 + $0xc8] sm:$0xff]
    %v3671 = vld [vmem:[#allocation2 + $0xd0] sm:$0xff]
    %v3672 = vld [vmem:[#allocation2 + $0xd8] sm:$0xff]
    %v3673 = vld [vmem:[#allocation9] sm:$0xff]
    %v3674 = vld [vmem:[#allocation9 + $0x8] sm:$0xff]
    %v3675 = vld [vmem:[#allocation9 + $0x10] sm:$0xff]
    %v3676 = vld [vmem:[#allocation9 + $0x18] sm:$0xff]
    %v3677 = vld [vmem:[#allocation9 + $0x20] sm:$0xff]
    %v3678 = vld [vmem:[#allocation9 + $0x28] sm:$0xff]
    %v3679 = vld [vmem:[#allocation9 + $0x30] sm:$0xff]
    %v3680 = vld [vmem:[#allocation9 + $0x38] sm:$0xff]
    %v3681 = vld [vmem:[#allocation9 + $0x40] sm:$0xff]
    %v3682 = vld [vmem:[#allocation9 + $0x48] sm:$0xff]
    %v3683 = vld [vmem:[#allocation9 + $0x50] sm:$0xff]
    %v3684 = vld [vmem:[#allocation9 + $0x58] sm:$0xff]
    %v3685 = vld [vmem:[#allocation9 + $0x60] sm:$0xff]
    %v3686 = vld [vmem:[#allocation9 + $0x68] sm:$0xff]
    %v3687 = vld [vmem:[#allocation9 + $0x70] sm:$0xff]
    %v3688 = vld [vmem:[#allocation9 + $0x78] sm:$0xff]
    %v3689 = vld [vmem:[#allocation9 + $0x80] sm:$0xff]
    %v3690 = vld [vmem:[#allocation9 + $0x88] sm:$0xff]
    %v3691 = vld [vmem:[#allocation9 + $0x90] sm:$0xff]
    %v3692 = vld [vmem:[#allocation9 + $0x98] sm:$0xff]
    %v3693 = vld [vmem:[#allocation9 + $0xa0] sm:$0xff]
    %v3694 = vld [vmem:[#allocation9 + $0xa8] sm:$0xff]
    %v3695 = vld [vmem:[#allocation9 + $0xb0] sm:$0xff]
    %v3696 = vld [vmem:[#allocation9 + $0xb8] sm:$0xff]
    %v3697 = vld [vmem:[#allocation9 + $0xc0] sm:$0xff]
    %v3698 = vld [vmem:[#allocation9 + $0xc8] sm:$0xff]
    %v3699 = vld [vmem:[#allocation9 + $0xd0] sm:$0xff]
    %v3700 = vld [vmem:[#allocation9 + $0xd8] sm:$0xff]
    %v3701 = vld [vmem:[#allocation9 + $0xe0] sm:$0xff]
    %v3702 = vld [vmem:[#allocation9 + $0xe8] sm:$0xff]
    %v3703 = vld [vmem:[#allocation9 + $0xf0] sm:$0xff]
    %v3704 = vld [vmem:[#allocation9 + $0xf8] sm:$0xff]
    %v3705 = vld [vmem:[#allocation9 + $0x100] sm:$0xff]
    %v3706 = vld [vmem:[#allocation9 + $0x108] sm:$0xff]
    %v3707 = vld [vmem:[#allocation9 + $0x110] sm:$0xff]
    %v3708 = vld [vmem:[#allocation9 + $0x118] sm:$0xff]
    %v3709 = vld [vmem:[#allocation9 + $0x120] sm:$0xff]
    %v3710 = vld [vmem:[#allocation9 + $0x128] sm:$0xff]
    %v3711 = vld [vmem:[#allocation9 + $0x130] sm:$0xff]
    %v3712 = vld [vmem:[#allocation9 + $0x138] sm:$0xff]
    %v3713 = vld [vmem:[#allocation9 + $0x140] sm:$0xff]
    %v3714 = vld [vmem:[#allocation9 + $0x148] sm:$0xff]
    %v3715 = vld [vmem:[#allocation9 + $0x150] sm:$0xff]
    %v3716 = vld [vmem:[#allocation9 + $0x158] sm:$0xff]
    %v3717 = vld [vmem:[#allocation9 + $0x160] sm:$0xff]
    %v3718 = vld [vmem:[#allocation9 + $0x168] sm:$0xff]
    %v3719 = vld [vmem:[#allocation9 + $0x170] sm:$0xff]
    %v3720 = vld [vmem:[#allocation9 + $0x178] sm:$0xff]
    %v3721 = vld [vmem:[#allocation9 + $0x180] sm:$0xff]
    %v3722 = vld [vmem:[#allocation9 + $0x188] sm:$0xff]
    %v3723 = vld [vmem:[#allocation9 + $0x190] sm:$0xff]
    %v3724 = vld [vmem:[#allocation9 + $0x198] sm:$0xff]
    %v3725 = vld [vmem:[#allocation9 + $0x1a0] sm:$0xff]
    %v3726 = vld [vmem:[#allocation9 + $0x1a8] sm:$0xff]
    %v3727 = vld [vmem:[#allocation9 + $0x1b0] sm:$0xff]
    %v3728 = vld [vmem:[#allocation9 + $0x1b8] sm:$0xff]
    %v3729 = vld [vmem:[#allocation9 + $0x1c0] sm:$0xff]
    %v3730 = vld [vmem:[#allocation9 + $0x1c8] sm:$0xff]
    %v3731 = vld [vmem:[#allocation9 + $0x1d0] sm:$0xff]
    %v3732 = vld [vmem:[#allocation9 + $0x1d8] sm:$0xff]
    %v3733 = vld [vmem:[#allocation9 + $0x1e0] sm:$0xff]
    %v3734 = vld [vmem:[#allocation9 + $0x1e8] sm:$0xff]
    %v3735 = vld [vmem:[#allocation9 + $0x1f0] sm:$0xff]
    %v3736 = vld [vmem:[#allocation9 + $0x1f8] sm:$0xff]
    %3737 = vmatprep.subr.mxu0 %v3734
    %3738 = vmatpush1.msra.mxu0 %v3733
    %3739 = vmatprep.subr.mxu0 %v3730
    %3740 = vmatpush1.msra.mxu0 %v3729
    %3741 = vmatprep.subr.mxu0 %v3726
    %3742 = vmatpush1.msra.mxu0 %v3725
    %3743 = vmatprep.subr.mxu0 %v3722
    %3744 = vmatpush1.msra.mxu0 %v3721
    %3745 = vmatprep.subr.mxu0 %v3718
    %3746 = vmatpush1.msra.mxu0 %v3717
    %3747 = vmatprep.subr.mxu0 %v3714
    %3748 = vmatpush1.msra.mxu0 %v3713
    %3749 = vmatprep.subr.mxu0 %v3710
    %3750 = vmatpush1.msra.mxu0 %v3709
    %3751 = vmatprep.subr.mxu0 %v3706
    %3752 = vmatpush1.msra.mxu0 %v3705
    %3753 = vmatprep.subr.mxu0 %v3702
    %3754 = vmatpush1.msra.mxu0 %v3701
    %3755 = vmatprep.subr.mxu0 %v3698
    %3756 = vmatpush1.msra.mxu0 %v3697
    %3757 = vmatprep.subr.mxu0 %v3694
    %3758 = vmatpush1.msra.mxu0 %v3693
    %3759 = vmatprep.subr.mxu0 %v3690
    %3760 = vmatpush1.msra.mxu0 %v3689
    %3761 = vmatprep.subr.mxu0 %v3686
    %3762 = vmatpush1.msra.mxu0 %v3685
    %3763 = vmatprep.subr.mxu0 %v3682
    %3764 = vmatpush1.msra.mxu0 %v3681
    %3765 = vmatprep.subr.mxu0 %v3678
    %3766 = vmatpush1.msra.mxu0 %v3677
    %3767 = vmatprep.subr.mxu0 %v3674
    %3768 = vmatpush1.msra.mxu0 %v3673
    %3769 = vmatprep.subr.mxu0 0.0
    %3770 = vmatpush2.msra.mxu0 0.0
    %3771 = vmatprep.subr.mxu0 0.0
    %3772 = vmatpush2.msra.mxu0 0.0
    %3773 = vmatprep.subr.mxu0 0.0
    %3774 = vmatpush2.msra.mxu0 0.0
    %3775 = vmatprep.subr.mxu0 0.0
    %3776 = vmatpush2.msra.mxu0 0.0
    %3777 = vmatprep.subr.mxu0 0.0
    %3778 = vmatpush2.msra.mxu0 0.0
    %3779 = vmatprep.subr.mxu0 0.0
    %3780 = vmatpush2.msra.mxu0 0.0
    %3781 = vmatprep.subr.mxu0 0.0
    %3782 = vmatpush2.msra.mxu0 0.0
    %3783 = vmatprep.subr.mxu0 0.0
    %3784 = vmatpush2.msra.mxu0 0.0
    %3785 = vmatprep.subr.mxu0 0.0
    %3786 = vmatpush2.msra.mxu0 0.0
    %3787 = vmatprep.subr.mxu0 0.0
    %3788 = vmatpush2.msra.mxu0 0.0
    %3789 = vmatprep.subr.mxu0 0.0
    %3790 = vmatpush2.msra.mxu0 0.0
    %3791 = vmatprep.subr.mxu0 0.0
    %3792 = vmatpush2.msra.mxu0 0.0
    %3793 = vmatprep.subr.mxu0 0.0
    %3794 = vmatpush2.msra.mxu0 0.0
    %3795 = vmatprep.subr.mxu0 0.0
    %3796 = vmatpush2.msra.mxu0 0.0
    %3797 = vmatprep.subr.mxu0 0.0
    %3798 = vmatpush2.msra.mxu0 0.0
    %3799 = vmatprep.subr.mxu0 0.0
    %3800 = vmatpush2.msra.mxu0 0.0
    %3801 = vmatprep.mubr.f32.mxu0 0.0
    %3802 = vmatmul.mubr.f32.gmra.mxu0 %v3667
    %v3803 = vpop.f32.mrf.mxu0
    %v3804 = vadd.f32 0.0, %v3803
    %v3805 = vpop.f32.mrf.mxu0
    %v3806 = vadd.f32 0.0, %v3805
    %3807 = vdwg.mxu0
    %3808 = vmatprep.subr.mxu0 %v3736
    %3809 = vmatpush1.msra.mxu0 %v3735
    %3810 = vmatprep.subr.mxu0 %v3732
    %3811 = vmatpush1.msra.mxu0 %v3731
    %3812 = vmatprep.subr.mxu0 %v3728
    %3813 = vmatpush1.msra.mxu0 %v3727
    %3814 = vmatprep.subr.mxu0 %v3724
    %3815 = vmatpush1.msra.mxu0 %v3723
    %3816 = vmatprep.subr.mxu0 %v3720
    %3817 = vmatpush1.msra.mxu0 %v3719
    %3818 = vmatprep.subr.mxu0 %v3716
    %3819 = vmatpush1.msra.mxu0 %v3715
    %3820 = vmatprep.subr.mxu0 %v3712
    %3821 = vmatpush1.msra.mxu0 %v3711
    %3822 = vmatprep.subr.mxu0 %v3708
    %3823 = vmatpush1.msra.mxu0 %v3707
    %3824 = vmatprep.subr.mxu0 %v3704
    %3825 = vmatpush1.msra.mxu0 %v3703
    %3826 = vmatprep.subr.mxu0 %v3700
    %3827 = vmatpush1.msra.mxu0 %v3699
    %3828 = vmatprep.subr.mxu0 %v3696
    %3829 = vmatpush1.msra.mxu0 %v3695
    %3830 = vmatprep.subr.mxu0 %v3692
    %3831 = vmatpush1.msra.mxu0 %v3691
    %3832 = vmatprep.subr.mxu0 %v3688
    %3833 = vmatpush1.msra.mxu0 %v3687
    %3834 = vmatprep.subr.mxu0 %v3684
    %3835 = vmatpush1.msra.mxu0 %v3683
    %3836 = vmatprep.subr.mxu0 %v3680
    %3837 = vmatpush1.msra.mxu0 %v3679
    %3838 = vmatprep.subr.mxu0 %v3676
    %3839 = vmatpush1.msra.mxu0 %v3675
    %3840 = vmatprep.subr.mxu0 0.0
    %3841 = vmatpush2.msra.mxu0 0.0
    %3842 = vmatprep.subr.mxu0 0.0
    %3843 = vmatpush2.msra.mxu0 0.0
    %3844 = vmatprep.subr.mxu0 0.0
    %3845 = vmatpush2.msra.mxu0 0.0
    %3846 = vmatprep.subr.mxu0 0.0
    %3847 = vmatpush2.msra.mxu0 0.0
    %3848 = vmatprep.subr.mxu0 0.0
    %3849 = vmatpush2.msra.mxu0 0.0
    %3850 = vmatprep.subr.mxu0 0.0
    %3851 = vmatpush2.msra.mxu0 0.0
    %3852 = vmatprep.subr.mxu0 0.0
    %3853 = vmatpush2.msra.mxu0 0.0
    %3854 = vmatprep.subr.mxu0 0.0
    %3855 = vmatpush2.msra.mxu0 0.0
    %3856 = vmatprep.subr.mxu0 0.0
    %3857 = vmatpush2.msra.mxu0 0.0
    %3858 = vmatprep.subr.mxu0 0.0
    %3859 = vmatpush2.msra.mxu0 0.0
    %3860 = vmatprep.subr.mxu0 0.0
    %3861 = vmatpush2.msra.mxu0 0.0
    %3862 = vmatprep.subr.mxu0 0.0
    %3863 = vmatpush2.msra.mxu0 0.0
    %3864 = vmatprep.subr.mxu0 0.0
    %3865 = vmatpush2.msra.mxu0 0.0
    %3866 = vmatprep.subr.mxu0 0.0
    %3867 = vmatpush2.msra.mxu0 0.0
    %3868 = vmatprep.subr.mxu0 0.0
    %3869 = vmatpush2.msra.mxu0 0.0
    %3870 = vmatprep.subr.mxu0 0.0
    %3871 = vmatpush2.msra.mxu0 0.0
    %3872 = vmatprep.mubr.f32.mxu0 0.0
    %3873 = vmatmul.mubr.f32.gmra.mxu0 %v3667
    %v3874 = vpop.f32.mrf.mxu0
    %v3875 = vadd.f32 0.0, %v3874
    %v3876 = vpop.f32.mrf.mxu0
    %v3877 = vadd.f32 0.0, %v3876
    %3878 = vdwg.mxu0
    %v3879 = vadd.f32 %v3669, %v3804
    %v3880 = vadd.f32 %v3670, %v3806
    %v3881 = vadd.f32 %v3671, %v3875
    %v3882 = vadd.f32 %v3672, %v3877
    %v3883 = vxor.u32 %v3879, 2147483648
    %v3884 = vmul.f32 %v3883, 1.442695
    %v3885 = vpow.pop %v3884
    %v3886 = vadd.f32 %v3885, 1.0
    %v3887 = vrcp.pop %v3886
    %v3888 = vmul.f32 1.0, %v3887
    %v3889 = vtanh.pop %v3881
    %v3890 = vxor.u32 %v3882, 2147483648
    %v3891 = vmul.f32 %v3890, 1.442695
    %v3892 = vpow.pop %v3891
    %v3893 = vadd.f32 %v3892, 1.0
    %v3894 = vrcp.pop %v3893
    %v3895 = vmul.f32 1.0, %v3894
    %v3896 = vxor.u32 %v3880, 2147483648
    %v3897 = vmul.f32 %v3896, 1.442695
    %v3898 = vpow.pop %v3897
    %v3899 = vadd.f32 %v3898, 1.0
    %v3900 = vrcp.pop %v3899
    %v3901 = vmul.f32 1.0, %v3900
    %v3902 = vmul.f32 %v3901, %v3665
    %v3903 = vmul.f32 %v3888, %v3889
    %v3904 = vadd.f32 %v3902, %v3903
    %v3905 = vtanh.pop %v3904
    %v3906 = vmul.f32 %v3895, %v3905
    %3907 = vst [vmem:[#allocation3 + $0x30] sm:$0xff] %v3906
    %v3908 = vld [vmem:[#allocation2 + $0xe0] sm:$0xff]
    %v3909 = vld [vmem:[#allocation2 + $0xe8] sm:$0xff]
    %v3910 = vld [vmem:[#allocation2 + $0xf0] sm:$0xff]
    %v3911 = vld [vmem:[#allocation2 + $0xf8] sm:$0xff]
    %v3912 = vld [vmem:[#allocation9] sm:$0xff]
    %v3913 = vld [vmem:[#allocation9 + $0x8] sm:$0xff]
    %v3914 = vld [vmem:[#allocation9 + $0x10] sm:$0xff]
    %v3915 = vld [vmem:[#allocation9 + $0x18] sm:$0xff]
    %v3916 = vld [vmem:[#allocation9 + $0x20] sm:$0xff]
    %v3917 = vld [vmem:[#allocation9 + $0x28] sm:$0xff]
    %v3918 = vld [vmem:[#allocation9 + $0x30] sm:$0xff]
    %v3919 = vld [vmem:[#allocation9 + $0x38] sm:$0xff]
    %v3920 = vld [vmem:[#allocation9 + $0x40] sm:$0xff]
    %v3921 = vld [vmem:[#allocation9 + $0x48] sm:$0xff]
    %v3922 = vld [vmem:[#allocation9 + $0x50] sm:$0xff]
    %v3923 = vld [vmem:[#allocation9 + $0x58] sm:$0xff]
    %v3924 = vld [vmem:[#allocation9 + $0x60] sm:$0xff]
    %v3925 = vld [vmem:[#allocation9 + $0x68] sm:$0xff]
    %v3926 = vld [vmem:[#allocation9 + $0x70] sm:$0xff]
    %v3927 = vld [vmem:[#allocation9 + $0x78] sm:$0xff]
    %v3928 = vld [vmem:[#allocation9 + $0x80] sm:$0xff]
    %v3929 = vld [vmem:[#allocation9 + $0x88] sm:$0xff]
    %v3930 = vld [vmem:[#allocation9 + $0x90] sm:$0xff]
    %v3931 = vld [vmem:[#allocation9 + $0x98] sm:$0xff]
    %v3932 = vld [vmem:[#allocation9 + $0xa0] sm:$0xff]
    %v3933 = vld [vmem:[#allocation9 + $0xa8] sm:$0xff]
    %v3934 = vld [vmem:[#allocation9 + $0xb0] sm:$0xff]
    %v3935 = vld [vmem:[#allocation9 + $0xb8] sm:$0xff]
    %v3936 = vld [vmem:[#allocation9 + $0xc0] sm:$0xff]
    %v3937 = vld [vmem:[#allocation9 + $0xc8] sm:$0xff]
    %v3938 = vld [vmem:[#allocation9 + $0xd0] sm:$0xff]
    %v3939 = vld [vmem:[#allocation9 + $0xd8] sm:$0xff]
    %v3940 = vld [vmem:[#allocation9 + $0xe0] sm:$0xff]
    %v3941 = vld [vmem:[#allocation9 + $0xe8] sm:$0xff]
    %v3942 = vld [vmem:[#allocation9 + $0xf0] sm:$0xff]
    %v3943 = vld [vmem:[#allocation9 + $0xf8] sm:$0xff]
    %v3944 = vld [vmem:[#allocation9 + $0x100] sm:$0xff]
    %v3945 = vld [vmem:[#allocation9 + $0x108] sm:$0xff]
    %v3946 = vld [vmem:[#allocation9 + $0x110] sm:$0xff]
    %v3947 = vld [vmem:[#allocation9 + $0x118] sm:$0xff]
    %v3948 = vld [vmem:[#allocation9 + $0x120] sm:$0xff]
    %v3949 = vld [vmem:[#allocation9 + $0x128] sm:$0xff]
    %v3950 = vld [vmem:[#allocation9 + $0x130] sm:$0xff]
    %v3951 = vld [vmem:[#allocation9 + $0x138] sm:$0xff]
    %v3952 = vld [vmem:[#allocation9 + $0x140] sm:$0xff]
    %v3953 = vld [vmem:[#allocation9 + $0x148] sm:$0xff]
    %v3954 = vld [vmem:[#allocation9 + $0x150] sm:$0xff]
    %v3955 = vld [vmem:[#allocation9 + $0x158] sm:$0xff]
    %v3956 = vld [vmem:[#allocation9 + $0x160] sm:$0xff]
    %v3957 = vld [vmem:[#allocation9 + $0x168] sm:$0xff]
    %v3958 = vld [vmem:[#allocation9 + $0x170] sm:$0xff]
    %v3959 = vld [vmem:[#allocation9 + $0x178] sm:$0xff]
    %v3960 = vld [vmem:[#allocation9 + $0x180] sm:$0xff]
    %v3961 = vld [vmem:[#allocation9 + $0x188] sm:$0xff]
    %v3962 = vld [vmem:[#allocation9 + $0x190] sm:$0xff]
    %v3963 = vld [vmem:[#allocation9 + $0x198] sm:$0xff]
    %v3964 = vld [vmem:[#allocation9 + $0x1a0] sm:$0xff]
    %v3965 = vld [vmem:[#allocation9 + $0x1a8] sm:$0xff]
    %v3966 = vld [vmem:[#allocation9 + $0x1b0] sm:$0xff]
    %v3967 = vld [vmem:[#allocation9 + $0x1b8] sm:$0xff]
    %v3968 = vld [vmem:[#allocation9 + $0x1c0] sm:$0xff]
    %v3969 = vld [vmem:[#allocation9 + $0x1c8] sm:$0xff]
    %v3970 = vld [vmem:[#allocation9 + $0x1d0] sm:$0xff]
    %v3971 = vld [vmem:[#allocation9 + $0x1d8] sm:$0xff]
    %v3972 = vld [vmem:[#allocation9 + $0x1e0] sm:$0xff]
    %v3973 = vld [vmem:[#allocation9 + $0x1e8] sm:$0xff]
    %v3974 = vld [vmem:[#allocation9 + $0x1f0] sm:$0xff]
    %v3975 = vld [vmem:[#allocation9 + $0x1f8] sm:$0xff]
    %3976 = vmatprep.subr.mxu0 %v3973
    %3977 = vmatpush1.msra.mxu0 %v3972
    %3978 = vmatprep.subr.mxu0 %v3969
    %3979 = vmatpush1.msra.mxu0 %v3968
    %3980 = vmatprep.subr.mxu0 %v3965
    %3981 = vmatpush1.msra.mxu0 %v3964
    %3982 = vmatprep.subr.mxu0 %v3961
    %3983 = vmatpush1.msra.mxu0 %v3960
    %3984 = vmatprep.subr.mxu0 %v3957
    %3985 = vmatpush1.msra.mxu0 %v3956
    %3986 = vmatprep.subr.mxu0 %v3953
    %3987 = vmatpush1.msra.mxu0 %v3952
    %3988 = vmatprep.subr.mxu0 %v3949
    %3989 = vmatpush1.msra.mxu0 %v3948
    %3990 = vmatprep.subr.mxu0 %v3945
    %3991 = vmatpush1.msra.mxu0 %v3944
    %3992 = vmatprep.subr.mxu0 %v3941
    %3993 = vmatpush1.msra.mxu0 %v3940
    %3994 = vmatprep.subr.mxu0 %v3937
    %3995 = vmatpush1.msra.mxu0 %v3936
    %3996 = vmatprep.subr.mxu0 %v3933
    %3997 = vmatpush1.msra.mxu0 %v3932
    %3998 = vmatprep.subr.mxu0 %v3929
    %3999 = vmatpush1.msra.mxu0 %v3928
    %4000 = vmatprep.subr.mxu0 %v3925
    %4001 = vmatpush1.msra.mxu0 %v3924
    %4002 = vmatprep.subr.mxu0 %v3921
    %4003 = vmatpush1.msra.mxu0 %v3920
    %4004 = vmatprep.subr.mxu0 %v3917
    %4005 = vmatpush1.msra.mxu0 %v3916
    %4006 = vmatprep.subr.mxu0 %v3913
    %4007 = vmatpush1.msra.mxu0 %v3912
    %4008 = vmatprep.subr.mxu0 0.0
    %4009 = vmatpush2.msra.mxu0 0.0
    %4010 = vmatprep.subr.mxu0 0.0
    %4011 = vmatpush2.msra.mxu0 0.0
    %4012 = vmatprep.subr.mxu0 0.0
    %4013 = vmatpush2.msra.mxu0 0.0
    %4014 = vmatprep.subr.mxu0 0.0
    %4015 = vmatpush2.msra.mxu0 0.0
    %4016 = vmatprep.subr.mxu0 0.0
    %4017 = vmatpush2.msra.mxu0 0.0
    %4018 = vmatprep.subr.mxu0 0.0
    %4019 = vmatpush2.msra.mxu0 0.0
    %4020 = vmatprep.subr.mxu0 0.0
    %4021 = vmatpush2.msra.mxu0 0.0
    %4022 = vmatprep.subr.mxu0 0.0
    %4023 = vmatpush2.msra.mxu0 0.0
    %4024 = vmatprep.subr.mxu0 0.0
    %4025 = vmatpush2.msra.mxu0 0.0
    %4026 = vmatprep.subr.mxu0 0.0
    %4027 = vmatpush2.msra.mxu0 0.0
    %4028 = vmatprep.subr.mxu0 0.0
    %4029 = vmatpush2.msra.mxu0 0.0
    %4030 = vmatprep.subr.mxu0 0.0
    %4031 = vmatpush2.msra.mxu0 0.0
    %4032 = vmatprep.subr.mxu0 0.0
    %4033 = vmatpush2.msra.mxu0 0.0
    %4034 = vmatprep.subr.mxu0 0.0
    %4035 = vmatpush2.msra.mxu0 0.0
    %4036 = vmatprep.subr.mxu0 0.0
    %4037 = vmatpush2.msra.mxu0 0.0
    %4038 = vmatprep.subr.mxu0 0.0
    %4039 = vmatpush2.msra.mxu0 0.0
    %4040 = vmatprep.mubr.f32.mxu0 0.0
    %4041 = vmatmul.mubr.f32.gmra.mxu0 %v3906
    %v4042 = vpop.f32.mrf.mxu0
    %v4043 = vadd.f32 0.0, %v4042
    %v4044 = vpop.f32.mrf.mxu0
    %v4045 = vadd.f32 0.0, %v4044
    %4046 = vdwg.mxu0
    %4047 = vmatprep.subr.mxu0 %v3975
    %4048 = vmatpush1.msra.mxu0 %v3974
    %4049 = vmatprep.subr.mxu0 %v3971
    %4050 = vmatpush1.msra.mxu0 %v3970
    %4051 = vmatprep.subr.mxu0 %v3967
    %4052 = vmatpush1.msra.mxu0 %v3966
    %4053 = vmatprep.subr.mxu0 %v3963
    %4054 = vmatpush1.msra.mxu0 %v3962
    %4055 = vmatprep.subr.mxu0 %v3959
    %4056 = vmatpush1.msra.mxu0 %v3958
    %4057 = vmatprep.subr.mxu0 %v3955
    %4058 = vmatpush1.msra.mxu0 %v3954
    %4059 = vmatprep.subr.mxu0 %v3951
    %4060 = vmatpush1.msra.mxu0 %v3950
    %4061 = vmatprep.subr.mxu0 %v3947
    %4062 = vmatpush1.msra.mxu0 %v3946
    %4063 = vmatprep.subr.mxu0 %v3943
    %4064 = vmatpush1.msra.mxu0 %v3942
    %4065 = vmatprep.subr.mxu0 %v3939
    %4066 = vmatpush1.msra.mxu0 %v3938
    %4067 = vmatprep.subr.mxu0 %v3935
    %4068 = vmatpush1.msra.mxu0 %v3934
    %4069 = vmatprep.subr.mxu0 %v3931
    %4070 = vmatpush1.msra.mxu0 %v3930
    %4071 = vmatprep.subr.mxu0 %v3927
    %4072 = vmatpush1.msra.mxu0 %v3926
    %4073 = vmatprep.subr.mxu0 %v3923
    %4074 = vmatpush1.msra.mxu0 %v3922
    %4075 = vmatprep.subr.mxu0 %v3919
    %4076 = vmatpush1.msra.mxu0 %v3918
    %4077 = vmatprep.subr.mxu0 %v3915
    %4078 = vmatpush1.msra.mxu0 %v3914
    %4079 = vmatprep.subr.mxu0 0.0
    %4080 = vmatpush2.msra.mxu0 0.0
    %4081 = vmatprep.subr.mxu0 0.0
    %4082 = vmatpush2.msra.mxu0 0.0
    %4083 = vmatprep.subr.mxu0 0.0
    %4084 = vmatpush2.msra.mxu0 0.0
    %4085 = vmatprep.subr.mxu0 0.0
    %4086 = vmatpush2.msra.mxu0 0.0
    %4087 = vmatprep.subr.mxu0 0.0
    %4088 = vmatpush2.msra.mxu0 0.0
    %4089 = vmatprep.subr.mxu0 0.0
    %4090 = vmatpush2.msra.mxu0 0.0
    %4091 = vmatprep.subr.mxu0 0.0
    %4092 = vmatpush2.msra.mxu0 0.0
    %4093 = vmatprep.subr.mxu0 0.0
    %4094 = vmatpush2.msra.mxu0 0.0
    %4095 = vmatprep.subr.mxu0 0.0
    %4096 = vmatpush2.msra.mxu0 0.0
    %4097 = vmatprep.subr.mxu0 0.0
    %4098 = vmatpush2.msra.mxu0 0.0
    %4099 = vmatprep.subr.mxu0 0.0
    %4100 = vmatpush2.msra.mxu0 0.0
    %4101 = vmatprep.subr.mxu0 0.0
    %4102 = vmatpush2.msra.mxu0 0.0
    %4103 = vmatprep.subr.mxu0 0.0
    %4104 = vmatpush2.msra.mxu0 0.0
    %4105 = vmatprep.subr.mxu0 0.0
    %4106 = vmatpush2.msra.mxu0 0.0
    %4107 = vmatprep.subr.mxu0 0.0
    %4108 = vmatpush2.msra.mxu0 0.0
    %4109 = vmatprep.subr.mxu0 0.0
    %4110 = vmatpush2.msra.mxu0 0.0
    %4111 = vmatprep.mubr.f32.mxu0 0.0
    %4112 = vmatmul.mubr.f32.gmra.mxu0 %v3906
    %v4113 = vpop.f32.mrf.mxu0
    %v4114 = vadd.f32 0.0, %v4113
    %v4115 = vpop.f32.mrf.mxu0
    %v4116 = vadd.f32 0.0, %v4115
    %4117 = vdwg.mxu0
    %v4118 = vadd.f32 %v3908, %v4043
    %v4119 = vadd.f32 %v3909, %v4045
    %v4120 = vadd.f32 %v3910, %v4114
    %v4121 = vadd.f32 %v3911, %v4116
    %v4122 = vxor.u32 %v4118, 2147483648
    %v4123 = vmul.f32 %v4122, 1.442695
    %v4124 = vpow.pop %v4123
    %v4125 = vadd.f32 %v4124, 1.0
    %v4126 = vrcp.pop %v4125
    %v4127 = vmul.f32 1.0, %v4126
    %v4128 = vtanh.pop %v4120
    %v4129 = vxor.u32 %v4121, 2147483648
    %v4130 = vmul.f32 %v4129, 1.442695
    %v4131 = vpow.pop %v4130
    %v4132 = vadd.f32 %v4131, 1.0
    %v4133 = vrcp.pop %v4132
    %v4134 = vmul.f32 1.0, %v4133
    %v4135 = vxor.u32 %v4119, 2147483648
    %v4136 = vmul.f32 %v4135, 1.442695
    %v4137 = vpow.pop %v4136
    %v4138 = vadd.f32 %v4137, 1.0
    %v4139 = vrcp.pop %v4138
    %v4140 = vmul.f32 1.0, %v4139
    %v4141 = vmul.f32 %v4140, %v3904
    %v4142 = vmul.f32 %v4127, %v4128
    %v4143 = vadd.f32 %v4141, %v4142
    %v4144 = vtanh.pop %v4143
    %v4145 = vmul.f32 %v4134, %v4144
    %4146 = vst [vmem:[#allocation3 + $0x38] sm:$0xff] %v4145
    %v4147 = vld [vmem:[#allocation3] sm:$0xff]
    %v4148 = vld [vmem:[#allocation3 + $0x8] sm:$0xff]
    %v4149 = vld [vmem:[#allocation3 + $0x10] sm:$0xff]
    %v4150 = vld [vmem:[#allocation3 + $0x18] sm:$0xff]
    %v4151 = vld [vmem:[#allocation3 + $0x20] sm:$0xff]
    %v4152 = vld [vmem:[#allocation3 + $0x28] sm:$0xff]
    %v4153 = vld [vmem:[#allocation3 + $0x30] sm:$0xff]
    %v4154 = vld [vmem:[#allocation3 + $0x38] sm:$0xff]
    %v4155 = vld [vmem:[#allocation10] sm:$0xff]
    %v4156 = vld [vmem:[#allocation10 + $0x8] sm:$0xff]
    %v4157 = vld [vmem:[#allocation10 + $0x10] sm:$0xff]
    %v4158 = vld [vmem:[#allocation10 + $0x18] sm:$0xff]
    %v4159 = vld [vmem:[#allocation10 + $0x20] sm:$0xff]
    %v4160 = vld [vmem:[#allocation10 + $0x28] sm:$0xff]
    %v4161 = vld [vmem:[#allocation10 + $0x30] sm:$0xff]
    %v4162 = vld [vmem:[#allocation10 + $0x38] sm:$0xff]
    %v4163 = vld [vmem:[#allocation10 + $0x40] sm:$0xff]
    %v4164 = vld [vmem:[#allocation10 + $0x48] sm:$0xff]
    %v4165 = vld [vmem:[#allocation10 + $0x50] sm:$0xff]
    %v4166 = vld [vmem:[#allocation10 + $0x58] sm:$0xff]
    %v4167 = vld [vmem:[#allocation10 + $0x60] sm:$0xff]
    %v4168 = vld [vmem:[#allocation10 + $0x68] sm:$0xff]
    %v4169 = vld [vmem:[#allocation10 + $0x70] sm:$0xff]
    %v4170 = vld [vmem:[#allocation10 + $0x78] sm:$0xff]
    %v4171 = vld [vmem:[%s8] sm:$0x1]
    %v4173 = vlaneseq
    %v4174 = vshrl.u32 %v4173, 7
    %v4175 = vsub.s32 0, %v4174
    %v4176 = vrot.slane %v4171, %v4175
    %4178 = vmatprep.subr.mxu0 0.0
    %4179 = vmatpush1.msra.mxu0 %v4170
    %4180 = vmatprep.subr.mxu0 0.0
    %4181 = vmatpush1.msra.mxu0 %v4169
    %4182 = vmatprep.subr.mxu0 0.0
    %4183 = vmatpush1.msra.mxu0 %v4168
    %4184 = vmatprep.subr.mxu0 0.0
    %4185 = vmatpush1.msra.mxu0 %v4167
    %4186 = vmatprep.subr.mxu0 0.0
    %4187 = vmatpush1.msra.mxu0 %v4166
    %4188 = vmatprep.subr.mxu0 0.0
    %4189 = vmatpush1.msra.mxu0 %v4165
    %4190 = vmatprep.subr.mxu0 0.0
    %4191 = vmatpush1.msra.mxu0 %v4164
    %4192 = vmatprep.subr.mxu0 0.0
    %4193 = vmatpush1.msra.mxu0 %v4163
    %4194 = vmatprep.subr.mxu0 0.0
    %4195 = vmatpush1.msra.mxu0 %v4162
    %4196 = vmatprep.subr.mxu0 0.0
    %4197 = vmatpush1.msra.mxu0 %v4161
    %4198 = vmatprep.subr.mxu0 0.0
    %4199 = vmatpush1.msra.mxu0 %v4160
    %4200 = vmatprep.subr.mxu0 0.0
    %4201 = vmatpush1.msra.mxu0 %v4159
    %4202 = vmatprep.subr.mxu0 0.0
    %4203 = vmatpush1.msra.mxu0 %v4158
    %4204 = vmatprep.subr.mxu0 0.0
    %4205 = vmatpush1.msra.mxu0 %v4157
    %4206 = vmatprep.subr.mxu0 0.0
    %4207 = vmatpush1.msra.mxu0 %v4156
    %4208 = vmatprep.subr.mxu0 0.0
    %4209 = vmatpush1.msra.mxu0 %v4155
    %4210 = vmatprep.subr.mxu0 0.0
    %4211 = vmatpush2.msra.mxu0 0.0
    %4212 = vmatprep.subr.mxu0 0.0
    %4213 = vmatpush2.msra.mxu0 0.0
    %4214 = vmatprep.subr.mxu0 0.0
    %4215 = vmatpush2.msra.mxu0 0.0
    %4216 = vmatprep.subr.mxu0 0.0
    %4217 = vmatpush2.msra.mxu0 0.0
    %4218 = vmatprep.subr.mxu0 0.0
    %4219 = vmatpush2.msra.mxu0 0.0
    %4220 = vmatprep.subr.mxu0 0.0
    %4221 = vmatpush2.msra.mxu0 0.0
    %4222 = vmatprep.subr.mxu0 0.0
    %4223 = vmatpush2.msra.mxu0 0.0
    %4224 = vmatprep.subr.mxu0 0.0
    %4225 = vmatpush2.msra.mxu0 0.0
    %4226 = vmatprep.subr.mxu0 0.0
    %4227 = vmatpush2.msra.mxu0 0.0
    %4228 = vmatprep.subr.mxu0 0.0
    %4229 = vmatpush2.msra.mxu0 0.0
    %4230 = vmatprep.subr.mxu0 0.0
    %4231 = vmatpush2.msra.mxu0 0.0
    %4232 = vmatprep.subr.mxu0 0.0
    %4233 = vmatpush2.msra.mxu0 0.0
    %4234 = vmatprep.subr.mxu0 0.0
    %4235 = vmatpush2.msra.mxu0 0.0
    %4236 = vmatprep.subr.mxu0 0.0
    %4237 = vmatpush2.msra.mxu0 0.0
    %4238 = vmatprep.subr.mxu0 0.0
    %4239 = vmatpush2.msra.mxu0 0.0
    %4240 = vmatprep.subr.mxu0 0.0
    %4241 = vmatpush2.msra.mxu0 0.0
    %4242 = vmatprep.mubr.f32.mxu0 0.0
    %4243 = vmatmul.mubr.f32.gmra.mxu0 %v4147
    %v4244 = vpop.f32.mrf.mxu0
    %v4245 = vadd.f32 %v4176, %v4244
    %v4246 = vpop.f32.mrf.mxu0
    %4247 = vmatprep.mubr.f32.mxu0 0.0
    %4248 = vmatmul.mubr.f32.gmra.mxu0 %v4148
    %v4249 = vpop.f32.mrf.mxu0
    %v4250 = vadd.f32 %v4176, %v4249
    %v4251 = vpop.f32.mrf.mxu0
    %4252 = vmatprep.mubr.f32.mxu0 0.0
    %4253 = vmatmul.mubr.f32.gmra.mxu0 %v4149
    %v4254 = vpop.f32.mrf.mxu0
    %v4255 = vadd.f32 %v4176, %v4254
    %v4256 = vpop.f32.mrf.mxu0
    %4257 = vmatprep.mubr.f32.mxu0 0.0
    %4258 = vmatmul.mubr.f32.gmra.mxu0 %v4150
    %v4259 = vpop.f32.mrf.mxu0
    %v4260 = vadd.f32 %v4176, %v4259
    %v4261 = vpop.f32.mrf.mxu0
    %4262 = vmatprep.mubr.f32.mxu0 0.0
    %4263 = vmatmul.mubr.f32.gmra.mxu0 %v4151
    %v4264 = vpop.f32.mrf.mxu0
    %v4265 = vadd.f32 %v4176, %v4264
    %v4266 = vpop.f32.mrf.mxu0
    %4267 = vmatprep.mubr.f32.mxu0 0.0
    %4268 = vmatmul.mubr.f32.gmra.mxu0 %v4152
    %v4269 = vpop.f32.mrf.mxu0
    %v4270 = vadd.f32 %v4176, %v4269
    %v4271 = vpop.f32.mrf.mxu0
    %4272 = vmatprep.mubr.f32.mxu0 0.0
    %4273 = vmatmul.mubr.f32.gmra.mxu0 %v4153
    %v4274 = vpop.f32.mrf.mxu0
    %v4275 = vadd.f32 %v4176, %v4274
    %v4276 = vpop.f32.mrf.mxu0
    %4277 = vmatprep.mubr.f32.mxu0 0.0
    %4278 = vmatmul.mubr.f32.gmra.mxu0 %v4154
    %v4279 = vpop.f32.mrf.mxu0
    %v4280 = vadd.f32 %v4176, %v4279
    %v4281 = vpop.f32.mrf.mxu0
    %4282 = vdwg.mxu0
    %4283 = vmax.xlane.f32.xlu0 %v4245
    %v4284 = vpop.xlane.xlu0 %4283
    %4285 = vmax.xlane.f32.xlu0 %v4250
    %v4286 = vpop.xlane.xlu0 %4285
    %4287 = vmax.xlane.f32.xlu0 %v4255
    %v4288 = vpop.xlane.xlu0 %4287
    %4289 = vmax.xlane.f32.xlu0 %v4260
    %v4290 = vpop.xlane.xlu0 %4289
    %4291 = vmax.xlane.f32.xlu0 %v4265
    %v4292 = vpop.xlane.xlu0 %4291
    %4293 = vmax.xlane.f32.xlu0 %v4270
    %v4294 = vpop.xlane.xlu0 %4293
    %4295 = vmax.xlane.f32.xlu0 %v4275
    %v4296 = vpop.xlane.xlu0 %4295
    %4297 = vmax.xlane.f32.xlu0 %v4280
    %v4298 = vpop.xlane.xlu0 %4297
    %v4299 = vsub.f32 %v4245, %v4284
    %v4300 = vsub.f32 %v4250, %v4286
    %v4301 = vsub.f32 %v4255, %v4288
    %v4302 = vsub.f32 %v4260, %v4290
    %v4303 = vsub.f32 %v4265, %v4292
    %v4304 = vsub.f32 %v4270, %v4294
    %v4305 = vsub.f32 %v4275, %v4296
    %v4306 = vsub.f32 %v4280, %v4298
    %v4307 = vmul.f32 %v4299, 1.442695
    %v4308 = vpow.pop %v4307
    %v4309 = vmul.f32 %v4300, 1.442695
    %v4310 = vpow.pop %v4309
    %v4311 = vmul.f32 %v4301, 1.442695
    %v4312 = vpow.pop %v4311
    %v4313 = vmul.f32 %v4302, 1.442695
    %v4314 = vpow.pop %v4313
    %v4315 = vmul.f32 %v4303, 1.442695
    %v4316 = vpow.pop %v4315
    %v4317 = vmul.f32 %v4304, 1.442695
    %v4318 = vpow.pop %v4317
    %v4319 = vmul.f32 %v4305, 1.442695
    %v4320 = vpow.pop %v4319
    %v4321 = vmul.f32 %v4306, 1.442695
    %v4322 = vpow.pop %v4321
    %4323 = vadd.xlane.f32.xlu0 %v4308
    %v4324 = vpop.xlane.xlu0 %4323
    %4325 = vadd.xlane.f32.xlu0 %v4310
    %v4326 = vpop.xlane.xlu0 %4325
    %4327 = vadd.xlane.f32.xlu0 %v4312
    %v4328 = vpop.xlane.xlu0 %4327
    %4329 = vadd.xlane.f32.xlu0 %v4314
    %v4330 = vpop.xlane.xlu0 %4329
    %4331 = vadd.xlane.f32.xlu0 %v4316
    %v4332 = vpop.xlane.xlu0 %4331
    %4333 = vadd.xlane.f32.xlu0 %v4318
    %v4334 = vpop.xlane.xlu0 %4333
    %4335 = vadd.xlane.f32.xlu0 %v4320
    %v4336 = vpop.xlane.xlu0 %4335
    %4337 = vadd.xlane.f32.xlu0 %v4322
    %v4338 = vpop.xlane.xlu0 %4337
    %v4339 = vrcp.pop %v4324
    %v4340 = vmul.f32 %v4308, %v4339
    %v4341 = vrcp.pop %v4326
    %v4342 = vmul.f32 %v4310, %v4341
    %v4343 = vrcp.pop %v4328
    %v4344 = vmul.f32 %v4312, %v4343
    %v4345 = vrcp.pop %v4330
    %v4346 = vmul.f32 %v4314, %v4345
    %v4347 = vrcp.pop %v4332
    %v4348 = vmul.f32 %v4316, %v4347
    %v4349 = vrcp.pop %v4334
    %v4350 = vmul.f32 %v4318, %v4349
    %v4351 = vrcp.pop %v4336
    %v4352 = vmul.f32 %v4320, %v4351
    %v4353 = vrcp.pop %v4338
    %v4354 = vmul.f32 %v4322, %v4353
    %4355 = vst [vmem:[#allocation12] sm:$0xff] %v4340
    %4356 = vst [vmem:[#allocation12 + $0x8] sm:$0xff] %v4342
    %4357 = vst [vmem:[#allocation12 + $0x10] sm:$0xff] %v4344
    %4358 = vst [vmem:[#allocation12 + $0x18] sm:$0xff] %v4346
    %4359 = vst [vmem:[#allocation12 + $0x20] sm:$0xff] %v4348
    %4360 = vst [vmem:[#allocation12 + $0x28] sm:$0xff] %v4350
    %4361 = vst [vmem:[#allocation12 + $0x30] sm:$0xff] %v4352
    %4362 = vst [vmem:[#allocation12 + $0x38] sm:$0xff] %v4354
    // Predicated region
    $region54: #{tpu_custom_call.1} parent=1 // pred_check
      _
    $region55: #{tpu_custom_call.1} parent=1 // pred_check_branch
      %4364 = sbr.rel (0) target = $region57
    $region56: #{tpu_custom_call.1} parent=1 // pred_region
      %s4366 = ssub.s32 1024, 1024
      %4367 = vsyncadd [#allocation6], %s4366
      %s4368 = sshll.u32 [#allocation12], 4
      %s4369 = int_to_ptr.vmem [resolvable:$true] %s4368
      %4374 = dma.vmem_to_hbm [thread:$0]  %s4369, 1024, %s9, [#allocation6], 128, 128, 8
    $region57: #{tpu_custom_call.1} parent=1 // pred_fallthru
      _
    // Predicated region
    $region58: #{tpu_custom_call.1} parent=1 // pred_check
      _
    $region59: #{tpu_custom_call.1} parent=1 // pred_check_branch
      %4376 = sbr.rel (0) target = $region61
    $region60: #{tpu_custom_call.1} parent=1 // pred_region
      %4377 = dma.done [#allocation6], 1024
    $region61: #{tpu_custom_call.1} parent=1 // pred_fallthru
      _
    %4378 = vsyncpa [#allocation5], 1
    %4379 = vsyncpa [#allocation8], 1
    %4380 = vsyncpa [#allocation11], 1
    %4381 = vsyncpa [#allocation6], 1

</llo_original>
